<compile_context>
chip_gen: v7x
topology: tpu7x:2x2x1
jax: 0.10.0
libtpu: 0.0.40
codegen_flags: <defaults>
</compile_context>

<pallas_src>
import functools
import math

import jax
import jax.numpy as jnp
import numpy as np
from jax.experimental import pallas as pl
from jax.experimental.pallas import tpu as pltpu


# ---------------------------- in-kernel helpers ----------------------------

def _ln(x, g, b, eps):
    # LayerNorm statistics kept in f32 (eps=1e-6 matches OpenNMT's transformer LayerNorm)
    mu = jnp.mean(x, axis=-1, keepdims=True)
    var = jnp.mean(jnp.square(x - mu), axis=-1, keepdims=True)
    return (x - mu) * jax.lax.rsqrt(var + eps) * g + b


def _split_heads(x, heads):
    """(T, d) -> (H, T, dh) via leading-dim concat of lane slices (robust Mosaic lowering)."""
    t, d = x.shape
    dh = d // heads
    return jnp.concatenate([x[None, :, h * dh:(h + 1) * dh] for h in range(heads)], axis=0)


def _merge_heads(x):
    """(H, T, dh) -> (T, d)."""
    return jnp.concatenate([x[h] for h in range(x.shape[0])], axis=1)


def _mha(q, k, v, add_bias, wo, bo, heads):
    """Multi-head attention for one batch element with all heads batched:
    ONE batched scores dot_general + ONE batched ctx dot_general + ONE Wo matmul.

    q: (Tq, d) f32 (1/sqrt(dh) pre-folded into Wq/bq), k/v: (Tk, d) f32,
    add_bias: (Tq, Tk) f32 additive mask (0 = attend, -1e18 = masked),
    wo: (d, d) bf16, bo: (1, d) f32.
    """
    qh = _split_heads(q, heads).astype(jnp.bfloat16)               # (H, Tq, dh)
    kh = _split_heads(k, heads).astype(jnp.bfloat16)               # (H, Tk, dh)
    vh = _split_heads(v, heads).astype(jnp.bfloat16)               # (H, Tk, dh)
    s = jax.lax.dot_general(qh, kh, (((2,), (2,)), ((0,), (0,))),
                            preferred_element_type=jnp.float32)    # (H, Tq, Tk) f32
    s = s + add_bias[None, :, :]                                   # mask add stays in f32
    s_max = jnp.max(s, axis=-1, keepdims=True)
    e = jnp.exp(s - s_max)                                         # softmax in f32
    p = e * pl.reciprocal(jnp.sum(e, axis=-1, keepdims=True), approx=True)
    ctx = jax.lax.dot_general(p.astype(jnp.bfloat16), vh,
                              (((2,), (1,)), ((0,), (0,))),
                              preferred_element_type=jnp.float32)  # (H, Tq, dh)
    out = jnp.dot(_merge_heads(ctx).astype(jnp.bfloat16), wo,
                  preferred_element_type=jnp.float32)
    return out + bo


# ---------------------------- fused decoder kernel ----------------------------

def _decoder_sp_kernel(
        tl_ref, ml_ref,                                    # scalar prefetch (SMEM)
        x_ref, mem_ref, pw_ref, pbpe_ref,                  # tgt frames / memory / prenet
        ln_ref, bias_ref, wself_ref, wctx_ref, wff1_ref, wff2_ref,   # per-layer (stacked L)
        fln_ref, postw_ref, postb_ref,                     # final LN + postnet (lane-padded)
        o_ref,                                             # (1, T, dout_pad) f32 output
        x_acc, mself_ref, msrc_ref,                        # VMEM scratch (persist over l)
        *, heads, eps):
    b = pl.program_id(0)
    l = pl.program_id(1)
    T, d = x_acc.shape
    S = mem_ref.shape[1]
    ff = wff1_ref.shape[2]
    bf16 = jnp.bfloat16

    # ---- first layer step for this batch element: prenet + build additive masks once ----
    @pl.when(l == 0)
    def _init():
        x0 = jnp.dot(x_ref[0].astype(bf16), pw_ref[...],           # sqrt(d) folded into W/b
                     preferred_element_type=jnp.float32)
        x_acc[...] = x0 + pbpe_ref[0:1, :] + pbpe_ref[1:, :]       # + scaled bias + pos. enc
        t_len = tl_ref[b]
        m_len = ml_ref[b]
        row = jax.lax.broadcasted_iota(jnp.int32, (T, T), 0)
        col = jax.lax.broadcasted_iota(jnp.int32, (T, T), 1)
        ok_self = (col <= row) & (col < t_len)                     # causal + tgt padding
        mself_ref[...] = jnp.where(ok_self, 0.0, -1e18)            # matches masked_fill(-1e18)
        col_s = jax.lax.broadcasted_iota(jnp.int32, (T, S), 1)
        msrc_ref[...] = jnp.where(col_s < m_len, 0.0, -1e18)       # memory padding

    ln = ln_ref[0]          # (6, d) f32: [ln1_g, ln1_b, ln2_g, ln2_b, ffn_ln_g, ffn_ln_b]
    bias = bias_ref[0]      # (8, Wmax) f32: [b_qkv, b_so, b_cq, b_ckv, b_co, b_ff1, b_ff2, 0]
    w_s = wself_ref[0]      # (d, 4d) bf16: [Wq*scale | Wk | Wv | Wo]
    w_c = wctx_ref[0]       # (d, 4d) bf16: [Wq*scale | Wk | Wv | Wo]
    w1 = wff1_ref[0]        # (d, ff) bf16
    w2 = wff2_ref[0]        # (ff, d) bf16

    x = x_acc[...]          # (T, d) f32 carried across the layer axis
    mem = mem_ref[0]        # (S, d) f32

    # ---- self-attention sublayer (pre-norm) ----
    xn = _ln(x, ln[0:1], ln[1:2], eps)
    qkv = jnp.dot(xn.astype(bf16), w_s[:, :3 * d],
                  preferred_element_type=jnp.float32) + bias[0:1, :3 * d]
    x1 = x + _mha(qkv[:, :d], qkv[:, d:2 * d], qkv[:, 2 * d:], mself_ref[...],
                  w_s[:, 3 * d:], bias[1:2, :d], heads)

    # ---- cross-attention sublayer ----
    x1n = _ln(x1, ln[2:3], ln[3:4], eps)
    qc = jnp.dot(x1n.astype(bf16), w_c[:, :d],
                 preferred_element_type=jnp.float32) + bias[2:3, :d]
    kv = jnp.dot(mem.astype(bf16), w_c[:, d:3 * d],
                 preferred_element_type=jnp.float32) + bias[3:4, :2 * d]
    x2 = x1 + _mha(qc, kv[:, :d], kv[:, d:], msrc_ref[...],
                   w_c[:, 3 * d:], bias[4:5, :d], heads)

    # ---- PositionwiseFeedForward: LN -> W1 -> ReLU -> W2 -> residual ----
    x2n = _ln(x2, ln[4:5], ln[5:6], eps)
    h1 = jnp.maximum(jnp.dot(x2n.astype(bf16), w1,
                             preferred_element_type=jnp.float32) + bias[5:6, :ff], 0.0)
    x3 = jnp.dot(h1.astype(bf16), w2,
                 preferred_element_type=jnp.float32) + bias[6:7, :d] + x2
    x_acc[...] = x3

    # ---- after the last layer: final LayerNorm + postnet, lane-dense (padded) store ----
    @pl.when(l == pl.num_programs(1) - 1)
    def _final():
        xf = _ln(x3, fln_ref[0:1], fln_ref[1:2], eps)
        o_ref[0] = jnp.dot(xf.astype(bf16), postw_ref[...],
                           preferred_element_type=jnp.float32) + postb_ref[...]


# ---------------------------- weight packing ----------------------------

def pack_params(params, hp):
    """Fuse/stack weights for the single fused decoder kernel:
      * 1/sqrt(dh) attention scale folded into Wq/bq (self & cross),
      * sqrt(d) prenet scale folded into the prenet weight/bias,
      * Q/K/V/Wo concatenated per attention into one (d, 4d) bf16 matrix,
      * matmul weights stored as bf16 (MXU native); LN params / biases / PE kept f32,
      * postnet weight & bias lane-padded to a multiple of 128 for unmasked stores.
    """
    d = hp["dec_rnn_size"]
    ff = hp["transformer_ff"]
    heads = hp["heads"]
    scale = 1.0 / math.sqrt(d // heads)
    sqrt_d = math.sqrt(d)
    wmax = max(3 * d, ff)

    packed = {}
    packed["prenet_w"] = (params["prenet_w"] * sqrt_d).astype(jnp.bfloat16)   # (F, d)
    packed["prenet_b"] = (params["prenet_b"] * sqrt_d).reshape(1, d)          # (1, d) f32
    packed["pe"] = params["pe"]                                               # (1600, d) f32

    def padrow(v):
        return jnp.pad(v, (0, wmax - v.shape[0]))

    ln_l, bias_l, wself_l, wctx_l, wff1_l, wff2_l = [], [], [], [], [], []
    for lp in params["layers"]:
        sp, cp = lp["self"], lp["ctx"]
        ln_l.append(jnp.stack([lp["ln1_g"], lp["ln1_b"], lp["ln2_g"], lp["ln2_b"],
                               lp["ffn_ln_g"], lp["ffn_ln_b"]], axis=0))       # (6, d)
        bias_l.append(jnp.stack([
            padrow(jnp.concatenate([sp["bq"] * scale, sp["bk"], sp["bv"]])),   # b_qkv
            padrow(sp["bo"]),
            padrow(cp["bq"] * scale),
            padrow(jnp.concatenate([cp["bk"], cp["bv"]])),
            padrow(cp["bo"]),
            padrow(lp["ffn_b1"]),
            padrow(lp["ffn_b2"]),
            jnp.zeros((wmax,), jnp.float32),
        ], axis=0))                                                            # (8, wmax)
        wself_l.append(jnp.concatenate(
            [sp["Wq"] * scale, sp["Wk"], sp["Wv"], sp["Wo"]], axis=1))         # (d, 4d)
        wctx_l.append(jnp.concatenate(
            [cp["Wq"] * scale, cp["Wk"], cp["Wv"], cp["Wo"]], axis=1))         # (d, 4d)
        wff1_l.append(lp["ffn_w1"])
        wff2_l.append(lp["ffn_w2"])

    packed["ln"] = jnp.stack(ln_l)                                  # (L, 6, d) f32
    packed["bias"] = jnp.stack(bias_l)                              # (L, 8, wmax) f32
    packed["w_self"] = jnp.stack(wself_l).astype(jnp.bfloat16)      # (L, d, 4d)
    packed["w_ctx"] = jnp.stack(wctx_l).astype(jnp.bfloat16)        # (L, d, 4d)
    packed["w_ff1"] = jnp.stack(wff1_l).astype(jnp.bfloat16)        # (L, d, ff)
    packed["w_ff2"] = jnp.stack(wff2_l).astype(jnp.bfloat16)        # (L, ff, d)

    packed["final_ln"] = jnp.stack([params["final_ln_g"], params["final_ln_b"]])  # (2, d)
    dout = hp["dim_freq"] + 1
    dout_pad = ((dout + 127) // 128) * 128                          # lane-dense output slab
    packed["post_w"] = jnp.zeros((d, dout_pad), jnp.float32
                                 ).at[:, :dout].set(params["post_w"]).astype(jnp.bfloat16)
    packed["post_b"] = jnp.zeros((1, dout_pad), jnp.float32).at[0, :dout].set(params["post_b"])
    return packed


# ---------------------------- forward pass ----------------------------

def decoder_sp_forward(packed, hp, tgt, tgt_lengths, memory_bank, memory_lengths):
    T, B, Fdim = tgt.shape
    S = memory_bank.shape[0]
    d = hp["dec_rnn_size"]
    heads = hp["heads"]
    L = hp["dec_layers"]
    ff = hp["transformer_ff"]
    dout = hp["dim_freq"] + 1
    dout_pad = packed["post_w"].shape[1]
    wmax = packed["bias"].shape[2]

    # single layout change to (batch, len, feat); everything else stays in VMEM
    x_in = jnp.transpose(tgt, (1, 0, 2))            # (B, T, dim_freq)
    mem = jnp.transpose(memory_bank, (1, 0, 2))     # (B, S, d)
    tl = tgt_lengths.astype(jnp.int32)
    ml = memory_lengths.astype(jnp.int32)

    # prenet bias (sqrt(d)-scaled) + positional-encoding rows, one f32 input
    pbpe = jnp.concatenate([packed["prenet_b"], packed["pe"][:T]], axis=0)   # (1+T, d)

    inputs = (tl, ml, x_in, mem, packed["prenet_w"], pbpe, packed["ln"], packed["bias"],
              packed["w_self"], packed["w_ctx"], packed["w_ff1"], packed["w_ff2"],
              packed["final_ln"], packed["post_w"], packed["post_b"])

    # advisory cost estimate (helps XLA schedule around the custom call)
    flops_layer = (2 * T * d * 3 * d + 2 * T * d * d + 4 * T * T * d      # self attn
                   + 2 * T * d * d + 4 * S * d * d + 2 * T * d * d        # cross projections
                   + 4 * T * S * d                                        # cross scores/ctx
                   + 4 * T * d * ff)                                      # FFN
    flops = B * (L * flops_layer + 2 * T * Fdim * d + 2 * T * d * dout_pad)
    transcendentals = B * L * heads * (T * T + T * S)
    bytes_accessed = sum(int(np.prod(a.shape)) * a.dtype.itemsize for a in inputs) \
        + B * T * dout_pad * 4

    grid_spec = pltpu.PrefetchScalarGridSpec(
        num_scalar_prefetch=2,
        grid=(B, L),       # batch leading & "parallel" (megacore), layer trailing & "arbitrary"
        in_specs=[
            pl.BlockSpec((1, T, Fdim), lambda b, l, tl, ml: (b, 0, 0)),      # tgt frames
            pl.BlockSpec((1, S, d), lambda b, l, tl, ml: (b, 0, 0)),         # memory bank
            pl.BlockSpec((Fdim, d), lambda b, l, tl, ml: (0, 0)),            # prenet W (bf16)
            pl.BlockSpec((1 + T, d), lambda b, l, tl, ml: (0, 0)),           # prenet b + PE
            pl.BlockSpec((1, 6, d), lambda b, l, tl, ml: (l, 0, 0)),         # LN params
            pl.BlockSpec((1, 8, wmax), lambda b, l, tl, ml: (l, 0, 0)),      # packed biases
            pl.BlockSpec((1, d, 4 * d), lambda b, l, tl, ml: (l, 0, 0)),     # self QKVO
            pl.BlockSpec((1, d, 4 * d), lambda b, l, tl, ml: (l, 0, 0)),     # cross QKVO
            pl.BlockSpec((1, d, ff), lambda b, l, tl, ml: (l, 0, 0)),        # FFN W1
            pl.BlockSpec((1, ff, d), lambda b, l, tl, ml: (l, 0, 0)),        # FFN W2
            pl.BlockSpec((2, d), lambda b, l, tl, ml: (0, 0)),               # final LN g/b
            pl.BlockSpec((d, dout_pad), lambda b, l, tl, ml: (0, 0)),        # postnet W (padded)
            pl.BlockSpec((1, dout_pad), lambda b, l, tl, ml: (0, 0)),        # postnet b (padded)
        ],
        out_specs=pl.BlockSpec((1, T, dout_pad), lambda b, l, tl, ml: (b, 0, 0)),
        scratch_shapes=[
            pltpu.VMEM((T, d), jnp.float32),          # activation carry across layers
            pltpu.VMEM((T, T), jnp.float32),          # self-attn additive mask (per batch elem)
            pltpu.VMEM((T, S), jnp.float32),          # cross-attn additive mask
        ],
    )

    out = pl.pallas_call(
        functools.partial(_decoder_sp_kernel, heads=heads, eps=1e-6),
        out_shape=jax.ShapeDtypeStruct((B, T, dout_pad), jnp.float32),
        grid_spec=grid_spec,
        compiler_params=pltpu.CompilerParams(
            dimension_semantics=("parallel", "arbitrary"),
            vmem_limit_bytes=32 * 1024 * 1024),
        cost_estimate=pl.CostEstimate(flops=flops, transcendentals=transcendentals,
                                      bytes_accessed=bytes_accessed),
    )(*inputs)

    out = jnp.transpose(out, (1, 0, 2))               # (T, B, dout_pad)
    spect = out[:, :, 1:dout]
    gate = out[:, :, :1]
    return spect, gate


# ---------------------------- deterministic param init ----------------------------

def positional_encoding(max_len, dim):
    pe = np.zeros((max_len, dim), dtype=np.float32)
    position = np.arange(max_len, dtype=np.float32)[:, None]
    div_term = np.exp(np.arange(0, dim, 2, dtype=np.float32) * -(math.log(10000.0) / dim))
    pe[:, 0::2] = np.sin(position * div_term)
    pe[:, 1::2] = np.cos(position * div_term)
    return jnp.asarray(pe)


def _init_dense(key, din, dout):
    kw, kb = jax.random.split(key)
    lim = 1.0 / math.sqrt(din)
    w = jax.random.uniform(kw, (din, dout), jnp.float32, -lim, lim)
    b = jax.random.uniform(kb, (dout,), jnp.float32, -lim, lim)
    return w, b


def init_params(key, hp):
    d = hp["dec_rnn_size"]
    ff = hp["transformer_ff"]
    keys = iter(jax.random.split(key, 128))
    params = {}
    params["prenet_w"], params["prenet_b"] = _init_dense(next(keys), hp["dim_freq"], d)
    params["pe"] = positional_encoding(1600, d)
    layers = []
    for _ in range(hp["dec_layers"]):
        lp = {"ln1_g": jnp.ones((d,), jnp.float32), "ln1_b": jnp.zeros((d,), jnp.float32),
              "ln2_g": jnp.ones((d,), jnp.float32), "ln2_b": jnp.zeros((d,), jnp.float32),
              "ffn_ln_g": jnp.ones((d,), jnp.float32), "ffn_ln_b": jnp.zeros((d,), jnp.float32)}
        for name in ("self", "ctx"):
            ap = {}
            for nm in ("Wq", "Wk", "Wv", "Wo"):
                w, bias = _init_dense(next(keys), d, d)
                ap[nm] = w
                ap["b" + nm[1].lower()] = bias
            lp[name] = ap
        lp["ffn_w1"], lp["ffn_b1"] = _init_dense(next(keys), d, ff)
        lp["ffn_w2"], lp["ffn_b2"] = _init_dense(next(keys), ff, d)
        layers.append(lp)
    params["layers"] = layers
    params["final_ln_g"] = jnp.ones((d,), jnp.float32)
    params["final_ln_b"] = jnp.zeros((d,), jnp.float32)
    params["post_w"], params["post_b"] = _init_dense(next(keys), d, hp["dim_freq"] + 1)
    return params


# ---------------------------- main ----------------------------

if __name__ == "__main__":
    hp = dict(dim_freq=8, dec_rnn_size=32, dec_layers=2, heads=4,
              transformer_ff=64, dec_steps_sp=640, gate_threshold=0.48)

    key = jax.random.PRNGKey(0)
    kp, kt, km = jax.random.split(key, 3)
    params = init_params(kp, hp)
    packed = pack_params(params, hp)

    T, B, S = 8, 2, 6
    tgt = jax.random.normal(kt, (T, B, hp["dim_freq"]), jnp.float32)
    memory_bank = jax.random.normal(km, (S, B, hp["dec_rnn_size"]), jnp.float32)
    tgt_lengths = jnp.array([T, 5], jnp.int32)
    memory_lengths = jnp.array([S, 4], jnp.int32)

    fwd = jax.jit(lambda p, a, al, m, ml: decoder_sp_forward(p, hp, a, al, m, ml))
    spect, gate = fwd(packed, tgt, tgt_lengths, memory_bank, memory_lengths)
    jax.block_until_ready((spect, gate))

    assert spect.shape == (T, B, hp["dim_freq"]) and spect.dtype == jnp.float32
    assert gate.shape == (T, B, 1) and gate.dtype == jnp.float32
    assert bool(jnp.all(jnp.isfinite(spect))) and bool(jnp.all(jnp.isfinite(gate)))
    print("KERNEL_OK")
</pallas_src>

<mosaic_0001>
module attributes {stable_mosaic.version = 11 : i64} {
  func.func @_decoder_sp_kernel(%arg0: i32, %arg1: i32, %arg2: memref<2xi32, #tpu.memory_space<smem>>, %arg3: memref<2xi32, #tpu.memory_space<smem>>, %arg4: memref<1x8x8xf32, #tpu.memory_space<vmem>>, %arg5: memref<1x6x32xf32, #tpu.memory_space<vmem>>, %arg6: memref<8x32xbf16, #tpu.memory_space<vmem>>, %arg7: memref<9x32xf32, #tpu.memory_space<vmem>>, %arg8: memref<1x6x32xf32, #tpu.memory_space<vmem>>, %arg9: memref<1x8x96xf32, #tpu.memory_space<vmem>>, %arg10: memref<1x32x128xbf16, #tpu.memory_space<vmem>>, %arg11: memref<1x32x128xbf16, #tpu.memory_space<vmem>>, %arg12: memref<1x32x64xbf16, #tpu.memory_space<vmem>>, %arg13: memref<1x64x32xbf16, #tpu.memory_space<vmem>>, %arg14: memref<2x32xf32, #tpu.memory_space<vmem>>, %arg15: memref<32x128xbf16, #tpu.memory_space<vmem>>, %arg16: memref<1x128xf32, #tpu.memory_space<vmem>>, %arg17: memref<1x8x128xf32, #tpu.memory_space<vmem>>, %arg18: memref<8x32xf32, #tpu.memory_space<vmem>>, %arg19: memref<8x8xf32, #tpu.memory_space<vmem>>, %arg20: memref<8x6xf32, #tpu.memory_space<vmem>>) attributes {dimension_semantics = [#tpu.dimension_semantics<parallel>, #tpu.dimension_semantics<arbitrary>], iteration_bounds = array<i64: 2, 2>, scalar_prefetch = 2 : i64, scratch_operands = 3 : i64, tpu.core_type = #tpu.core_type<tc>, window_params = [{transform_indices = @transform_0, window_bounds = array<i64: 1, 8, 8>}, {transform_indices = @transform_1, window_bounds = array<i64: 1, 6, 32>}, {pipeline_mode = #tpu.pipeline_mode<synchronous>, transform_indices = @transform_2, window_bounds = array<i64: 8, 32>}, {pipeline_mode = #tpu.pipeline_mode<synchronous>, transform_indices = @transform_3, window_bounds = array<i64: 9, 32>}, {transform_indices = @transform_4, window_bounds = array<i64: 1, 6, 32>}, {transform_indices = @transform_5, window_bounds = array<i64: 1, 8, 96>}, {transform_indices = @transform_6, window_bounds = array<i64: 1, 32, 128>}, {transform_indices = @transform_7, window_bounds = array<i64: 1, 32, 128>}, {transform_indices = @transform_8, window_bounds = array<i64: 1, 32, 64>}, {transform_indices = @transform_9, window_bounds = array<i64: 1, 64, 32>}, {pipeline_mode = #tpu.pipeline_mode<synchronous>, transform_indices = @transform_10, window_bounds = array<i64: 2, 32>}, {pipeline_mode = #tpu.pipeline_mode<synchronous>, transform_indices = @transform_11, window_bounds = array<i64: 32, 128>}, {pipeline_mode = #tpu.pipeline_mode<synchronous>, transform_indices = @transform_12, window_bounds = array<i64: 1, 128>}, {transform_indices = @transform_13, window_bounds = array<i64: 1, 8, 128>}]} {
    %c0_i32 = arith.constant 0 : i32
    %0 = arith.cmpi eq, %arg1, %c0_i32 : i32
    %1 = arith.extui %0 : i1 to i32
    %c0_i32_0 = arith.constant 0 : i32
    %2 = arith.cmpi ne, %1, %c0_i32_0 : i32
    scf.if %2 {
      %c0_60 = arith.constant 0 : index
      %c0_61 = arith.constant 0 : index
      %c0_62 = arith.constant 0 : index
      %256 = vector.load %arg4[%c0_60, %c0_61, %c0_62] : memref<1x8x8xf32, #tpu.memory_space<vmem>>, vector<1x8x8xf32>
      %257 = vector.shape_cast %256 : vector<1x8x8xf32> to vector<8x8xf32>
      %258 = arith.truncf %257 : vector<8x8xf32> to vector<8x8xbf16>
      %c0_63 = arith.constant 0 : index
      %c0_64 = arith.constant 0 : index
      %259 = vector.load %arg6[%c0_63, %c0_64] : memref<8x32xbf16, #tpu.memory_space<vmem>>, vector<8x32xbf16>
      %cst_65 = arith.constant dense<0.000000e+00> : vector<8x32xf32>
      %260 = tpu.matmul %258, %259, %cst_65 {dimension_numbers = #tpu.dot_dimension_numbers<[1], [0], [0], [1], [0, 0, 1, 1], [], []>} : vector<8x8xbf16>, vector<8x32xbf16>, vector<8x32xf32> -> vector<8x32xf32>
      %c0_66 = arith.constant 0 : index
      %c0_67 = arith.constant 0 : index
      %261 = vector.load %arg7[%c0_66, %c0_67] : memref<9x32xf32, #tpu.memory_space<vmem>>, vector<1x32xf32>
      %262 = vector.broadcast %261 : vector<1x32xf32> to vector<8x32xf32>
      %263 = arith.addf %260, %262 : vector<8x32xf32>
      %c1 = arith.constant 1 : index
      %c0_68 = arith.constant 0 : index
      %264 = vector.load %arg7[%c1, %c0_68] : memref<9x32xf32, #tpu.memory_space<vmem>>, vector<8x32xf32>
      %265 = arith.addf %263, %264 : vector<8x32xf32>
      %c0_69 = arith.constant 0 : index
      %c0_70 = arith.constant 0 : index
      %266 = vector.load %arg18[%c0_69, %c0_70] : memref<8x32xf32, #tpu.memory_space<vmem>>, vector<8x32xf32>
      tpu.vector_store %arg18[%c0_69, %c0_70], %265 {strides = array<i32>} : memref<8x32xf32, #tpu.memory_space<vmem>>, vector<8x32xf32>,
      %267 = arith.index_cast %arg0 : i32 to index
      %268 = memref.load %arg2[%267] : memref<2xi32, #tpu.memory_space<smem>>
      %269 = arith.index_cast %arg0 : i32 to index
      %270 = memref.load %arg3[%269] : memref<2xi32, #tpu.memory_space<smem>>
      %271 = tpu.iota {dimensions = array<i32: 0>} : vector<8x8xi32>
      %272 = tpu.iota {dimensions = array<i32: 1>} : vector<8x8xi32>
      %273 = arith.cmpi sle, %272, %271 : vector<8x8xi32>
      %274 = vector.broadcast %268 : i32 to vector<8x8xi32>
      %275 = arith.cmpi slt, %272, %274 : vector<8x8xi32>
      %276 = arith.andi %273, %275 : vector<8x8xi1>
      %cst_71 = arith.constant 0.000000e+00 : f32
      %cst_72 = arith.constant -9.99999984E+17 : f32
      %277 = vector.broadcast %cst_71 : f32 to vector<8x8xf32>
      %278 = vector.broadcast %cst_72 : f32 to vector<8x8xf32>
      %279 = arith.select %276, %277, %278 : vector<8x8xi1>, vector<8x8xf32>
      %c0_73 = arith.constant 0 : index
      %c0_74 = arith.constant 0 : index
      %280 = vector.load %arg19[%c0_73, %c0_74] : memref<8x8xf32, #tpu.memory_space<vmem>>, vector<8x8xf32>
      tpu.vector_store %arg19[%c0_73, %c0_74], %279 {strides = array<i32>} : memref<8x8xf32, #tpu.memory_space<vmem>>, vector<8x8xf32>,
      %281 = tpu.iota {dimensions = array<i32: 1>} : vector<8x6xi32>
      %282 = vector.broadcast %270 : i32 to vector<8x6xi32>
      %283 = arith.cmpi slt, %281, %282 : vector<8x6xi32>
      %cst_75 = arith.constant 0.000000e+00 : f32
      %cst_76 = arith.constant -9.99999984E+17 : f32
      %284 = vector.broadcast %cst_75 : f32 to vector<8x6xf32>
      %285 = vector.broadcast %cst_76 : f32 to vector<8x6xf32>
      %286 = arith.select %283, %284, %285 : vector<8x6xi1>, vector<8x6xf32>
      %c0_77 = arith.constant 0 : index
      %c0_78 = arith.constant 0 : index
      %287 = vector.load %arg20[%c0_77, %c0_78] : memref<8x6xf32, #tpu.memory_space<vmem>>, vector<8x6xf32>
      tpu.vector_store %arg20[%c0_77, %c0_78], %286 {strides = array<i32>} : memref<8x6xf32, #tpu.memory_space<vmem>>, vector<8x6xf32>,
    } else {
    }
    %c0 = arith.constant 0 : index
    %c0_1 = arith.constant 0 : index
    %c0_2 = arith.constant 0 : index
    %3 = vector.load %arg8[%c0, %c0_1, %c0_2] : memref<1x6x32xf32, #tpu.memory_space<vmem>>, vector<1x6x32xf32>
    %4 = vector.shape_cast %3 : vector<1x6x32xf32> to vector<6x32xf32>
    %c0_3 = arith.constant 0 : index
    %c0_4 = arith.constant 0 : index
    %c0_5 = arith.constant 0 : index
    %5 = vector.load %arg9[%c0_3, %c0_4, %c0_5] : memref<1x8x96xf32, #tpu.memory_space<vmem>>, vector<1x8x96xf32>
    %6 = vector.shape_cast %5 : vector<1x8x96xf32> to vector<8x96xf32>
    %c0_6 = arith.constant 0 : index
    %c0_7 = arith.constant 0 : index
    %c0_8 = arith.constant 0 : index
    %7 = vector.load %arg10[%c0_6, %c0_7, %c0_8] : memref<1x32x128xbf16, #tpu.memory_space<vmem>>, vector<1x32x128xbf16>
    %8 = vector.shape_cast %7 : vector<1x32x128xbf16> to vector<32x128xbf16>
    %c0_9 = arith.constant 0 : index
    %c0_10 = arith.constant 0 : index
    %c0_11 = arith.constant 0 : index
    %9 = vector.load %arg11[%c0_9, %c0_10, %c0_11] : memref<1x32x128xbf16, #tpu.memory_space<vmem>>, vector<1x32x128xbf16>
    %10 = vector.shape_cast %9 : vector<1x32x128xbf16> to vector<32x128xbf16>
    %c0_12 = arith.constant 0 : index
    %c0_13 = arith.constant 0 : index
    %c0_14 = arith.constant 0 : index
    %11 = vector.load %arg12[%c0_12, %c0_13, %c0_14] : memref<1x32x64xbf16, #tpu.memory_space<vmem>>, vector<1x32x64xbf16>
    %12 = vector.shape_cast %11 : vector<1x32x64xbf16> to vector<32x64xbf16>
    %c0_15 = arith.constant 0 : index
    %c0_16 = arith.constant 0 : index
    %c0_17 = arith.constant 0 : index
    %13 = vector.load %arg13[%c0_15, %c0_16, %c0_17] : memref<1x64x32xbf16, #tpu.memory_space<vmem>>, vector<1x64x32xbf16>
    %14 = vector.shape_cast %13 : vector<1x64x32xbf16> to vector<64x32xbf16>
    %c0_18 = arith.constant 0 : index
    %c0_19 = arith.constant 0 : index
    %15 = vector.load %arg18[%c0_18, %c0_19] : memref<8x32xf32, #tpu.memory_space<vmem>>, vector<8x32xf32>
    %c0_20 = arith.constant 0 : index
    %c0_21 = arith.constant 0 : index
    %c0_22 = arith.constant 0 : index
    %16 = vector.load %arg5[%c0_20, %c0_21, %c0_22] : memref<1x6x32xf32, #tpu.memory_space<vmem>>, vector<1x6x32xf32>
    %17 = vector.shape_cast %16 : vector<1x6x32xf32> to vector<6x32xf32>
    %18 = vector.extract_strided_slice %4 {offsets = [0, 0], sizes = [1, 32], strides = [1, 1]} : vector<6x32xf32> to vector<1x32xf32>
    %19 = vector.extract_strided_slice %4 {offsets = [1, 0], sizes = [1, 32], strides = [1, 1]} : vector<6x32xf32> to vector<1x32xf32>
    %cst = arith.constant dense<0.000000e+00> : vector<8xf32>
    %20 = vector.multi_reduction <add>, %15, %cst [1] : vector<8x32xf32> to vector<8xf32>
    %21 = vector.shape_cast %20 : vector<8xf32> to vector<8x1xf32>
    %cst_23 = arith.constant 3.200000e+01 : f32
    %22 = vector.broadcast %cst_23 : f32 to vector<8x1xf32>
    %23 = arith.divf %21, %22 : vector<8x1xf32>
    %24 = vector.broadcast %23 : vector<8x1xf32> to vector<8x32xf32>
    %25 = arith.subf %15, %24 : vector<8x32xf32>
    %26 = arith.mulf %25, %25 : vector<8x32xf32>
    %cst_24 = arith.constant dense<0.000000e+00> : vector<8xf32>
    %27 = vector.multi_reduction <add>, %26, %cst_24 [1] : vector<8x32xf32> to vector<8xf32>
    %28 = vector.shape_cast %27 : vector<8xf32> to vector<8x1xf32>
    %cst_25 = arith.constant 3.200000e+01 : f32
    %29 = vector.broadcast %cst_25 : f32 to vector<8x1xf32>
    %30 = arith.divf %28, %29 : vector<8x1xf32>
    %31 = vector.broadcast %23 : vector<8x1xf32> to vector<8x32xf32>
    %32 = arith.subf %15, %31 : vector<8x32xf32>
    %cst_26 = arith.constant 9.99999997E-7 : f32
    %33 = vector.broadcast %cst_26 : f32 to vector<8x1xf32>
    %34 = arith.addf %30, %33 : vector<8x1xf32>
    %35 = math.rsqrt %34 : vector<8x1xf32>
    %36 = vector.broadcast %35 : vector<8x1xf32> to vector<8x32xf32>
    %37 = arith.mulf %32, %36 : vector<8x32xf32>
    %38 = vector.broadcast %18 : vector<1x32xf32> to vector<8x32xf32>
    %39 = arith.mulf %37, %38 : vector<8x32xf32>
    %40 = vector.broadcast %19 : vector<1x32xf32> to vector<8x32xf32>
    %41 = arith.addf %39, %40 : vector<8x32xf32>
    %42 = arith.truncf %41 : vector<8x32xf32> to vector<8x32xbf16>
    %43 = vector.extract_strided_slice %8 {offsets = [0, 0], sizes = [32, 96], strides = [1, 1]} : vector<32x128xbf16> to vector<32x96xbf16>
    %cst_27 = arith.constant dense<0.000000e+00> : vector<8x96xf32>
    %44 = tpu.matmul %42, %43, %cst_27 {dimension_numbers = #tpu.dot_dimension_numbers<[1], [0], [0], [1], [0, 0, 1, 1], [], []>} : vector<8x32xbf16>, vector<32x96xbf16>, vector<8x96xf32> -> vector<8x96xf32>
    %45 = vector.extract_strided_slice %6 {offsets = [0, 0], sizes = [1, 96], strides = [1, 1]} : vector<8x96xf32> to vector<1x96xf32>
    %46 = vector.broadcast %45 : vector<1x96xf32> to vector<8x96xf32>
    %47 = arith.addf %44, %46 : vector<8x96xf32>
    %48 = vector.extract_strided_slice %47 {offsets = [0, 0], sizes = [8, 32], strides = [1, 1]} : vector<8x96xf32> to vector<8x32xf32>
    %49 = vector.extract_strided_slice %47 {offsets = [0, 32], sizes = [8, 32], strides = [1, 1]} : vector<8x96xf32> to vector<8x32xf32>
    %50 = vector.extract_strided_slice %47 {offsets = [0, 64], sizes = [8, 32], strides = [1, 1]} : vector<8x96xf32> to vector<8x32xf32>
    %c0_28 = arith.constant 0 : index
    %c0_29 = arith.constant 0 : index
    %51 = vector.load %arg19[%c0_28, %c0_29] : memref<8x8xf32, #tpu.memory_space<vmem>>, vector<8x8xf32>
    %52 = vector.extract_strided_slice %8 {offsets = [0, 96], sizes = [32, 32], strides = [1, 1]} : vector<32x128xbf16> to vector<32x32xbf16>
    %53 = vector.extract_strided_slice %6 {offsets = [1, 0], sizes = [1, 32], strides = [1, 1]} : vector<8x96xf32> to vector<1x32xf32>
    %54 = vector.extract_strided_slice %48 {offsets = [0, 0], sizes = [8, 8], strides = [1, 1]} : vector<8x32xf32> to vector<8x8xf32>
    %55 = vector.shape_cast %54 : vector<8x8xf32> to vector<1x8x8xf32>
    %56 = vector.extract_strided_slice %48 {offsets = [0, 8], sizes = [8, 8], strides = [1, 1]} : vector<8x32xf32> to vector<8x8xf32>
    %57 = vector.shape_cast %56 : vector<8x8xf32> to vector<1x8x8xf32>
    %58 = vector.extract_strided_slice %48 {offsets = [0, 16], sizes = [8, 8], strides = [1, 1]} : vector<8x32xf32> to vector<8x8xf32>
    %59 = vector.shape_cast %58 : vector<8x8xf32> to vector<1x8x8xf32>
    %60 = vector.extract_strided_slice %48 {offsets = [0, 24], sizes = [8, 8], strides = [1, 1]} : vector<8x32xf32> to vector<8x8xf32>
    %61 = vector.shape_cast %60 : vector<8x8xf32> to vector<1x8x8xf32>
    %62 = tpu.concatenate %55, %57, %59, %61 in 0 : vector<1x8x8xf32>, vector<1x8x8xf32>, vector<1x8x8xf32>, vector<1x8x8xf32> -> vector<4x8x8xf32>
    %63 = arith.truncf %62 : vector<4x8x8xf32> to vector<4x8x8xbf16>
    %64 = vector.extract_strided_slice %49 {offsets = [0, 0], sizes = [8, 8], strides = [1, 1]} : vector<8x32xf32> to vector<8x8xf32>
    %65 = vector.shape_cast %64 : vector<8x8xf32> to vector<1x8x8xf32>
    %66 = vector.extract_strided_slice %49 {offsets = [0, 8], sizes = [8, 8], strides = [1, 1]} : vector<8x32xf32> to vector<8x8xf32>
    %67 = vector.shape_cast %66 : vector<8x8xf32> to vector<1x8x8xf32>
    %68 = vector.extract_strided_slice %49 {offsets = [0, 16], sizes = [8, 8], strides = [1, 1]} : vector<8x32xf32> to vector<8x8xf32>
    %69 = vector.shape_cast %68 : vector<8x8xf32> to vector<1x8x8xf32>
    %70 = vector.extract_strided_slice %49 {offsets = [0, 24], sizes = [8, 8], strides = [1, 1]} : vector<8x32xf32> to vector<8x8xf32>
    %71 = vector.shape_cast %70 : vector<8x8xf32> to vector<1x8x8xf32>
    %72 = tpu.concatenate %65, %67, %69, %71 in 0 : vector<1x8x8xf32>, vector<1x8x8xf32>, vector<1x8x8xf32>, vector<1x8x8xf32> -> vector<4x8x8xf32>
    %73 = arith.truncf %72 : vector<4x8x8xf32> to vector<4x8x8xbf16>
    %74 = vector.extract_strided_slice %50 {offsets = [0, 0], sizes = [8, 8], strides = [1, 1]} : vector<8x32xf32> to vector<8x8xf32>
    %75 = vector.shape_cast %74 : vector<8x8xf32> to vector<1x8x8xf32>
    %76 = vector.extract_strided_slice %50 {offsets = [0, 8], sizes = [8, 8], strides = [1, 1]} : vector<8x32xf32> to vector<8x8xf32>
    %77 = vector.shape_cast %76 : vector<8x8xf32> to vector<1x8x8xf32>
    %78 = vector.extract_strided_slice %50 {offsets = [0, 16], sizes = [8, 8], strides = [1, 1]} : vector<8x32xf32> to vector<8x8xf32>
    %79 = vector.shape_cast %78 : vector<8x8xf32> to vector<1x8x8xf32>
    %80 = vector.extract_strided_slice %50 {offsets = [0, 24], sizes = [8, 8], strides = [1, 1]} : vector<8x32xf32> to vector<8x8xf32>
    %81 = vector.shape_cast %80 : vector<8x8xf32> to vector<1x8x8xf32>
    %82 = tpu.concatenate %75, %77, %79, %81 in 0 : vector<1x8x8xf32>, vector<1x8x8xf32>, vector<1x8x8xf32>, vector<1x8x8xf32> -> vector<4x8x8xf32>
    %83 = arith.truncf %82 : vector<4x8x8xf32> to vector<4x8x8xbf16>
    %cst_30 = arith.constant dense<0.000000e+00> : vector<4x8x8xf32>
    %84 = tpu.matmul %63, %73, %cst_30 {dimension_numbers = #tpu.dot_dimension_numbers<[2], [2], [1], [1], [0, 0, 0, 1, 1, 1], [0], [0]>} : vector<4x8x8xbf16>, vector<4x8x8xbf16>, vector<4x8x8xf32> -> vector<4x8x8xf32>
    %85 = vector.shape_cast %51 : vector<8x8xf32> to vector<1x8x8xf32>
    %86 = vector.broadcast %85 : vector<1x8x8xf32> to vector<4x8x8xf32>
    %87 = arith.addf %84, %86 : vector<4x8x8xf32>
    %cst_31 = arith.constant dense<0xFF800000> : vector<4x8xf32>
    %88 = vector.multi_reduction <maximumf>, %87, %cst_31 [2] : vector<4x8x8xf32> to vector<4x8xf32>
    %89 = vector.shape_cast %88 : vector<4x8xf32> to vector<4x8x1xf32>
    %90 = vector.broadcast %89 : vector<4x8x1xf32> to vector<4x8x8xf32>
    %91 = arith.subf %87, %90 : vector<4x8x8xf32>
    %92 = math.exp %91 : vector<4x8x8xf32>
    %cst_32 = arith.constant dense<0.000000e+00> : vector<4x8xf32>
    %93 = vector.multi_reduction <add>, %92, %cst_32 [2] : vector<4x8x8xf32> to vector<4x8xf32>
    %94 = vector.shape_cast %93 : vector<4x8xf32> to vector<4x8x1xf32>
    %95 = tpu.reciprocal %94 {approx = true} : vector<4x8x1xf32> -> vector<4x8x1xf32>
    %96 = vector.broadcast %95 : vector<4x8x1xf32> to vector<4x8x8xf32>
    %97 = arith.mulf %92, %96 : vector<4x8x8xf32>
    %98 = arith.truncf %97 : vector<4x8x8xf32> to vector<4x8x8xbf16>
    %cst_33 = arith.constant dense<0.000000e+00> : vector<4x8x8xf32>
    %99 = tpu.matmul %98, %83, %cst_33 {dimension_numbers = #tpu.dot_dimension_numbers<[2], [1], [1], [2], [0, 0, 0, 1, 1, 2], [0], [0]>} : vector<4x8x8xbf16>, vector<4x8x8xbf16>, vector<4x8x8xf32> -> vector<4x8x8xf32>
    %100 = vector.extract_strided_slice %99 {offsets = [0, 0, 0], sizes = [1, 8, 8], strides = [1, 1, 1]} : vector<4x8x8xf32> to vector<1x8x8xf32>
    %101 = vector.shape_cast %100 : vector<1x8x8xf32> to vector<8x8xf32>
    %102 = vector.extract_strided_slice %99 {offsets = [1, 0, 0], sizes = [1, 8, 8], strides = [1, 1, 1]} : vector<4x8x8xf32> to vector<1x8x8xf32>
    %103 = vector.shape_cast %102 : vector<1x8x8xf32> to vector<8x8xf32>
    %104 = vector.extract_strided_slice %99 {offsets = [2, 0, 0], sizes = [1, 8, 8], strides = [1, 1, 1]} : vector<4x8x8xf32> to vector<1x8x8xf32>
    %105 = vector.shape_cast %104 : vector<1x8x8xf32> to vector<8x8xf32>
    %106 = vector.extract_strided_slice %99 {offsets = [3, 0, 0], sizes = [1, 8, 8], strides = [1, 1, 1]} : vector<4x8x8xf32> to vector<1x8x8xf32>
    %107 = vector.shape_cast %106 : vector<1x8x8xf32> to vector<8x8xf32>
    %108 = tpu.concatenate %101, %103, %105, %107 in 1 : vector<8x8xf32>, vector<8x8xf32>, vector<8x8xf32>, vector<8x8xf32> -> vector<8x32xf32>
    %109 = arith.truncf %108 : vector<8x32xf32> to vector<8x32xbf16>
    %cst_34 = arith.constant dense<0.000000e+00> : vector<8x32xf32>
    %110 = tpu.matmul %109, %52, %cst_34 {dimension_numbers = #tpu.dot_dimension_numbers<[1], [0], [0], [1], [0, 0, 1, 1], [], []>} : vector<8x32xbf16>, vector<32x32xbf16>, vector<8x32xf32> -> vector<8x32xf32>
    %111 = vector.broadcast %53 : vector<1x32xf32> to vector<8x32xf32>
    %112 = arith.addf %110, %111 : vector<8x32xf32>
    %113 = arith.addf %15, %112 : vector<8x32xf32>
    %114 = vector.extract_strided_slice %4 {offsets = [2, 0], sizes = [1, 32], strides = [1, 1]} : vector<6x32xf32> to vector<1x32xf32>
    %115 = vector.extract_strided_slice %4 {offsets = [3, 0], sizes = [1, 32], strides = [1, 1]} : vector<6x32xf32> to vector<1x32xf32>
    %cst_35 = arith.constant dense<0.000000e+00> : vector<8xf32>
    %116 = vector.multi_reduction <add>, %113, %cst_35 [1] : vector<8x32xf32> to vector<8xf32>
    %117 = vector.shape_cast %116 : vector<8xf32> to vector<8x1xf32>
    %cst_36 = arith.constant 3.200000e+01 : f32
    %118 = vector.broadcast %cst_36 : f32 to vector<8x1xf32>
    %119 = arith.divf %117, %118 : vector<8x1xf32>
    %120 = vector.broadcast %119 : vector<8x1xf32> to vector<8x32xf32>
    %121 = arith.subf %113, %120 : vector<8x32xf32>
    %122 = arith.mulf %121, %121 : vector<8x32xf32>
    %cst_37 = arith.constant dense<0.000000e+00> : vector<8xf32>
    %123 = vector.multi_reduction <add>, %122, %cst_37 [1] : vector<8x32xf32> to vector<8xf32>
    %124 = vector.shape_cast %123 : vector<8xf32> to vector<8x1xf32>
    %cst_38 = arith.constant 3.200000e+01 : f32
    %125 = vector.broadcast %cst_38 : f32 to vector<8x1xf32>
    %126 = arith.divf %124, %125 : vector<8x1xf32>
    %127 = vector.broadcast %119 : vector<8x1xf32> to vector<8x32xf32>
    %128 = arith.subf %113, %127 : vector<8x32xf32>
    %cst_39 = arith.constant 9.99999997E-7 : f32
    %129 = vector.broadcast %cst_39 : f32 to vector<8x1xf32>
    %130 = arith.addf %126, %129 : vector<8x1xf32>
    %131 = math.rsqrt %130 : vector<8x1xf32>
    %132 = vector.broadcast %131 : vector<8x1xf32> to vector<8x32xf32>
    %133 = arith.mulf %128, %132 : vector<8x32xf32>
    %134 = vector.broadcast %114 : vector<1x32xf32> to vector<8x32xf32>
    %135 = arith.mulf %133, %134 : vector<8x32xf32>
    %136 = vector.broadcast %115 : vector<1x32xf32> to vector<8x32xf32>
    %137 = arith.addf %135, %136 : vector<8x32xf32>
    %138 = arith.truncf %137 : vector<8x32xf32> to vector<8x32xbf16>
    %139 = vector.extract_strided_slice %10 {offsets = [0, 0], sizes = [32, 32], strides = [1, 1]} : vector<32x128xbf16> to vector<32x32xbf16>
    %cst_40 = arith.constant dense<0.000000e+00> : vector<8x32xf32>
    %140 = tpu.matmul %138, %139, %cst_40 {dimension_numbers = #tpu.dot_dimension_numbers<[1], [0], [0], [1], [0, 0, 1, 1], [], []>} : vector<8x32xbf16>, vector<32x32xbf16>, vector<8x32xf32> -> vector<8x32xf32>
    %141 = vector.extract_strided_slice %6 {offsets = [2, 0], sizes = [1, 32], strides = [1, 1]} : vector<8x96xf32> to vector<1x32xf32>
    %142 = vector.broadcast %141 : vector<1x32xf32> to vector<8x32xf32>
    %143 = arith.addf %140, %142 : vector<8x32xf32>
    %144 = arith.truncf %17 : vector<6x32xf32> to vector<6x32xbf16>
    %145 = vector.extract_strided_slice %10 {offsets = [0, 32], sizes = [32, 64], strides = [1, 1]} : vector<32x128xbf16> to vector<32x64xbf16>
    %cst_41 = arith.constant dense<0.000000e+00> : vector<6x64xf32>
    %146 = tpu.matmul %144, %145, %cst_41 {dimension_numbers = #tpu.dot_dimension_numbers<[1], [0], [0], [1], [0, 0, 1, 1], [], []>} : vector<6x32xbf16>, vector<32x64xbf16>, vector<6x64xf32> -> vector<6x64xf32>
    %147 = vector.extract_strided_slice %6 {offsets = [3, 0], sizes = [1, 64], strides = [1, 1]} : vector<8x96xf32> to vector<1x64xf32>
    %148 = vector.broadcast %147 : vector<1x64xf32> to vector<6x64xf32>
    %149 = arith.addf %146, %148 : vector<6x64xf32>
    %150 = vector.extract_strided_slice %149 {offsets = [0, 0], sizes = [6, 32], strides = [1, 1]} : vector<6x64xf32> to vector<6x32xf32>
    %151 = vector.extract_strided_slice %149 {offsets = [0, 32], sizes = [6, 32], strides = [1, 1]} : vector<6x64xf32> to vector<6x32xf32>
    %c0_42 = arith.constant 0 : index
    %c0_43 = arith.constant 0 : index
    %152 = vector.load %arg20[%c0_42, %c0_43] : memref<8x6xf32, #tpu.memory_space<vmem>>, vector<8x6xf32>
    %153 = vector.extract_strided_slice %10 {offsets = [0, 96], sizes = [32, 32], strides = [1, 1]} : vector<32x128xbf16> to vector<32x32xbf16>
    %154 = vector.extract_strided_slice %6 {offsets = [4, 0], sizes = [1, 32], strides = [1, 1]} : vector<8x96xf32> to vector<1x32xf32>
    %155 = vector.extract_strided_slice %143 {offsets = [0, 0], sizes = [8, 8], strides = [1, 1]} : vector<8x32xf32> to vector<8x8xf32>
    %156 = vector.shape_cast %155 : vector<8x8xf32> to vector<1x8x8xf32>
    %157 = vector.extract_strided_slice %143 {offsets = [0, 8], sizes = [8, 8], strides = [1, 1]} : vector<8x32xf32> to vector<8x8xf32>
    %158 = vector.shape_cast %157 : vector<8x8xf32> to vector<1x8x8xf32>
    %159 = vector.extract_strided_slice %143 {offsets = [0, 16], sizes = [8, 8], strides = [1, 1]} : vector<8x32xf32> to vector<8x8xf32>
    %160 = vector.shape_cast %159 : vector<8x8xf32> to vector<1x8x8xf32>
    %161 = vector.extract_strided_slice %143 {offsets = [0, 24], sizes = [8, 8], strides = [1, 1]} : vector<8x32xf32> to vector<8x8xf32>
    %162 = vector.shape_cast %161 : vector<8x8xf32> to vector<1x8x8xf32>
    %163 = tpu.concatenate %156, %158, %160, %162 in 0 : vector<1x8x8xf32>, vector<1x8x8xf32>, vector<1x8x8xf32>, vector<1x8x8xf32> -> vector<4x8x8xf32>
    %164 = arith.truncf %163 : vector<4x8x8xf32> to vector<4x8x8xbf16>
    %165 = vector.extract_strided_slice %150 {offsets = [0, 0], sizes = [6, 8], strides = [1, 1]} : vector<6x32xf32> to vector<6x8xf32>
    %166 = vector.shape_cast %165 : vector<6x8xf32> to vector<1x6x8xf32>
    %167 = vector.extract_strided_slice %150 {offsets = [0, 8], sizes = [6, 8], strides = [1, 1]} : vector<6x32xf32> to vector<6x8xf32>
    %168 = vector.shape_cast %167 : vector<6x8xf32> to vector<1x6x8xf32>
    %169 = vector.extract_strided_slice %150 {offsets = [0, 16], sizes = [6, 8], strides = [1, 1]} : vector<6x32xf32> to vector<6x8xf32>
    %170 = vector.shape_cast %169 : vector<6x8xf32> to vector<1x6x8xf32>
    %171 = vector.extract_strided_slice %150 {offsets = [0, 24], sizes = [6, 8], strides = [1, 1]} : vector<6x32xf32> to vector<6x8xf32>
    %172 = vector.shape_cast %171 : vector<6x8xf32> to vector<1x6x8xf32>
    %173 = tpu.concatenate %166, %168, %170, %172 in 0 : vector<1x6x8xf32>, vector<1x6x8xf32>, vector<1x6x8xf32>, vector<1x6x8xf32> -> vector<4x6x8xf32>
    %174 = arith.truncf %173 : vector<4x6x8xf32> to vector<4x6x8xbf16>
    %175 = vector.extract_strided_slice %151 {offsets = [0, 0], sizes = [6, 8], strides = [1, 1]} : vector<6x32xf32> to vector<6x8xf32>
    %176 = vector.shape_cast %175 : vector<6x8xf32> to vector<1x6x8xf32>
    %177 = vector.extract_strided_slice %151 {offsets = [0, 8], sizes = [6, 8], strides = [1, 1]} : vector<6x32xf32> to vector<6x8xf32>
    %178 = vector.shape_cast %177 : vector<6x8xf32> to vector<1x6x8xf32>
    %179 = vector.extract_strided_slice %151 {offsets = [0, 16], sizes = [6, 8], strides = [1, 1]} : vector<6x32xf32> to vector<6x8xf32>
    %180 = vector.shape_cast %179 : vector<6x8xf32> to vector<1x6x8xf32>
    %181 = vector.extract_strided_slice %151 {offsets = [0, 24], sizes = [6, 8], strides = [1, 1]} : vector<6x32xf32> to vector<6x8xf32>
    %182 = vector.shape_cast %181 : vector<6x8xf32> to vector<1x6x8xf32>
    %183 = tpu.concatenate %176, %178, %180, %182 in 0 : vector<1x6x8xf32>, vector<1x6x8xf32>, vector<1x6x8xf32>, vector<1x6x8xf32> -> vector<4x6x8xf32>
    %184 = arith.truncf %183 : vector<4x6x8xf32> to vector<4x6x8xbf16>
    %cst_44 = arith.constant dense<0.000000e+00> : vector<4x8x6xf32>
    %185 = tpu.matmul %164, %174, %cst_44 {dimension_numbers = #tpu.dot_dimension_numbers<[2], [2], [1], [1], [0, 0, 0, 1, 1, 1], [0], [0]>} : vector<4x8x8xbf16>, vector<4x6x8xbf16>, vector<4x8x6xf32> -> vector<4x8x6xf32>
    %186 = vector.shape_cast %152 : vector<8x6xf32> to vector<1x8x6xf32>
    %187 = vector.broadcast %186 : vector<1x8x6xf32> to vector<4x8x6xf32>
    %188 = arith.addf %185, %187 : vector<4x8x6xf32>
    %cst_45 = arith.constant dense<0xFF800000> : vector<4x8xf32>
    %189 = vector.multi_reduction <maximumf>, %188, %cst_45 [2] : vector<4x8x6xf32> to vector<4x8xf32>
    %190 = vector.shape_cast %189 : vector<4x8xf32> to vector<4x8x1xf32>
    %191 = vector.broadcast %190 : vector<4x8x1xf32> to vector<4x8x6xf32>
    %192 = arith.subf %188, %191 : vector<4x8x6xf32>
    %193 = math.exp %192 : vector<4x8x6xf32>
    %cst_46 = arith.constant dense<0.000000e+00> : vector<4x8xf32>
    %194 = vector.multi_reduction <add>, %193, %cst_46 [2] : vector<4x8x6xf32> to vector<4x8xf32>
    %195 = vector.shape_cast %194 : vector<4x8xf32> to vector<4x8x1xf32>
    %196 = tpu.reciprocal %195 {approx = true} : vector<4x8x1xf32> -> vector<4x8x1xf32>
    %197 = vector.broadcast %196 : vector<4x8x1xf32> to vector<4x8x6xf32>
    %198 = arith.mulf %193, %197 : vector<4x8x6xf32>
    %199 = arith.truncf %198 : vector<4x8x6xf32> to vector<4x8x6xbf16>
    %cst_47 = arith.constant dense<0.000000e+00> : vector<4x8x8xf32>
    %200 = tpu.matmul %199, %184, %cst_47 {dimension_numbers = #tpu.dot_dimension_numbers<[2], [1], [1], [2], [0, 0, 0, 1, 1, 2], [0], [0]>} : vector<4x8x6xbf16>, vector<4x6x8xbf16>, vector<4x8x8xf32> -> vector<4x8x8xf32>
    %201 = vector.extract_strided_slice %200 {offsets = [0, 0, 0], sizes = [1, 8, 8], strides = [1, 1, 1]} : vector<4x8x8xf32> to vector<1x8x8xf32>
    %202 = vector.shape_cast %201 : vector<1x8x8xf32> to vector<8x8xf32>
    %203 = vector.extract_strided_slice %200 {offsets = [1, 0, 0], sizes = [1, 8, 8], strides = [1, 1, 1]} : vector<4x8x8xf32> to vector<1x8x8xf32>
    %204 = vector.shape_cast %203 : vector<1x8x8xf32> to vector<8x8xf32>
    %205 = vector.extract_strided_slice %200 {offsets = [2, 0, 0], sizes = [1, 8, 8], strides = [1, 1, 1]} : vector<4x8x8xf32> to vector<1x8x8xf32>
    %206 = vector.shape_cast %205 : vector<1x8x8xf32> to vector<8x8xf32>
    %207 = vector.extract_strided_slice %200 {offsets = [3, 0, 0], sizes = [1, 8, 8], strides = [1, 1, 1]} : vector<4x8x8xf32> to vector<1x8x8xf32>
    %208 = vector.shape_cast %207 : vector<1x8x8xf32> to vector<8x8xf32>
    %209 = tpu.concatenate %202, %204, %206, %208 in 1 : vector<8x8xf32>, vector<8x8xf32>, vector<8x8xf32>, vector<8x8xf32> -> vector<8x32xf32>
    %210 = arith.truncf %209 : vector<8x32xf32> to vector<8x32xbf16>
    %cst_48 = arith.constant dense<0.000000e+00> : vector<8x32xf32>
    %211 = tpu.matmul %210, %153, %cst_48 {dimension_numbers = #tpu.dot_dimension_numbers<[1], [0], [0], [1], [0, 0, 1, 1], [], []>} : vector<8x32xbf16>, vector<32x32xbf16>, vector<8x32xf32> -> vector<8x32xf32>
    %212 = vector.broadcast %154 : vector<1x32xf32> to vector<8x32xf32>
    %213 = arith.addf %211, %212 : vector<8x32xf32>
    %214 = arith.addf %113, %213 : vector<8x32xf32>
    %215 = vector.extract_strided_slice %4 {offsets = [4, 0], sizes = [1, 32], strides = [1, 1]} : vector<6x32xf32> to vector<1x32xf32>
    %216 = vector.extract_strided_slice %4 {offsets = [5, 0], sizes = [1, 32], strides = [1, 1]} : vector<6x32xf32> to vector<1x32xf32>
    %cst_49 = arith.constant dense<0.000000e+00> : vector<8xf32>
    %217 = vector.multi_reduction <add>, %214, %cst_49 [1] : vector<8x32xf32> to vector<8xf32>
    %218 = vector.shape_cast %217 : vector<8xf32> to vector<8x1xf32>
    %cst_50 = arith.constant 3.200000e+01 : f32
    %219 = vector.broadcast %cst_50 : f32 to vector<8x1xf32>
    %220 = arith.divf %218, %219 : vector<8x1xf32>
    %221 = vector.broadcast %220 : vector<8x1xf32> to vector<8x32xf32>
    %222 = arith.subf %214, %221 : vector<8x32xf32>
    %223 = arith.mulf %222, %222 : vector<8x32xf32>
    %cst_51 = arith.constant dense<0.000000e+00> : vector<8xf32>
    %224 = vector.multi_reduction <add>, %223, %cst_51 [1] : vector<8x32xf32> to vector<8xf32>
    %225 = vector.shape_cast %224 : vector<8xf32> to vector<8x1xf32>
    %cst_52 = arith.constant 3.200000e+01 : f32
    %226 = vector.broadcast %cst_52 : f32 to vector<8x1xf32>
    %227 = arith.divf %225, %226 : vector<8x1xf32>
    %228 = vector.broadcast %220 : vector<8x1xf32> to vector<8x32xf32>
    %229 = arith.subf %214, %228 : vector<8x32xf32>
    %cst_53 = arith.constant 9.99999997E-7 : f32
    %230 = vector.broadcast %cst_53 : f32 to vector<8x1xf32>
    %231 = arith.addf %227, %230 : vector<8x1xf32>
    %232 = math.rsqrt %231 : vector<8x1xf32>
    %233 = vector.broadcast %232 : vector<8x1xf32> to vector<8x32xf32>
    %234 = arith.mulf %229, %233 : vector<8x32xf32>
    %235 = vector.broadcast %215 : vector<1x32xf32> to vector<8x32xf32>
    %236 = arith.mulf %234, %235 : vector<8x32xf32>
    %237 = vector.broadcast %216 : vector<1x32xf32> to vector<8x32xf32>
    %238 = arith.addf %236, %237 : vector<8x32xf32>
    %239 = arith.truncf %238 : vector<8x32xf32> to vector<8x32xbf16>
    %cst_54 = arith.constant dense<0.000000e+00> : vector<8x64xf32>
    %240 = tpu.matmul %239, %12, %cst_54 {dimension_numbers = #tpu.dot_dimension_numbers<[1], [0], [0], [1], [0, 0, 1, 1], [], []>} : vector<8x32xbf16>, vector<32x64xbf16>, vector<8x64xf32> -> vector<8x64xf32>
    %241 = vector.extract_strided_slice %6 {offsets = [5, 0], sizes = [1, 64], strides = [1, 1]} : vector<8x96xf32> to vector<1x64xf32>
    %242 = vector.broadcast %241 : vector<1x64xf32> to vector<8x64xf32>
    %243 = arith.addf %240, %242 : vector<8x64xf32>
    %cst_55 = arith.constant 0.000000e+00 : f32
    %244 = vector.broadcast %cst_55 : f32 to vector<8x64xf32>
    %245 = arith.maximumf %243, %244 : vector<8x64xf32>
    %246 = arith.truncf %245 : vector<8x64xf32> to vector<8x64xbf16>
    %cst_56 = arith.constant dense<0.000000e+00> : vector<8x32xf32>
    %247 = tpu.matmul %246, %14, %cst_56 {dimension_numbers = #tpu.dot_dimension_numbers<[1], [0], [0], [1], [0, 0, 1, 1], [], []>} : vector<8x64xbf16>, vector<64x32xbf16>, vector<8x32xf32> -> vector<8x32xf32>
    %248 = vector.extract_strided_slice %6 {offsets = [6, 0], sizes = [1, 32], strides = [1, 1]} : vector<8x96xf32> to vector<1x32xf32>
    %249 = vector.broadcast %248 : vector<1x32xf32> to vector<8x32xf32>
    %250 = arith.addf %247, %249 : vector<8x32xf32>
    %251 = arith.addf %250, %214 : vector<8x32xf32>
    %c0_57 = arith.constant 0 : index
    %c0_58 = arith.constant 0 : index
    %252 = vector.load %arg18[%c0_57, %c0_58] : memref<8x32xf32, #tpu.memory_space<vmem>>, vector<8x32xf32>
    tpu.vector_store %arg18[%c0_57, %c0_58], %251 {strides = array<i32>} : memref<8x32xf32, #tpu.memory_space<vmem>>, vector<8x32xf32>,
    %c1_i32 = arith.constant 1 : i32
    %253 = arith.cmpi eq, %arg1, %c1_i32 : i32
    %254 = arith.extui %253 : i1 to i32
    %c0_i32_59 = arith.constant 0 : i32
    %255 = arith.cmpi ne, %254, %c0_i32_59 : i32
    scf.if %255 {
      %c0_60 = arith.constant 0 : index
      %c0_61 = arith.constant 0 : index
      %256 = vector.load %arg14[%c0_60, %c0_61] : memref<2x32xf32, #tpu.memory_space<vmem>>, vector<1x32xf32>
      %c1 = arith.constant 1 : index
      %c0_62 = arith.constant 0 : index
      %257 = vector.load %arg14[%c1, %c0_62] : memref<2x32xf32, #tpu.memory_space<vmem>>, vector<1x32xf32>
      %cst_63 = arith.constant dense<0.000000e+00> : vector<8xf32>
      %258 = vector.multi_reduction <add>, %251, %cst_63 [1] : vector<8x32xf32> to vector<8xf32>
      %259 = vector.shape_cast %258 : vector<8xf32> to vector<8x1xf32>
      %cst_64 = arith.constant 3.200000e+01 : f32
      %260 = vector.broadcast %cst_64 : f32 to vector<8x1xf32>
      %261 = arith.divf %259, %260 : vector<8x1xf32>
      %262 = vector.broadcast %261 : vector<8x1xf32> to vector<8x32xf32>
      %263 = arith.subf %251, %262 : vector<8x32xf32>
      %264 = arith.mulf %263, %263 : vector<8x32xf32>
      %cst_65 = arith.constant dense<0.000000e+00> : vector<8xf32>
      %265 = vector.multi_reduction <add>, %264, %cst_65 [1] : vector<8x32xf32> to vector<8xf32>
      %266 = vector.shape_cast %265 : vector<8xf32> to vector<8x1xf32>
      %cst_66 = arith.constant 3.200000e+01 : f32
      %267 = vector.broadcast %cst_66 : f32 to vector<8x1xf32>
      %268 = arith.divf %266, %267 : vector<8x1xf32>
      %269 = vector.broadcast %261 : vector<8x1xf32> to vector<8x32xf32>
      %270 = arith.subf %251, %269 : vector<8x32xf32>
      %cst_67 = arith.constant 9.99999997E-7 : f32
      %271 = vector.broadcast %cst_67 : f32 to vector<8x1xf32>
      %272 = arith.addf %268, %271 : vector<8x1xf32>
      %273 = math.rsqrt %272 : vector<8x1xf32>
      %274 = vector.broadcast %273 : vector<8x1xf32> to vector<8x32xf32>
      %275 = arith.mulf %270, %274 : vector<8x32xf32>
      %276 = vector.broadcast %256 : vector<1x32xf32> to vector<8x32xf32>
      %277 = arith.mulf %275, %276 : vector<8x32xf32>
      %278 = vector.broadcast %257 : vector<1x32xf32> to vector<8x32xf32>
      %279 = arith.addf %277, %278 : vector<8x32xf32>
      %280 = arith.truncf %279 : vector<8x32xf32> to vector<8x32xbf16>
      %c0_68 = arith.constant 0 : index
      %c0_69 = arith.constant 0 : index
      %281 = vector.load %arg15[%c0_68, %c0_69] : memref<32x128xbf16, #tpu.memory_space<vmem>>, vector<32x128xbf16>
      %cst_70 = arith.constant dense<0.000000e+00> : vector<8x128xf32>
      %282 = tpu.matmul %280, %281, %cst_70 {dimension_numbers = #tpu.dot_dimension_numbers<[1], [0], [0], [1], [0, 0, 1, 1], [], []>} : vector<8x32xbf16>, vector<32x128xbf16>, vector<8x128xf32> -> vector<8x128xf32>
      %c0_71 = arith.constant 0 : index
      %c0_72 = arith.constant 0 : index
      %283 = vector.load %arg16[%c0_71, %c0_72] : memref<1x128xf32, #tpu.memory_space<vmem>>, vector<1x128xf32>
      %284 = vector.broadcast %283 : vector<1x128xf32> to vector<8x128xf32>
      %285 = arith.addf %282, %284 : vector<8x128xf32>
      %c0_73 = arith.constant 0 : index
      %c0_74 = arith.constant 0 : index
      %c0_75 = arith.constant 0 : index
      %286 = vector.load %arg17[%c0_73, %c0_74, %c0_75] : memref<1x8x128xf32, #tpu.memory_space<vmem>>, vector<1x8x128xf32>
      %287 = vector.shape_cast %286 : vector<1x8x128xf32> to vector<8x128xf32>
      %288 = vector.shape_cast %285 : vector<8x128xf32> to vector<1x8x128xf32>
      tpu.vector_store %arg17[%c0_73, %c0_74, %c0_75], %288 {strides = array<i32>} : memref<1x8x128xf32, #tpu.memory_space<vmem>>, vector<1x8x128xf32>,
    } else {
    }
    return
  }
  func.func @transform_0(%arg0: i32, %arg1: i32, %arg2: memref<2xi32, #tpu.memory_space<smem>>, %arg3: memref<2xi32, #tpu.memory_space<smem>>) -> (i32, i32, i32) {
    %c0_i32 = arith.constant 0 : i32
    %c0_i32_0 = arith.constant 0 : i32
    %c0_i32_1 = arith.constant 0 : i32
    return %arg0, %c0_i32, %c0_i32_0 : i32, i32, i32
  }
  func.func @transform_1(%arg0: i32, %arg1: i32, %arg2: memref<2xi32, #tpu.memory_space<smem>>, %arg3: memref<2xi32, #tpu.memory_space<smem>>) -> (i32, i32, i32) {
    %c0_i32 = arith.constant 0 : i32
    %c0_i32_0 = arith.constant 0 : i32
    %c0_i32_1 = arith.constant 0 : i32
    return %arg0, %c0_i32, %c0_i32_0 : i32, i32, i32
  }
  func.func @transform_2(%arg0: i32, %arg1: i32, %arg2: memref<2xi32, #tpu.memory_space<smem>>, %arg3: memref<2xi32, #tpu.memory_space<smem>>) -> (i32, i32) {
    %c0_i32 = arith.constant 0 : i32
    %c0_i32_0 = arith.constant 0 : i32
    %c0_i32_1 = arith.constant 0 : i32
    return %c0_i32, %c0_i32_0 : i32, i32
  }
  func.func @transform_3(%arg0: i32, %arg1: i32, %arg2: memref<2xi32, #tpu.memory_space<smem>>, %arg3: memref<2xi32, #tpu.memory_space<smem>>) -> (i32, i32) {
    %c0_i32 = arith.constant 0 : i32
    %c0_i32_0 = arith.constant 0 : i32
    %c0_i32_1 = arith.constant 0 : i32
    return %c0_i32, %c0_i32_0 : i32, i32
  }
  func.func @transform_4(%arg0: i32, %arg1: i32, %arg2: memref<2xi32, #tpu.memory_space<smem>>, %arg3: memref<2xi32, #tpu.memory_space<smem>>) -> (i32, i32, i32) {
    %c0_i32 = arith.constant 0 : i32
    %c0_i32_0 = arith.constant 0 : i32
    %c0_i32_1 = arith.constant 0 : i32
    return %arg1, %c0_i32, %c0_i32_0 : i32, i32, i32
  }
  func.func @transform_5(%arg0: i32, %arg1: i32, %arg2: memref<2xi32, #tpu.memory_space<smem>>, %arg3: memref<2xi32, #tpu.memory_space<smem>>) -> (i32, i32, i32) {
    %c0_i32 = arith.constant 0 : i32
    %c0_i32_0 = arith.constant 0 : i32
    %c0_i32_1 = arith.constant 0 : i32
    return %arg1, %c0_i32, %c0_i32_0 : i32, i32, i32
  }
  func.func @transform_6(%arg0: i32, %arg1: i32, %arg2: memref<2xi32, #tpu.memory_space<smem>>, %arg3: memref<2xi32, #tpu.memory_space<smem>>) -> (i32, i32, i32) {
    %c0_i32 = arith.constant 0 : i32
    %c0_i32_0 = arith.constant 0 : i32
    %c0_i32_1 = arith.constant 0 : i32
    return %arg1, %c0_i32, %c0_i32_0 : i32, i32, i32
  }
  func.func @transform_7(%arg0: i32, %arg1: i32, %arg2: memref<2xi32, #tpu.memory_space<smem>>, %arg3: memref<2xi32, #tpu.memory_space<smem>>) -> (i32, i32, i32) {
    %c0_i32 = arith.constant 0 : i32
    %c0_i32_0 = arith.constant 0 : i32
    %c0_i32_1 = arith.constant 0 : i32
    return %arg1, %c0_i32, %c0_i32_0 : i32, i32, i32
  }
  func.func @transform_8(%arg0: i32, %arg1: i32, %arg2: memref<2xi32, #tpu.memory_space<smem>>, %arg3: memref<2xi32, #tpu.memory_space<smem>>) -> (i32, i32, i32) {
    %c0_i32 = arith.constant 0 : i32
    %c0_i32_0 = arith.constant 0 : i32
    %c0_i32_1 = arith.constant 0 : i32
    return %arg1, %c0_i32, %c0_i32_0 : i32, i32, i32
  }
  func.func @transform_9(%arg0: i32, %arg1: i32, %arg2: memref<2xi32, #tpu.memory_space<smem>>, %arg3: memref<2xi32, #tpu.memory_space<smem>>) -> (i32, i32, i32) {
    %c0_i32 = arith.constant 0 : i32
    %c0_i32_0 = arith.constant 0 : i32
    %c0_i32_1 = arith.constant 0 : i32
    return %arg1, %c0_i32, %c0_i32_0 : i32, i32, i32
  }
  func.func @transform_10(%arg0: i32, %arg1: i32, %arg2: memref<2xi32, #tpu.memory_space<smem>>, %arg3: memref<2xi32, #tpu.memory_space<smem>>) -> (i32, i32) {
    %c0_i32 = arith.constant 0 : i32
    %c0_i32_0 = arith.constant 0 : i32
    %c0_i32_1 = arith.constant 0 : i32
    return %c0_i32, %c0_i32_0 : i32, i32
  }
  func.func @transform_11(%arg0: i32, %arg1: i32, %arg2: memref<2xi32, #tpu.memory_space<smem>>, %arg3: memref<2xi32, #tpu.memory_space<smem>>) -> (i32, i32) {
    %c0_i32 = arith.constant 0 : i32
    %c0_i32_0 = arith.constant 0 : i32
    %c0_i32_1 = arith.constant 0 : i32
    return %c0_i32, %c0_i32_0 : i32, i32
  }
  func.func @transform_12(%arg0: i32, %arg1: i32, %arg2: memref<2xi32, #tpu.memory_space<smem>>, %arg3: memref<2xi32, #tpu.memory_space<smem>>) -> (i32, i32) {
    %c0_i32 = arith.constant 0 : i32
    %c0_i32_0 = arith.constant 0 : i32
    %c0_i32_1 = arith.constant 0 : i32
    return %c0_i32, %c0_i32_0 : i32, i32
  }
  func.func @transform_13(%arg0: i32, %arg1: i32, %arg2: memref<2xi32, #tpu.memory_space<smem>>, %arg3: memref<2xi32, #tpu.memory_space<smem>>) -> (i32, i32, i32) {
    %c0_i32 = arith.constant 0 : i32
    %c0_i32_0 = arith.constant 0 : i32
    %c0_i32_1 = arith.constant 0 : i32
    return %arg0, %c0_i32, %c0_i32_0 : i32, i32, i32
  }
}

</mosaic_0001>

<llo_original>
// kernel: _lambda_.1
$region0: #{_lambda_.1}
  #allocation0 [shape = 'u32[]', space=smem, size = 0x4, offset = 0x4, fixed_abs, tag = 'smem constant byte address 0x4 - core index']
  #allocation1 [shape = 'u32[144,128]{1,0:T(1,128)}', space=vmem, size = 0x12000, scoped, tag = 'internal scratch']
  #allocation2 [shape = 'f32[8,32]{1,0:T(8,128)}', space=vmem, size = 0x1000, scoped, tag = 'scratch operand']
  #allocation3 [shape = 'f32[8,8]{1,0:T(8,128)}', space=vmem, size = 0x1000, scoped, tag = 'scratch operand']
  #allocation4 [shape = 'f32[8,6]{1,0:T(8,128)}', space=vmem, size = 0x1000, scoped, tag = 'scratch operand']
  #allocation5 [shape = 's32[1]{0}', space=sflag, size = 0x4, scoped, tag = 'scoped memory for _lambda_.1']
  #allocation6 [shape = 'u8[512]{0}', space=smem, size = 0x200, scoped, tag = 'prefetched SMEM operand 0']
  #allocation7 [shape = 'u8[512]{0}', space=smem, size = 0x200, scoped, tag = 'prefetched SMEM operand 1']
  %s0 = inlined_call_operand.vmem [shape: s32[2], index: 0, kind: input, shape index: {}]
  %s1 = inlined_call_operand.vmem [shape: s32[2], index: 1, kind: input, shape index: {}]
  %s2 = inlined_call_operand.vmem [shape: f32[2,8,8], index: 2, kind: input, shape index: {}]
  %s3 = inlined_call_operand.vmem [shape: f32[2,6,32], index: 3, kind: input, shape index: {}]
  %s4 = inlined_call_operand.vmem [shape: bf16[8,32], index: 4, kind: input, shape index: {}]
  %s5 = inlined_call_operand.vmem [shape: f32[9,32], index: 5, kind: input, shape index: {}]
  %s6 = inlined_call_operand.vmem [shape: f32[2,6,32], index: 6, kind: input, shape index: {}]
  %s7 = inlined_call_operand.vmem [shape: f32[2,8,96], index: 7, kind: input, shape index: {}]
  %s8 = inlined_call_operand.vmem [shape: bf16[2,32,128], index: 8, kind: input, shape index: {}]
  %s9 = inlined_call_operand.vmem [shape: bf16[2,32,128], index: 9, kind: input, shape index: {}]
  %s10 = inlined_call_operand.vmem [shape: bf16[2,32,64], index: 10, kind: input, shape index: {}]
  %s11 = inlined_call_operand.vmem [shape: bf16[2,64,32], index: 11, kind: input, shape index: {}]
  %s12 = inlined_call_operand.vmem [shape: f32[2,32], index: 12, kind: input, shape index: {}]
  %s13 = inlined_call_operand.vmem [shape: bf16[32,128], index: 13, kind: input, shape index: {}]
  %s14 = inlined_call_operand.vmem [shape: f32[1,128], index: 14, kind: input, shape index: {}]
  %s15 = inlined_call_operand.vmem [shape: f32[2,8,128], index: 15, kind: output, shape index: {}]
  %s16 = sld [smem:[#allocation0]]
  $region93: #{_lambda_.1} parent=0
    _
  %s18 = ssub.s32 1, %s16
  %s19 = scalar_select 0, %s18, %s16
  %s20 = sshll.u32 %s0, 4
  %s21 = int_to_ptr.vmem [resolvable:$true] %s20
  %23 = dma.vmem_to_smem %s21, 16, [#allocation6], [#allocation5]
  %s24 = sshll.u32 %s1, 4
  %s25 = int_to_ptr.vmem [resolvable:$true] %s24
  %27 = dma.vmem_to_smem %s25, 16, [#allocation7], [#allocation5]
  %28 = dma.done [#allocation5], 32
  %29 = sfence
  loop: start=0, step=1, limit=6
  $region2: #{_lambda_.1} parent=0 // loop_pre_header
    _
  $region3: #{_lambda_.1} parent=0 // loop_header
    %s31 = sphi 0, %s35
    %p32 = scmp.ge.s32.totalorder %s31, 6
    %s38 = sphi 0, %s50
    %s39 = sphi 0, %s46
    %s40 = sphi 0, %s38
    %s41 = sphi 0, %s39
    %s42 = sphi 0, %s40
    %s43 = sphi 0, %s41
    %s53 = sphi 0, %s55
    %s56 = sphi 0, %s53
    %s57 = sphi 0, %s56
    %s73 = sphi 0, %s57
    %s79 = sphi 0, %s81
    %s82 = sphi 0, %s79
    %s83 = sphi 0, %s82
    %s99 = sphi 0, %s83
    %s103 = sphi 0, %s103
    %s105 = sphi 0, %s103
    %s106 = sphi 0, %s105
    %s120 = sphi 0, %s106
    %s124 = sphi 0, %s124
    %s126 = sphi 0, %s124
    %s127 = sphi 0, %s126
    %s141 = sphi 0, %s127
    %s147 = sphi 0, %s149
    %s150 = sphi 0, %s147
    %s151 = sphi 0, %s150
    %s167 = sphi 0, %s151
    %s173 = sphi 0, %s175
    %s176 = sphi 0, %s173
    %s177 = sphi 0, %s176
    %s193 = sphi 0, %s177
    %s199 = sphi 0, %s201
    %s202 = sphi 0, %s199
    %s203 = sphi 0, %s202
    %s219 = sphi 0, %s203
    %s225 = sphi 0, %s227
    %s228 = sphi 0, %s225
    %s229 = sphi 0, %s228
    %s245 = sphi 0, %s229
    %s251 = sphi 0, %s253
    %s254 = sphi 0, %s251
    %s255 = sphi 0, %s254
    %s271 = sphi 0, %s255
    %s277 = sphi 0, %s279
    %s280 = sphi 0, %s277
    %s281 = sphi 0, %s280
    %s297 = sphi 0, %s281
    %s301 = sphi 0, %s301
    %s303 = sphi 0, %s301
    %s304 = sphi 0, %s303
    %s318 = sphi 0, %s304
    %s322 = sphi 0, %s322
    %s324 = sphi 0, %s322
    %s325 = sphi 0, %s324
    %s339 = sphi 0, %s325
    %s343 = sphi 0, %s343
    %s345 = sphi 0, %s343
    %s346 = sphi 0, %s345
    %s360 = sphi 0, %s346
    %s366 = sphi 0, %s368
    %s369 = sphi 0, %s366
    %s370 = sphi 0, %s369
    %s386 = sphi 0, %s370
  $region4: #{_lambda_.1} parent=0 // loop_header_branch
    %34 = sbr.rel (%p32) target = $region8
  $region5: #{_lambda_.1} parent=0 // loop_body
    %s36 = ssub.s32 %s31, 1
    %s37 = ssub.s32 %s31, 2
    %s44 = sadd.s32 1, %s39
    %p45 = scmp.ge.s32.totalorder %s44, 2
    %s46 = scalar_select %p45, 0, %s44
    %s47 = sadd.s32 1, %s38
    %s48 = scalar_select %p45, %s47, %s38
    %p49 = scmp.ge.s32.totalorder %s48, 2
    %s50 = scalar_select %p49, 0, %s48
    %s51 = ssub.s32 %s38, %s50
    %p52 = scmp.eq.s32.totalorder %s51, 0
    %s54 = sadd.s32 %s53, 1
    %s55 = scalar_select %p52, %s53, %s54
    %p58 = pneg %p52
    %p59 = scmp.eq.s32.totalorder %s31, 3
    %p60 = por %p58, %p59
    %p61 = scmp.ne.s32.totalorder %s53, %s56
    %p62 = scmp.eq.s32.totalorder %s31, 0
    %p63 = por %p61, %p62
    %p64 = scmp.ne.s32.totalorder %s53, %s56
    %p65 = scmp.eq.s32.totalorder %s36, 3
    %p66 = por %p64, %p65
    %p67 = scmp.ne.s32.totalorder %s56, %s57
    %p68 = scmp.eq.s32.totalorder %s36, 0
    %p69 = por %p67, %p68
    %p70 = scmp.ne.s32.totalorder %s56, %s57
    %p71 = scmp.eq.s32.totalorder %s37, 3
    %p72 = por %p70, %p71
    %p74 = scmp.ne.s32.totalorder %s57, %s73
    %p75 = scmp.eq.s32.totalorder %s37, 0
    %p76 = por %p74, %p75
    %s77 = ssub.s32 %s38, %s50
    %p78 = scmp.eq.s32.totalorder %s77, 0
    %s80 = sadd.s32 %s79, 1
    %s81 = scalar_select %p78, %s79, %s80
    %p84 = pneg %p78
    %p85 = scmp.eq.s32.totalorder %s31, 3
    %p86 = por %p84, %p85
    %p87 = scmp.ne.s32.totalorder %s79, %s82
    %p88 = scmp.eq.s32.totalorder %s31, 0
    %p89 = por %p87, %p88
    %p90 = scmp.ne.s32.totalorder %s79, %s82
    %p91 = scmp.eq.s32.totalorder %s36, 3
    %p92 = por %p90, %p91
    %p93 = scmp.ne.s32.totalorder %s82, %s83
    %p94 = scmp.eq.s32.totalorder %s36, 0
    %p95 = por %p93, %p94
    %p96 = scmp.ne.s32.totalorder %s82, %s83
    %p97 = scmp.eq.s32.totalorder %s37, 3
    %p98 = por %p96, %p97
    %p100 = scmp.ne.s32.totalorder %s83, %s99
    %p101 = scmp.eq.s32.totalorder %s37, 0
    %p102 = por %p100, %p101
    %s104 = sadd.s32 %s103, 1
    %p107 = scmp.eq.s32.totalorder %s31, 3
    %p108 = scmp.ne.s32.totalorder %s103, %s105
    %p109 = scmp.eq.s32.totalorder %s31, 0
    %p110 = por %p108, %p109
    %p111 = scmp.ne.s32.totalorder %s103, %s105
    %p112 = scmp.eq.s32.totalorder %s36, 3
    %p113 = por %p111, %p112
    %p114 = scmp.ne.s32.totalorder %s105, %s106
    %p115 = scmp.eq.s32.totalorder %s36, 0
    %p116 = por %p114, %p115
    %p117 = scmp.ne.s32.totalorder %s105, %s106
    %p118 = scmp.eq.s32.totalorder %s37, 3
    %p119 = por %p117, %p118
    %p121 = scmp.ne.s32.totalorder %s106, %s120
    %p122 = scmp.eq.s32.totalorder %s37, 0
    %p123 = por %p121, %p122
    %s125 = sadd.s32 %s124, 1
    %p128 = scmp.eq.s32.totalorder %s31, 3
    %p129 = scmp.ne.s32.totalorder %s124, %s126
    %p130 = scmp.eq.s32.totalorder %s31, 0
    %p131 = por %p129, %p130
    %p132 = scmp.ne.s32.totalorder %s124, %s126
    %p133 = scmp.eq.s32.totalorder %s36, 3
    %p134 = por %p132, %p133
    %p135 = scmp.ne.s32.totalorder %s126, %s127
    %p136 = scmp.eq.s32.totalorder %s36, 0
    %p137 = por %p135, %p136
    %p138 = scmp.ne.s32.totalorder %s126, %s127
    %p139 = scmp.eq.s32.totalorder %s37, 3
    %p140 = por %p138, %p139
    %p142 = scmp.ne.s32.totalorder %s127, %s141
    %p143 = scmp.eq.s32.totalorder %s37, 0
    %p144 = por %p142, %p143
    %s145 = ssub.s32 %s39, %s46
    %p146 = scmp.eq.s32.totalorder %s145, 0
    %s148 = sadd.s32 %s147, 1
    %s149 = scalar_select %p146, %s147, %s148
    %p152 = pneg %p146
    %p153 = scmp.eq.s32.totalorder %s31, 3
    %p154 = por %p152, %p153
    %p155 = scmp.ne.s32.totalorder %s147, %s150
    %p156 = scmp.eq.s32.totalorder %s31, 0
    %p157 = por %p155, %p156
    %p158 = scmp.ne.s32.totalorder %s147, %s150
    %p159 = scmp.eq.s32.totalorder %s36, 3
    %p160 = por %p158, %p159
    %p161 = scmp.ne.s32.totalorder %s150, %s151
    %p162 = scmp.eq.s32.totalorder %s36, 0
    %p163 = por %p161, %p162
    %p164 = scmp.ne.s32.totalorder %s150, %s151
    %p165 = scmp.eq.s32.totalorder %s37, 3
    %p166 = por %p164, %p165
    %p168 = scmp.ne.s32.totalorder %s151, %s167
    %p169 = scmp.eq.s32.totalorder %s37, 0
    %p170 = por %p168, %p169
    %s171 = ssub.s32 %s39, %s46
    %p172 = scmp.eq.s32.totalorder %s171, 0
    %s174 = sadd.s32 %s173, 1
    %s175 = scalar_select %p172, %s173, %s174
    %p178 = pneg %p172
    %p179 = scmp.eq.s32.totalorder %s31, 3
    %p180 = por %p178, %p179
    %p181 = scmp.ne.s32.totalorder %s173, %s176
    %p182 = scmp.eq.s32.totalorder %s31, 0
    %p183 = por %p181, %p182
    %p184 = scmp.ne.s32.totalorder %s173, %s176
    %p185 = scmp.eq.s32.totalorder %s36, 3
    %p186 = por %p184, %p185
    %p187 = scmp.ne.s32.totalorder %s176, %s177
    %p188 = scmp.eq.s32.totalorder %s36, 0
    %p189 = por %p187, %p188
    %p190 = scmp.ne.s32.totalorder %s176, %s177
    %p191 = scmp.eq.s32.totalorder %s37, 3
    %p192 = por %p190, %p191
    %p194 = scmp.ne.s32.totalorder %s177, %s193
    %p195 = scmp.eq.s32.totalorder %s37, 0
    %p196 = por %p194, %p195
    %s197 = ssub.s32 %s39, %s46
    %p198 = scmp.eq.s32.totalorder %s197, 0
    %s200 = sadd.s32 %s199, 1
    %s201 = scalar_select %p198, %s199, %s200
    %p204 = pneg %p198
    %p205 = scmp.eq.s32.totalorder %s31, 3
    %p206 = por %p204, %p205
    %p207 = scmp.ne.s32.totalorder %s199, %s202
    %p208 = scmp.eq.s32.totalorder %s31, 0
    %p209 = por %p207, %p208
    %p210 = scmp.ne.s32.totalorder %s199, %s202
    %p211 = scmp.eq.s32.totalorder %s36, 3
    %p212 = por %p210, %p211
    %p213 = scmp.ne.s32.totalorder %s202, %s203
    %p214 = scmp.eq.s32.totalorder %s36, 0
    %p215 = por %p213, %p214
    %p216 = scmp.ne.s32.totalorder %s202, %s203
    %p217 = scmp.eq.s32.totalorder %s37, 3
    %p218 = por %p216, %p217
    %p220 = scmp.ne.s32.totalorder %s203, %s219
    %p221 = scmp.eq.s32.totalorder %s37, 0
    %p222 = por %p220, %p221
    %s223 = ssub.s32 %s39, %s46
    %p224 = scmp.eq.s32.totalorder %s223, 0
    %s226 = sadd.s32 %s225, 1
    %s227 = scalar_select %p224, %s225, %s226
    %p230 = pneg %p224
    %p231 = scmp.eq.s32.totalorder %s31, 3
    %p232 = por %p230, %p231
    %p233 = scmp.ne.s32.totalorder %s225, %s228
    %p234 = scmp.eq.s32.totalorder %s31, 0
    %p235 = por %p233, %p234
    %p236 = scmp.ne.s32.totalorder %s225, %s228
    %p237 = scmp.eq.s32.totalorder %s36, 3
    %p238 = por %p236, %p237
    %p239 = scmp.ne.s32.totalorder %s228, %s229
    %p240 = scmp.eq.s32.totalorder %s36, 0
    %p241 = por %p239, %p240
    %p242 = scmp.ne.s32.totalorder %s228, %s229
    %p243 = scmp.eq.s32.totalorder %s37, 3
    %p244 = por %p242, %p243
    %p246 = scmp.ne.s32.totalorder %s229, %s245
    %p247 = scmp.eq.s32.totalorder %s37, 0
    %p248 = por %p246, %p247
    %s249 = ssub.s32 %s39, %s46
    %p250 = scmp.eq.s32.totalorder %s249, 0
    %s252 = sadd.s32 %s251, 1
    %s253 = scalar_select %p250, %s251, %s252
    %p256 = pneg %p250
    %p257 = scmp.eq.s32.totalorder %s31, 3
    %p258 = por %p256, %p257
    %p259 = scmp.ne.s32.totalorder %s251, %s254
    %p260 = scmp.eq.s32.totalorder %s31, 0
    %p261 = por %p259, %p260
    %p262 = scmp.ne.s32.totalorder %s251, %s254
    %p263 = scmp.eq.s32.totalorder %s36, 3
    %p264 = por %p262, %p263
    %p265 = scmp.ne.s32.totalorder %s254, %s255
    %p266 = scmp.eq.s32.totalorder %s36, 0
    %p267 = por %p265, %p266
    %p268 = scmp.ne.s32.totalorder %s254, %s255
    %p269 = scmp.eq.s32.totalorder %s37, 3
    %p270 = por %p268, %p269
    %p272 = scmp.ne.s32.totalorder %s255, %s271
    %p273 = scmp.eq.s32.totalorder %s37, 0
    %p274 = por %p272, %p273
    %s275 = ssub.s32 %s39, %s46
    %p276 = scmp.eq.s32.totalorder %s275, 0
    %s278 = sadd.s32 %s277, 1
    %s279 = scalar_select %p276, %s277, %s278
    %p282 = pneg %p276
    %p283 = scmp.eq.s32.totalorder %s31, 3
    %p284 = por %p282, %p283
    %p285 = scmp.ne.s32.totalorder %s277, %s280
    %p286 = scmp.eq.s32.totalorder %s31, 0
    %p287 = por %p285, %p286
    %p288 = scmp.ne.s32.totalorder %s277, %s280
    %p289 = scmp.eq.s32.totalorder %s36, 3
    %p290 = por %p288, %p289
    %p291 = scmp.ne.s32.totalorder %s280, %s281
    %p292 = scmp.eq.s32.totalorder %s36, 0
    %p293 = por %p291, %p292
    %p294 = scmp.ne.s32.totalorder %s280, %s281
    %p295 = scmp.eq.s32.totalorder %s37, 3
    %p296 = por %p294, %p295
    %p298 = scmp.ne.s32.totalorder %s281, %s297
    %p299 = scmp.eq.s32.totalorder %s37, 0
    %p300 = por %p298, %p299
    %s302 = sadd.s32 %s301, 1
    %p305 = scmp.eq.s32.totalorder %s31, 3
    %p306 = scmp.ne.s32.totalorder %s301, %s303
    %p307 = scmp.eq.s32.totalorder %s31, 0
    %p308 = por %p306, %p307
    %p309 = scmp.ne.s32.totalorder %s301, %s303
    %p310 = scmp.eq.s32.totalorder %s36, 3
    %p311 = por %p309, %p310
    %p312 = scmp.ne.s32.totalorder %s303, %s304
    %p313 = scmp.eq.s32.totalorder %s36, 0
    %p314 = por %p312, %p313
    %p315 = scmp.ne.s32.totalorder %s303, %s304
    %p316 = scmp.eq.s32.totalorder %s37, 3
    %p317 = por %p315, %p316
    %p319 = scmp.ne.s32.totalorder %s304, %s318
    %p320 = scmp.eq.s32.totalorder %s37, 0
    %p321 = por %p319, %p320
    %s323 = sadd.s32 %s322, 1
    %p326 = scmp.eq.s32.totalorder %s31, 3
    %p327 = scmp.ne.s32.totalorder %s322, %s324
    %p328 = scmp.eq.s32.totalorder %s31, 0
    %p329 = por %p327, %p328
    %p330 = scmp.ne.s32.totalorder %s322, %s324
    %p331 = scmp.eq.s32.totalorder %s36, 3
    %p332 = por %p330, %p331
    %p333 = scmp.ne.s32.totalorder %s324, %s325
    %p334 = scmp.eq.s32.totalorder %s36, 0
    %p335 = por %p333, %p334
    %p336 = scmp.ne.s32.totalorder %s324, %s325
    %p337 = scmp.eq.s32.totalorder %s37, 3
    %p338 = por %p336, %p337
    %p340 = scmp.ne.s32.totalorder %s325, %s339
    %p341 = scmp.eq.s32.totalorder %s37, 0
    %p342 = por %p340, %p341
    %s344 = sadd.s32 %s343, 1
    %p347 = scmp.eq.s32.totalorder %s31, 3
    %p348 = scmp.ne.s32.totalorder %s343, %s345
    %p349 = scmp.eq.s32.totalorder %s31, 0
    %p350 = por %p348, %p349
    %p351 = scmp.ne.s32.totalorder %s343, %s345
    %p352 = scmp.eq.s32.totalorder %s36, 3
    %p353 = por %p351, %p352
    %p354 = scmp.ne.s32.totalorder %s345, %s346
    %p355 = scmp.eq.s32.totalorder %s36, 0
    %p356 = por %p354, %p355
    %p357 = scmp.ne.s32.totalorder %s345, %s346
    %p358 = scmp.eq.s32.totalorder %s37, 3
    %p359 = por %p357, %p358
    %p361 = scmp.ne.s32.totalorder %s346, %s360
    %p362 = scmp.eq.s32.totalorder %s37, 0
    %p363 = por %p361, %p362
    %s364 = ssub.s32 %s38, %s50
    %p365 = scmp.eq.s32.totalorder %s364, 0
    %s367 = sadd.s32 %s366, 1
    %s368 = scalar_select %p365, %s366, %s367
    %p371 = pneg %p365
    %p372 = scmp.eq.s32.totalorder %s31, 3
    %p373 = por %p371, %p372
    %p374 = scmp.ne.s32.totalorder %s366, %s369
    %p375 = scmp.eq.s32.totalorder %s31, 0
    %p376 = por %p374, %p375
    %p377 = scmp.ne.s32.totalorder %s366, %s369
    %p378 = scmp.eq.s32.totalorder %s36, 3
    %p379 = por %p377, %p378
    %p380 = scmp.ne.s32.totalorder %s369, %s370
    %p381 = scmp.eq.s32.totalorder %s36, 0
    %p382 = por %p380, %p381
    %p383 = scmp.ne.s32.totalorder %s369, %s370
    %p384 = scmp.eq.s32.totalorder %s37, 3
    %p385 = por %p383, %p384
    %p387 = scmp.ne.s32.totalorder %s370, %s386
    %p388 = scmp.eq.s32.totalorder %s37, 0
    %p389 = por %p387, %p388
    %p390 = scmp.le.s32.totalorder 1, %s31
    %p391 = scmp.lt.s32.totalorder %s31, 5
    %p392 = pnand %p390, %p391
    %p393 = pneg %p392
    // Predicated region
    $region9: #{_lambda_.1} parent=5 // pred_check
      _
    $region10: #{_lambda_.1} parent=5 // pred_check_branch
      %395 = sbr.rel (%p392) target = $region12
    $region11: #{_lambda_.1} parent=5 // pred_region
      %s396 = ssub.s32 %s31, 1
      // Predicated region
      $region13: #{_lambda_.1} parent=11 // pred_check
        %p397 = pneg %p116
      $region14: #{_lambda_.1} parent=11 // pred_check_branch
        %399 = sbr.rel (%p397) target = $region16
      $region15: #{_lambda_.1} parent=11 // pred_region
        _
      $region16: #{_lambda_.1} parent=11 // pred_fallthru
        _
      // Predicated region
      $region17: #{_lambda_.1} parent=11 // pred_check
        %p400 = pneg %p137
      $region18: #{_lambda_.1} parent=11 // pred_check_branch
        %402 = sbr.rel (%p400) target = $region20
      $region19: #{_lambda_.1} parent=11 // pred_region
        _
      $region20: #{_lambda_.1} parent=11 // pred_fallthru
        _
      // Predicated region
      $region21: #{_lambda_.1} parent=11 // pred_check
        %p403 = pneg %p314
      $region22: #{_lambda_.1} parent=11 // pred_check_branch
        %405 = sbr.rel (%p403) target = $region24
      $region23: #{_lambda_.1} parent=11 // pred_region
        _
      $region24: #{_lambda_.1} parent=11 // pred_fallthru
        _
      // Predicated region
      $region25: #{_lambda_.1} parent=11 // pred_check
        %p406 = pneg %p335
      $region26: #{_lambda_.1} parent=11 // pred_check_branch
        %408 = sbr.rel (%p406) target = $region28
      $region27: #{_lambda_.1} parent=11 // pred_region
        _
      $region28: #{_lambda_.1} parent=11 // pred_fallthru
        _
      // Predicated region
      $region29: #{_lambda_.1} parent=11 // pred_check
        %p409 = pneg %p356
      $region30: #{_lambda_.1} parent=11 // pred_check_branch
        %411 = sbr.rel (%p409) target = $region32
      $region31: #{_lambda_.1} parent=11 // pred_region
        _
      $region32: #{_lambda_.1} parent=11 // pred_fallthru
        _
    $region12: #{_lambda_.1} parent=5 // pred_fallthru
      _
    %p412 = scmp.lt.s32.totalorder %s31, 4
    // Predicated region
    $region33: #{_lambda_.1} parent=5 // pred_check
      %p413 = pneg %p412
    $region34: #{_lambda_.1} parent=5 // pred_check_branch
      %415 = sbr.rel (%p413) target = $region36
    $region35: #{_lambda_.1} parent=5 // pred_region
      // Predicated region
      $region37: #{_lambda_.1} parent=35 // pred_check
        %p416 = pneg %p63
      $region38: #{_lambda_.1} parent=35 // pred_check_branch
        %418 = sbr.rel (%p416) target = $region40
      $region39: #{_lambda_.1} parent=35 // pred_region
        %p419 = scmp.lt.s32.totalorder %s38, 1
        %s420 = scalar_select %p419, %s38, 1
        %s421 = smul.addr %s420, 8
        %s422 = scalar_lea.vmem %s2, %s421
      $region40: #{_lambda_.1} parent=35 // pred_fallthru
        _
      // Predicated region
      $region41: #{_lambda_.1} parent=35 // pred_check
        %p423 = pneg %p89
      $region42: #{_lambda_.1} parent=35 // pred_check_branch
        %425 = sbr.rel (%p423) target = $region44
      $region43: #{_lambda_.1} parent=35 // pred_region
        %p426 = scmp.lt.s32.totalorder %s38, 1
        %s427 = scalar_select %p426, %s38, 1
        %s428 = smul.addr %s427, 8
        %s429 = scalar_lea.vmem %s3, %s428
      $region44: #{_lambda_.1} parent=35 // pred_fallthru
        _
      // Predicated region
      $region45: #{_lambda_.1} parent=35 // pred_check
        %p430 = pneg %p157
      $region46: #{_lambda_.1} parent=35 // pred_check_branch
        %432 = sbr.rel (%p430) target = $region48
      $region47: #{_lambda_.1} parent=35 // pred_region
        %p433 = scmp.lt.s32.totalorder %s39, 1
        %s434 = scalar_select %p433, %s39, 1
        %s435 = smul.addr %s434, 8
        %s436 = scalar_lea.vmem %s6, %s435
      $region48: #{_lambda_.1} parent=35 // pred_fallthru
        _
      // Predicated region
      $region49: #{_lambda_.1} parent=35 // pred_check
        %p437 = pneg %p183
      $region50: #{_lambda_.1} parent=35 // pred_check_branch
        %439 = sbr.rel (%p437) target = $region52
      $region51: #{_lambda_.1} parent=35 // pred_region
        %p440 = scmp.lt.s32.totalorder %s39, 1
        %s441 = scalar_select %p440, %s39, 1
        %s442 = smul.addr %s441, 8
        %s443 = scalar_lea.vmem %s7, %s442
      $region52: #{_lambda_.1} parent=35 // pred_fallthru
        _
      // Predicated region
      $region53: #{_lambda_.1} parent=35 // pred_check
        %p444 = pneg %p209
      $region54: #{_lambda_.1} parent=35 // pred_check_branch
        %446 = sbr.rel (%p444) target = $region56
      $region55: #{_lambda_.1} parent=35 // pred_region
        %p447 = scmp.lt.s32.totalorder %s39, 1
        %s448 = scalar_select %p447, %s39, 1
        %s449 = smul.addr %s448, 4
        %s450 = smul.addr %s449, 4
        %s451 = scalar_lea.vmem %s8, %s450
      $region56: #{_lambda_.1} parent=35 // pred_fallthru
        _
      // Predicated region
      $region57: #{_lambda_.1} parent=35 // pred_check
        %p452 = pneg %p235
      $region58: #{_lambda_.1} parent=35 // pred_check_branch
        %454 = sbr.rel (%p452) target = $region60
      $region59: #{_lambda_.1} parent=35 // pred_region
        %p455 = scmp.lt.s32.totalorder %s39, 1
        %s456 = scalar_select %p455, %s39, 1
        %s457 = smul.addr %s456, 4
        %s458 = smul.addr %s457, 4
        %s459 = scalar_lea.vmem %s9, %s458
      $region60: #{_lambda_.1} parent=35 // pred_fallthru
        _
      // Predicated region
      $region61: #{_lambda_.1} parent=35 // pred_check
        %p460 = pneg %p261
      $region62: #{_lambda_.1} parent=35 // pred_check_branch
        %462 = sbr.rel (%p460) target = $region64
      $region63: #{_lambda_.1} parent=35 // pred_region
        %p463 = scmp.lt.s32.totalorder %s39, 1
        %s464 = scalar_select %p463, %s39, 1
        %s465 = smul.addr %s464, 4
        %s466 = smul.addr %s465, 4
        %s467 = scalar_lea.vmem %s10, %s466
      $region64: #{_lambda_.1} parent=35 // pred_fallthru
        _
      // Predicated region
      $region65: #{_lambda_.1} parent=35 // pred_check
        %p468 = pneg %p287
      $region66: #{_lambda_.1} parent=35 // pred_check_branch
        %470 = sbr.rel (%p468) target = $region68
      $region67: #{_lambda_.1} parent=35 // pred_region
        %p471 = scmp.lt.s32.totalorder %s39, 1
        %s472 = scalar_select %p471, %s39, 1
        %s473 = smul.addr %s472, 8
        %s474 = smul.addr %s473, 4
        %s475 = scalar_lea.vmem %s11, %s474
      $region68: #{_lambda_.1} parent=35 // pred_fallthru
        _
    $region36: #{_lambda_.1} parent=5 // pred_fallthru
      _
    %p476 = scmp.le.s32.totalorder 1, %s31
    %p477 = scmp.lt.s32.totalorder %s31, 5
    %p478 = pnand %p476, %p477
    %p479 = pneg %p478
    // Predicated region
    $region69: #{_lambda_.1} parent=5 // pred_check
      _
    $region70: #{_lambda_.1} parent=5 // pred_check_branch
      %481 = sbr.rel (%p478) target = $region72
    $region71: #{_lambda_.1} parent=5 // pred_region
      %s482 = ssub.s32 %s31, 1
      %p483 = scmp.lt.s32.totalorder %s40, 1
      %s484 = scalar_select %p483, %s40, 1
      %s485 = smul.addr %s484, 8
      %s486 = scalar_lea.vmem %s2, %s485
      %p487 = pneg %p69
      %p488 = pneg %p66
      %p489 = scmp.lt.s32.totalorder %s40, 1
      %s490 = scalar_select %p489, %s40, 1
      %s491 = smul.addr %s490, 8
      %s492 = scalar_lea.vmem %s3, %s491
      %p493 = pneg %p95
      %p494 = pneg %p92
      %p495 = pneg %p116
      %p496 = pneg %p113
      %p497 = pneg %p137
      %p498 = pneg %p134
      %p499 = scmp.lt.s32.totalorder %s41, 1
      %s500 = scalar_select %p499, %s41, 1
      %s501 = smul.addr %s500, 8
      %s502 = scalar_lea.vmem %s6, %s501
      %p503 = pneg %p163
      %p504 = pneg %p160
      %p505 = scmp.lt.s32.totalorder %s41, 1
      %s506 = scalar_select %p505, %s41, 1
      %s507 = smul.addr %s506, 8
      %s508 = scalar_lea.vmem %s7, %s507
      %p509 = pneg %p189
      %p510 = pneg %p186
      %p511 = scmp.lt.s32.totalorder %s41, 1
      %s512 = scalar_select %p511, %s41, 1
      %s513 = smul.addr %s512, 4
      %s514 = smul.addr %s513, 4
      %s515 = scalar_lea.vmem %s8, %s514
      %p516 = pneg %p215
      %p517 = pneg %p212
      %p518 = scmp.lt.s32.totalorder %s41, 1
      %s519 = scalar_select %p518, %s41, 1
      %s520 = smul.addr %s519, 4
      %s521 = smul.addr %s520, 4
      %s522 = scalar_lea.vmem %s9, %s521
      %p523 = pneg %p241
      %p524 = pneg %p238
      %p525 = scmp.lt.s32.totalorder %s41, 1
      %s526 = scalar_select %p525, %s41, 1
      %s527 = smul.addr %s526, 4
      %s528 = smul.addr %s527, 4
      %s529 = scalar_lea.vmem %s10, %s528
      %p530 = pneg %p267
      %p531 = pneg %p264
      %p532 = scmp.lt.s32.totalorder %s41, 1
      %s533 = scalar_select %p532, %s41, 1
      %s534 = smul.addr %s533, 8
      %s535 = smul.addr %s534, 4
      %s536 = scalar_lea.vmem %s11, %s535
      %p537 = pneg %p293
      %p538 = pneg %p290
      %p539 = pneg %p314
      %p540 = pneg %p311
      %p541 = pneg %p335
      %p542 = pneg %p332
      %p543 = pneg %p356
      %p544 = pneg %p353
      %p545 = pneg %p382
      %p546 = pneg %p379
      %p547 = scmp.lt.s32.totalorder %s40, 1
      %s548 = scalar_select %p547, %s40, 1
      %s549 = smul.addr %s548, 8
      %s550 = scalar_lea.vmem %s15, %s549
      %p551 = scmp.lt.s32.totalorder %s40, 1
      %s552 = scalar_select %p551, %s40, 1
      %s553 = smul.addr %s552, 8
      %s554 = scalar_lea.vmem %s2, %s553
      %p555 = scmp.lt.s32.totalorder %s40, 1
      %s556 = scalar_select %p555, %s40, 1
      %s557 = smul.addr %s556, 8
      %s558 = scalar_lea.vmem %s3, %s557
      %p559 = scmp.lt.s32.totalorder %s41, 1
      %s560 = scalar_select %p559, %s41, 1
      %s561 = smul.addr %s560, 8
      %s562 = scalar_lea.vmem %s6, %s561
      %p563 = scmp.lt.s32.totalorder %s41, 1
      %s564 = scalar_select %p563, %s41, 1
      %s565 = smul.addr %s564, 8
      %s566 = scalar_lea.vmem %s7, %s565
      %p567 = scmp.lt.s32.totalorder %s41, 1
      %s568 = scalar_select %p567, %s41, 1
      %s569 = smul.addr %s568, 4
      %s570 = smul.addr %s569, 4
      %s571 = scalar_lea.vmem %s8, %s570
      %p572 = scmp.lt.s32.totalorder %s41, 1
      %s573 = scalar_select %p572, %s41, 1
      %s574 = smul.addr %s573, 4
      %s575 = smul.addr %s574, 4
      %s576 = scalar_lea.vmem %s9, %s575
      %p577 = scmp.lt.s32.totalorder %s41, 1
      %s578 = scalar_select %p577, %s41, 1
      %s579 = smul.addr %s578, 4
      %s580 = smul.addr %s579, 4
      %s581 = scalar_lea.vmem %s10, %s580
      %p582 = scmp.lt.s32.totalorder %s41, 1
      %s583 = scalar_select %p582, %s41, 1
      %s584 = smul.addr %s583, 8
      %s585 = smul.addr %s584, 4
      %s586 = scalar_lea.vmem %s11, %s585
      %p587 = scmp.lt.s32.totalorder %s40, 1
      %s588 = scalar_select %p587, %s40, 1
      %s589 = smul.addr %s588, 8
      %s590 = scalar_lea.vmem %s15, %s589
      %p592 = scmp.eq.s32.totalorder %s41, 0
      // Predicated region
      $region73: #{_lambda_.1} parent=71 // pred_check
        %p593 = pneg %p592
      $region74: #{_lambda_.1} parent=71 // pred_check_branch
        %595 = sbr.rel (%p593) target = $region76
      $region75: #{_lambda_.1} parent=71 // pred_region
        %v596 = vld [vmem:[%s554] sm:$0xff]
        %v597 = vpack.c.bf16 %v596, %v596
        %v598 = vld [vmem:[%s4] sm:$0xf]
        %v599 = vld [vmem:[%s5] sm:$0x1]
        %v600 = vlaneseq
        %v601 = vshrl.u32 %v600, 7
        %v602 = vsub.s32 0, %v601
        %v603 = vrot.slane %v599, %v602
        %vm604 = vcmask 64512
        %v606 = vsel %vm604, %v597, 0
        %vm608 = vcmask 1043456
        %v610 = vsel %vm608, %v598, 0
        %612 = vmatprep.subr.bf16.mxu0 0
        %613 = vmatpush1.bf16.msra.mxu0 %v610
        %614 = vmatprep.subr.bf16.mxu0 0
        %615 = vmatpush1.bf16.msra.mxu0 0
        %616 = vmatprep.subr.bf16.mxu0 0
        %617 = vmatpush1.bf16.msra.mxu0 0
        %618 = vmatprep.subr.bf16.mxu0 0
        %619 = vmatpush1.bf16.msra.mxu0 0
        %620 = vmatprep.subr.bf16.mxu0 0
        %621 = vmatpush1.bf16.msra.mxu0 0
        %622 = vmatprep.subr.bf16.mxu0 0
        %623 = vmatpush1.bf16.msra.mxu0 0
        %624 = vmatprep.subr.bf16.mxu0 0
        %625 = vmatpush1.bf16.msra.mxu0 0
        %626 = vmatprep.subr.bf16.mxu0 0
        %627 = vmatpush1.bf16.msra.mxu0 0
        %628 = vmatprep.subr.bf16.mxu0 0
        %629 = vmatpush1.bf16.msra.mxu0 0
        %630 = vmatprep.subr.bf16.mxu0 0
        %631 = vmatpush1.bf16.msra.mxu0 0
        %632 = vmatprep.subr.bf16.mxu0 0
        %633 = vmatpush1.bf16.msra.mxu0 0
        %634 = vmatprep.subr.bf16.mxu0 0
        %635 = vmatpush1.bf16.msra.mxu0 0
        %636 = vmatprep.subr.bf16.mxu0 0
        %637 = vmatpush1.bf16.msra.mxu0 0
        %638 = vmatprep.subr.bf16.mxu0 0
        %639 = vmatpush1.bf16.msra.mxu0 0
        %640 = vmatprep.subr.bf16.mxu0 0
        %641 = vmatpush1.bf16.msra.mxu0 0
        %642 = vmatprep.subr.bf16.mxu0 0
        %643 = vmatpush1.bf16.msra.mxu0 0
        %644 = vmatprep.mubr.bf16.mxu0 0
        %645 = vmatmul.mubr.bf16.gmra.mrb[0].mxu0 %v606
        %v646 = vpop.f32.mrb[0].mxu0
        %v647 = vadd.f32 %v603, %v646
        %v648 = vpop.f32.mrb[0].mxu0
        %v649 = vpop.f32.mrb[0].mxu0
        %v650 = vpop.f32.mrb[0].mxu0
        %651 = vdwg.mxu0
        %v652 = vld [vmem:[%s5 + $0x1] sm:$0xff]
        %v653 = vadd.f32 %v647, %v652
        %vm654 = vcmask 261120
        %655 = vst.msk [vmem:[#allocation2] sm:$0xff] %vm654, %v653
        %s656 = sld [smem:[#allocation6 + %s40]]
        %s657 = sld [smem:[#allocation7 + %s40]]
        %v658 = vlaneseq
        %v659 = vshrl.u32 %v658, 7
        %v660 = vlaneseq
        %v661 = vand.u32 %v660, 127
        %vm662 = vcmp.le.s32.totalorder %v661, %v659
        %v663 = vstv %s656
        %vm664 = vcmp.lt.s32.totalorder %v661, %v663
        %vm665 = vmand %vm662, %vm664
        %v666 = vsel %vm665, 0.0, -1e+18
        %667 = vst.msk [vmem:[#allocation3] sm:$0xff] %vm604, %v666
        %v668 = vstv %s657
        %vm669 = vcmp.lt.s32.totalorder %v661, %v668
        %v670 = vsel %vm669, 0.0, -1e+18
        %vm671 = vcmask 48128
        %672 = vst.msk [vmem:[#allocation4] sm:$0xff] %vm671, %v670
      $region76: #{_lambda_.1} parent=71 // pred_fallthru
        _
      %v673 = vld [vmem:[%s562] sm:$0x3f]
      %v674 = vld [vmem:[%s566] sm:$0xff]
      %v675 = vld [vmem:[%s571] sm:$0xf]
      %v676 = vld [vmem:[%s571 + $0x4] sm:$0xf]
      %v677 = vld [vmem:[%s571 + $0x8] sm:$0xf]
      %v678 = vld [vmem:[%s571 + $0xc] sm:$0xf]
      %v679 = vld [vmem:[%s576] sm:$0xf]
      %v680 = vld [vmem:[%s576 + $0x4] sm:$0xf]
      %v681 = vld [vmem:[%s576 + $0x8] sm:$0xf]
      %v682 = vld [vmem:[%s576 + $0xc] sm:$0xf]
      %v683 = vld [vmem:[%s581] sm:$0xf]
      %v684 = vld [vmem:[%s581 + $0x4] sm:$0xf]
      %v685 = vld [vmem:[%s581 + $0x8] sm:$0xf]
      %v686 = vld [vmem:[%s581 + $0xc] sm:$0xf]
      %v687 = vld [vmem:[%s586] sm:$0xf]
      %v688 = vld [vmem:[%s586 + $0x4] sm:$0xf]
      %v689 = vld [vmem:[%s586 + $0x8] sm:$0xf]
      %v690 = vld [vmem:[%s586 + $0xc] sm:$0xf]
      %v691 = vld [vmem:[%s586 + $0x10] sm:$0xf]
      %v692 = vld [vmem:[%s586 + $0x14] sm:$0xf]
      %v693 = vld [vmem:[%s586 + $0x18] sm:$0xf]
      %v694 = vld [vmem:[%s586 + $0x1c] sm:$0xf]
      %v695 = vld [vmem:[#allocation2] sm:$0xff]
      %v696 = vld [vmem:[%s558] sm:$0x3f]
      %vm697 = vcmask 261120
      %v698 = vsel %vm697, %v695, 0.0
      %699 = vadd.xlane.f32.xlu0 %v698
      %v700 = vpop.xlane.xlu0 %699
      %v701 = vrcp.pop 32.0
      %v702 = vmul.f32 %v700, %v701
      %v703 = vsub.f32 %v695, %v702
      %v704 = vmul.f32 %v703, %v703
      %v705 = vsel %vm697, %v704, 0.0
      %706 = vadd.xlane.f32.xlu0 %v705
      %v707 = vpop.xlane.xlu0 %706
      %v708 = vmul.f32 %v707, %v701
      %v709 = vadd.f32 %v708, 1e-06
      %v710 = vrsqrt.pop %v709
      %v711 = vmul.f32 %v703, %v710
      %v712 = vlaneseq
      %v713 = vshrl.u32 %v712, 7
      %v714 = vsub.s32 0, %v713
      %v715 = vrot.slane %v673, %v714
      %v716 = vmul.f32 %v711, %v715
      %v717 = vlaneseq
      %v718 = vshrl.u32 %v717, 7
      %v719 = vsub.s32 1, %v718
      %v720 = vrot.slane %v673, %v719
      %v721 = vadd.f32 %v716, %v720
      %v722 = vpack.c.bf16 %v721, %v721
      %v723 = vlaneseq
      %v724 = vshrl.u32 %v723, 7
      %v725 = vsub.s32 0, %v724
      %v726 = vrot.slane %v674, %v725
      %v731 = vunpack.c.l.b16 %v675
      %v732 = vunpack.c.l.b16 %v676
      %v733 = vunpack.c.l.b16 %v677
      %v734 = vunpack.c.l.b16 %v678
      %v735 = vpack.c.b16 %v732, %v731
      %v736 = vpack.c.b16 %v734, %v733
      %v740 = vsel %vm697, %v722, 0
      %742 = vmatprep.subr.bf16.mxu0 0
      %743 = vmatpush1.bf16.msra.mxu0 %v735
      %744 = vmatprep.subr.bf16.mxu0 0
      %745 = vmatpush1.bf16.msra.mxu0 %v736
      %746 = vmatprep.subr.bf16.mxu0 0
      %747 = vmatpush1.bf16.msra.mxu0 0
      %748 = vmatprep.subr.bf16.mxu0 0
      %749 = vmatpush1.bf16.msra.mxu0 0
      %750 = vmatprep.subr.bf16.mxu0 0
      %751 = vmatpush1.bf16.msra.mxu0 0
      %752 = vmatprep.subr.bf16.mxu0 0
      %753 = vmatpush1.bf16.msra.mxu0 0
      %754 = vmatprep.subr.bf16.mxu0 0
      %755 = vmatpush1.bf16.msra.mxu0 0
      %756 = vmatprep.subr.bf16.mxu0 0
      %757 = vmatpush1.bf16.msra.mxu0 0
      %758 = vmatprep.subr.bf16.mxu0 0
      %759 = vmatpush1.bf16.msra.mxu0 0
      %760 = vmatprep.subr.bf16.mxu0 0
      %761 = vmatpush1.bf16.msra.mxu0 0
      %762 = vmatprep.subr.bf16.mxu0 0
      %763 = vmatpush1.bf16.msra.mxu0 0
      %764 = vmatprep.subr.bf16.mxu0 0
      %765 = vmatpush1.bf16.msra.mxu0 0
      %766 = vmatprep.subr.bf16.mxu0 0
      %767 = vmatpush1.bf16.msra.mxu0 0
      %768 = vmatprep.subr.bf16.mxu0 0
      %769 = vmatpush1.bf16.msra.mxu0 0
      %770 = vmatprep.subr.bf16.mxu0 0
      %771 = vmatpush1.bf16.msra.mxu0 0
      %772 = vmatprep.subr.bf16.mxu0 0
      %773 = vmatpush1.bf16.msra.mxu0 0
      %774 = vmatprep.mubr.bf16.mxu0 0
      %775 = vmatmul.mubr.bf16.gmra.mrb[0].mxu0 %v740
      %v776 = vpop.f32.mrb[0].mxu0
      %v777 = vadd.f32 %v726, %v776
      %v778 = vpop.f32.mrb[0].mxu0
      %v779 = vpop.f32.mrb[0].mxu0
      %v780 = vpop.f32.mrb[0].mxu0
      %781 = vdwg.mxu0
      %v782 = vld [vmem:[#allocation3] sm:$0xff]
      %784 = vrot.lane.b32.xlu0 %v777, 120
      %v785 = vpop.permute.xlu0 %784
      %787 = vrot.lane.b32.xlu0 %v777, 112
      %v788 = vpop.permute.xlu0 %787
      %790 = vrot.lane.b32.xlu0 %v777, 104
      %v791 = vpop.permute.xlu0 %790
      %v793 = vpack.c.bf16 %v777, %v777
      %v794 = vpack.c.bf16 %v785, %v785
      %v795 = vpack.c.bf16 %v788, %v788
      %v796 = vpack.c.bf16 %v791, %v791
      %798 = vrot.lane.b32.xlu0 %v793, 96
      %v799 = vpop.permute.xlu0 %798
      %vm800 = vcmask 64512
      %v802 = vsel %vm800, %v793, 0
      %v805 = vsel %vm800, %v799, 0
      %807 = vmatprep.subr.bf16.mxu0 0
      %808 = vmatpush1.bf16.xpose.msra.mxu0 %v805
      %809 = vmatprep.subr.bf16.mxu0 0
      %810 = vmatpush1.bf16.xpose.msra.mxu0 0
      %811 = vmatprep.subr.bf16.mxu0 0
      %812 = vmatpush1.bf16.xpose.msra.mxu0 0
      %813 = vmatprep.subr.bf16.mxu0 0
      %814 = vmatpush1.bf16.xpose.msra.mxu0 0
      %815 = vmatprep.subr.bf16.mxu0 0
      %816 = vmatpush1.bf16.xpose.msra.mxu0 0
      %817 = vmatprep.subr.bf16.mxu0 0
      %818 = vmatpush1.bf16.xpose.msra.mxu0 0
      %819 = vmatprep.subr.bf16.mxu0 0
      %820 = vmatpush1.bf16.xpose.msra.mxu0 0
      %821 = vmatprep.subr.bf16.mxu0 0
      %822 = vmatpush1.bf16.xpose.msra.mxu0 0
      %823 = vmatprep.subr.bf16.mxu0 0
      %824 = vmatpush1.bf16.xpose.msra.mxu0 0
      %825 = vmatprep.subr.bf16.mxu0 0
      %826 = vmatpush1.bf16.xpose.msra.mxu0 0
      %827 = vmatprep.subr.bf16.mxu0 0
      %828 = vmatpush1.bf16.xpose.msra.mxu0 0
      %829 = vmatprep.subr.bf16.mxu0 0
      %830 = vmatpush1.bf16.xpose.msra.mxu0 0
      %831 = vmatprep.subr.bf16.mxu0 0
      %832 = vmatpush1.bf16.xpose.msra.mxu0 0
      %833 = vmatprep.subr.bf16.mxu0 0
      %834 = vmatpush1.bf16.xpose.msra.mxu0 0
      %835 = vmatprep.subr.bf16.mxu0 0
      %836 = vmatpush1.bf16.xpose.msra.mxu0 0
      %837 = vmatprep.subr.bf16.mxu0 0
      %838 = vmatpush1.bf16.xpose.msra.mxu0 0
      %839 = vmatprep.mubr.bf16.mxu0 0
      %840 = vmatmul.mubr.bf16.gmra.mrb[0].mxu0 %v802
      %v841 = vpop.f32.mrb[0].mxu0
      %v842 = vadd.f32 %v782, %v841
      %v843 = vpop.f32.mrb[0].mxu0
      %v844 = vpop.f32.mrb[0].mxu0
      %v845 = vpop.f32.mrb[0].mxu0
      %846 = vdwg.mxu0
      %848 = vrot.lane.b32.xlu0 %v794, 96
      %v849 = vpop.permute.xlu0 %848
      %v851 = vsel %vm800, %v794, 0
      %v854 = vsel %vm800, %v849, 0
      %856 = vmatprep.subr.bf16.mxu0 0
      %857 = vmatpush1.bf16.xpose.msra.mxu0 %v854
      %858 = vmatprep.subr.bf16.mxu0 0
      %859 = vmatpush1.bf16.xpose.msra.mxu0 0
      %860 = vmatprep.subr.bf16.mxu0 0
      %861 = vmatpush1.bf16.xpose.msra.mxu0 0
      %862 = vmatprep.subr.bf16.mxu0 0
      %863 = vmatpush1.bf16.xpose.msra.mxu0 0
      %864 = vmatprep.subr.bf16.mxu0 0
      %865 = vmatpush1.bf16.xpose.msra.mxu0 0
      %866 = vmatprep.subr.bf16.mxu0 0
      %867 = vmatpush1.bf16.xpose.msra.mxu0 0
      %868 = vmatprep.subr.bf16.mxu0 0
      %869 = vmatpush1.bf16.xpose.msra.mxu0 0
      %870 = vmatprep.subr.bf16.mxu0 0
      %871 = vmatpush1.bf16.xpose.msra.mxu0 0
      %872 = vmatprep.subr.bf16.mxu0 0
      %873 = vmatpush1.bf16.xpose.msra.mxu0 0
      %874 = vmatprep.subr.bf16.mxu0 0
      %875 = vmatpush1.bf16.xpose.msra.mxu0 0
      %876 = vmatprep.subr.bf16.mxu0 0
      %877 = vmatpush1.bf16.xpose.msra.mxu0 0
      %878 = vmatprep.subr.bf16.mxu0 0
      %879 = vmatpush1.bf16.xpose.msra.mxu0 0
      %880 = vmatprep.subr.bf16.mxu0 0
      %881 = vmatpush1.bf16.xpose.msra.mxu0 0
      %882 = vmatprep.subr.bf16.mxu0 0
      %883 = vmatpush1.bf16.xpose.msra.mxu0 0
      %884 = vmatprep.subr.bf16.mxu0 0
      %885 = vmatpush1.bf16.xpose.msra.mxu0 0
      %886 = vmatprep.subr.bf16.mxu0 0
      %887 = vmatpush1.bf16.xpose.msra.mxu0 0
      %888 = vmatprep.mubr.bf16.mxu0 0
      %889 = vmatmul.mubr.bf16.gmra.mrb[0].mxu0 %v851
      %v890 = vpop.f32.mrb[0].mxu0
      %v891 = vadd.f32 %v782, %v890
      %v892 = vpop.f32.mrb[0].mxu0
      %v893 = vpop.f32.mrb[0].mxu0
      %v894 = vpop.f32.mrb[0].mxu0
      %895 = vdwg.mxu0
      %897 = vrot.lane.b32.xlu0 %v795, 96
      %v898 = vpop.permute.xlu0 %897
      %v900 = vsel %vm800, %v795, 0
      %v903 = vsel %vm800, %v898, 0
      %905 = vmatprep.subr.bf16.mxu0 0
      %906 = vmatpush1.bf16.xpose.msra.mxu0 %v903
      %907 = vmatprep.subr.bf16.mxu0 0
      %908 = vmatpush1.bf16.xpose.msra.mxu0 0
      %909 = vmatprep.subr.bf16.mxu0 0
      %910 = vmatpush1.bf16.xpose.msra.mxu0 0
      %911 = vmatprep.subr.bf16.mxu0 0
      %912 = vmatpush1.bf16.xpose.msra.mxu0 0
      %913 = vmatprep.subr.bf16.mxu0 0
      %914 = vmatpush1.bf16.xpose.msra.mxu0 0
      %915 = vmatprep.subr.bf16.mxu0 0
      %916 = vmatpush1.bf16.xpose.msra.mxu0 0
      %917 = vmatprep.subr.bf16.mxu0 0
      %918 = vmatpush1.bf16.xpose.msra.mxu0 0
      %919 = vmatprep.subr.bf16.mxu0 0
      %920 = vmatpush1.bf16.xpose.msra.mxu0 0
      %921 = vmatprep.subr.bf16.mxu0 0
      %922 = vmatpush1.bf16.xpose.msra.mxu0 0
      %923 = vmatprep.subr.bf16.mxu0 0
      %924 = vmatpush1.bf16.xpose.msra.mxu0 0
      %925 = vmatprep.subr.bf16.mxu0 0
      %926 = vmatpush1.bf16.xpose.msra.mxu0 0
      %927 = vmatprep.subr.bf16.mxu0 0
      %928 = vmatpush1.bf16.xpose.msra.mxu0 0
      %929 = vmatprep.subr.bf16.mxu0 0
      %930 = vmatpush1.bf16.xpose.msra.mxu0 0
      %931 = vmatprep.subr.bf16.mxu0 0
      %932 = vmatpush1.bf16.xpose.msra.mxu0 0
      %933 = vmatprep.subr.bf16.mxu0 0
      %934 = vmatpush1.bf16.xpose.msra.mxu0 0
      %935 = vmatprep.subr.bf16.mxu0 0
      %936 = vmatpush1.bf16.xpose.msra.mxu0 0
      %937 = vmatprep.mubr.bf16.mxu0 0
      %938 = vmatmul.mubr.bf16.gmra.mrb[0].mxu0 %v900
      %v939 = vpop.f32.mrb[0].mxu0
      %v940 = vadd.f32 %v782, %v939
      %v941 = vpop.f32.mrb[0].mxu0
      %v942 = vpop.f32.mrb[0].mxu0
      %v943 = vpop.f32.mrb[0].mxu0
      %944 = vdwg.mxu0
      %946 = vrot.lane.b32.xlu0 %v796, 96
      %v947 = vpop.permute.xlu0 %946
      %v949 = vsel %vm800, %v796, 0
      %v952 = vsel %vm800, %v947, 0
      %954 = vmatprep.subr.bf16.mxu0 0
      %955 = vmatpush1.bf16.xpose.msra.mxu0 %v952
      %956 = vmatprep.subr.bf16.mxu0 0
      %957 = vmatpush1.bf16.xpose.msra.mxu0 0
      %958 = vmatprep.subr.bf16.mxu0 0
      %959 = vmatpush1.bf16.xpose.msra.mxu0 0
      %960 = vmatprep.subr.bf16.mxu0 0
      %961 = vmatpush1.bf16.xpose.msra.mxu0 0
      %962 = vmatprep.subr.bf16.mxu0 0
      %963 = vmatpush1.bf16.xpose.msra.mxu0 0
      %964 = vmatprep.subr.bf16.mxu0 0
      %965 = vmatpush1.bf16.xpose.msra.mxu0 0
      %966 = vmatprep.subr.bf16.mxu0 0
      %967 = vmatpush1.bf16.xpose.msra.mxu0 0
      %968 = vmatprep.subr.bf16.mxu0 0
      %969 = vmatpush1.bf16.xpose.msra.mxu0 0
      %970 = vmatprep.subr.bf16.mxu0 0
      %971 = vmatpush1.bf16.xpose.msra.mxu0 0
      %972 = vmatprep.subr.bf16.mxu0 0
      %973 = vmatpush1.bf16.xpose.msra.mxu0 0
      %974 = vmatprep.subr.bf16.mxu0 0
      %975 = vmatpush1.bf16.xpose.msra.mxu0 0
      %976 = vmatprep.subr.bf16.mxu0 0
      %977 = vmatpush1.bf16.xpose.msra.mxu0 0
      %978 = vmatprep.subr.bf16.mxu0 0
      %979 = vmatpush1.bf16.xpose.msra.mxu0 0
      %980 = vmatprep.subr.bf16.mxu0 0
      %981 = vmatpush1.bf16.xpose.msra.mxu0 0
      %982 = vmatprep.subr.bf16.mxu0 0
      %983 = vmatpush1.bf16.xpose.msra.mxu0 0
      %984 = vmatprep.subr.bf16.mxu0 0
      %985 = vmatpush1.bf16.xpose.msra.mxu0 0
      %986 = vmatprep.mubr.bf16.mxu0 0
      %987 = vmatmul.mubr.bf16.gmra.mrb[0].mxu0 %v949
      %v988 = vpop.f32.mrb[0].mxu0
      %v989 = vadd.f32 %v782, %v988
      %v990 = vpop.f32.mrb[0].mxu0
      %v991 = vpop.f32.mrb[0].mxu0
      %v992 = vpop.f32.mrb[0].mxu0
      %993 = vdwg.mxu0
      %v994 = vsel %vm800, %v842, -inf
      %995 = vmax.xlane.f32.xlu0 %v994
      %v996 = vpop.xlane.xlu0 %995
      %v997 = vsel %vm800, %v891, -inf
      %998 = vmax.xlane.f32.xlu0 %v997
      %v999 = vpop.xlane.xlu0 %998
      %v1000 = vsel %vm800, %v940, -inf
      %1001 = vmax.xlane.f32.xlu0 %v1000
      %v1002 = vpop.xlane.xlu0 %1001
      %v1003 = vsel %vm800, %v989, -inf
      %1004 = vmax.xlane.f32.xlu0 %v1003
      %v1005 = vpop.xlane.xlu0 %1004
      %v1006 = vsub.f32 %v842, %v996
      %v1007 = vsub.f32 %v891, %v999
      %v1008 = vsub.f32 %v940, %v1002
      %v1009 = vsub.f32 %v989, %v1005
      %v1010 = vmul.f32 %v1006, 1.442695
      %v1011 = vpow.pop %v1010
      %v1012 = vmul.f32 %v1007, 1.442695
      %v1013 = vpow.pop %v1012
      %v1014 = vmul.f32 %v1008, 1.442695
      %v1015 = vpow.pop %v1014
      %v1016 = vmul.f32 %v1009, 1.442695
      %v1017 = vpow.pop %v1016
      %v1018 = vsel %vm800, %v1011, 0.0
      %1019 = vadd.xlane.f32.xlu0 %v1018
      %v1020 = vpop.xlane.xlu0 %1019
      %v1021 = vsel %vm800, %v1013, 0.0
      %1022 = vadd.xlane.f32.xlu0 %v1021
      %v1023 = vpop.xlane.xlu0 %1022
      %v1024 = vsel %vm800, %v1015, 0.0
      %1025 = vadd.xlane.f32.xlu0 %v1024
      %v1026 = vpop.xlane.xlu0 %1025
      %v1027 = vsel %vm800, %v1017, 0.0
      %1028 = vadd.xlane.f32.xlu0 %v1027
      %v1029 = vpop.xlane.xlu0 %1028
      %v1030 = vrcp.pop %v1020
      %v1031 = vrcp.pop %v1023
      %v1032 = vrcp.pop %v1026
      %v1033 = vrcp.pop %v1029
      %v1034 = vmul.f32 %v1011, %v1030
      %v1035 = vmul.f32 %v1013, %v1031
      %v1036 = vmul.f32 %v1015, %v1032
      %v1037 = vmul.f32 %v1017, %v1033
      %v1038 = vpack.c.bf16 %v1034, %v1034
      %v1039 = vpack.c.bf16 %v1035, %v1035
      %v1040 = vpack.c.bf16 %v1036, %v1036
      %v1041 = vpack.c.bf16 %v1037, %v1037
      %1042 = vrot.lane.b32.xlu0 %v793, 64
      %v1043 = vpop.permute.xlu0 %1042
      %v1045 = vsel %vm800, %v1038, 0
      %vm1047 = vcmask 1043456
      %v1049 = vsel %vm1047, %v1043, 0
      %1051 = vmatprep.subr.bf16.mxu0 0
      %1052 = vmatpush1.bf16.msra.mxu0 %v1049
      %1053 = vmatprep.subr.bf16.mxu0 0
      %1054 = vmatpush1.bf16.msra.mxu0 0
      %1055 = vmatprep.subr.bf16.mxu0 0
      %1056 = vmatpush1.bf16.msra.mxu0 0
      %1057 = vmatprep.subr.bf16.mxu0 0
      %1058 = vmatpush1.bf16.msra.mxu0 0
      %1059 = vmatprep.subr.bf16.mxu0 0
      %1060 = vmatpush1.bf16.msra.mxu0 0
      %1061 = vmatprep.subr.bf16.mxu0 0
      %1062 = vmatpush1.bf16.msra.mxu0 0
      %1063 = vmatprep.subr.bf16.mxu0 0
      %1064 = vmatpush1.bf16.msra.mxu0 0
      %1065 = vmatprep.subr.bf16.mxu0 0
      %1066 = vmatpush1.bf16.msra.mxu0 0
      %1067 = vmatprep.subr.bf16.mxu0 0
      %1068 = vmatpush1.bf16.msra.mxu0 0
      %1069 = vmatprep.subr.bf16.mxu0 0
      %1070 = vmatpush1.bf16.msra.mxu0 0
      %1071 = vmatprep.subr.bf16.mxu0 0
      %1072 = vmatpush1.bf16.msra.mxu0 0
      %1073 = vmatprep.subr.bf16.mxu0 0
      %1074 = vmatpush1.bf16.msra.mxu0 0
      %1075 = vmatprep.subr.bf16.mxu0 0
      %1076 = vmatpush1.bf16.msra.mxu0 0
      %1077 = vmatprep.subr.bf16.mxu0 0
      %1078 = vmatpush1.bf16.msra.mxu0 0
      %1079 = vmatprep.subr.bf16.mxu0 0
      %1080 = vmatpush1.bf16.msra.mxu0 0
      %1081 = vmatprep.subr.bf16.mxu0 0
      %1082 = vmatpush1.bf16.msra.mxu0 0
      %1083 = vmatprep.mubr.bf16.mxu0 0
      %1084 = vmatmul.mubr.bf16.gmra.mrb[0].mxu0 %v1045
      %v1085 = vpop.f32.mrb[0].mxu0
      %v1086 = vadd.f32 0.0, %v1085
      %v1087 = vpop.f32.mrb[0].mxu0
      %v1088 = vpop.f32.mrb[0].mxu0
      %v1089 = vpop.f32.mrb[0].mxu0
      %1090 = vdwg.mxu0
      %1091 = vrot.lane.b32.xlu0 %v794, 64
      %v1092 = vpop.permute.xlu0 %1091
      %v1094 = vsel %vm800, %v1039, 0
      %v1097 = vsel %vm1047, %v1092, 0
      %1099 = vmatprep.subr.bf16.mxu0 0
      %1100 = vmatpush1.bf16.msra.mxu0 %v1097
      %1101 = vmatprep.subr.bf16.mxu0 0
      %1102 = vmatpush1.bf16.msra.mxu0 0
      %1103 = vmatprep.subr.bf16.mxu0 0
      %1104 = vmatpush1.bf16.msra.mxu0 0
      %1105 = vmatprep.subr.bf16.mxu0 0
      %1106 = vmatpush1.bf16.msra.mxu0 0
      %1107 = vmatprep.subr.bf16.mxu0 0
      %1108 = vmatpush1.bf16.msra.mxu0 0
      %1109 = vmatprep.subr.bf16.mxu0 0
      %1110 = vmatpush1.bf16.msra.mxu0 0
      %1111 = vmatprep.subr.bf16.mxu0 0
      %1112 = vmatpush1.bf16.msra.mxu0 0
      %1113 = vmatprep.subr.bf16.mxu0 0
      %1114 = vmatpush1.bf16.msra.mxu0 0
      %1115 = vmatprep.subr.bf16.mxu0 0
      %1116 = vmatpush1.bf16.msra.mxu0 0
      %1117 = vmatprep.subr.bf16.mxu0 0
      %1118 = vmatpush1.bf16.msra.mxu0 0
      %1119 = vmatprep.subr.bf16.mxu0 0
      %1120 = vmatpush1.bf16.msra.mxu0 0
      %1121 = vmatprep.subr.bf16.mxu0 0
      %1122 = vmatpush1.bf16.msra.mxu0 0
      %1123 = vmatprep.subr.bf16.mxu0 0
      %1124 = vmatpush1.bf16.msra.mxu0 0
      %1125 = vmatprep.subr.bf16.mxu0 0
      %1126 = vmatpush1.bf16.msra.mxu0 0
      %1127 = vmatprep.subr.bf16.mxu0 0
      %1128 = vmatpush1.bf16.msra.mxu0 0
      %1129 = vmatprep.subr.bf16.mxu0 0
      %1130 = vmatpush1.bf16.msra.mxu0 0
      %1131 = vmatprep.mubr.bf16.mxu0 0
      %1132 = vmatmul.mubr.bf16.gmra.mrb[0].mxu0 %v1094
      %v1133 = vpop.f32.mrb[0].mxu0
      %v1134 = vadd.f32 0.0, %v1133
      %v1135 = vpop.f32.mrb[0].mxu0
      %v1136 = vpop.f32.mrb[0].mxu0
      %v1137 = vpop.f32.mrb[0].mxu0
      %1138 = vdwg.mxu0
      %1139 = vrot.lane.b32.xlu0 %v795, 64
      %v1140 = vpop.permute.xlu0 %1139
      %v1142 = vsel %vm800, %v1040, 0
      %v1145 = vsel %vm1047, %v1140, 0
      %1147 = vmatprep.subr.bf16.mxu0 0
      %1148 = vmatpush1.bf16.msra.mxu0 %v1145
      %1149 = vmatprep.subr.bf16.mxu0 0
      %1150 = vmatpush1.bf16.msra.mxu0 0
      %1151 = vmatprep.subr.bf16.mxu0 0
      %1152 = vmatpush1.bf16.msra.mxu0 0
      %1153 = vmatprep.subr.bf16.mxu0 0
      %1154 = vmatpush1.bf16.msra.mxu0 0
      %1155 = vmatprep.subr.bf16.mxu0 0
      %1156 = vmatpush1.bf16.msra.mxu0 0
      %1157 = vmatprep.subr.bf16.mxu0 0
      %1158 = vmatpush1.bf16.msra.mxu0 0
      %1159 = vmatprep.subr.bf16.mxu0 0
      %1160 = vmatpush1.bf16.msra.mxu0 0
      %1161 = vmatprep.subr.bf16.mxu0 0
      %1162 = vmatpush1.bf16.msra.mxu0 0
      %1163 = vmatprep.subr.bf16.mxu0 0
      %1164 = vmatpush1.bf16.msra.mxu0 0
      %1165 = vmatprep.subr.bf16.mxu0 0
      %1166 = vmatpush1.bf16.msra.mxu0 0
      %1167 = vmatprep.subr.bf16.mxu0 0
      %1168 = vmatpush1.bf16.msra.mxu0 0
      %1169 = vmatprep.subr.bf16.mxu0 0
      %1170 = vmatpush1.bf16.msra.mxu0 0
      %1171 = vmatprep.subr.bf16.mxu0 0
      %1172 = vmatpush1.bf16.msra.mxu0 0
      %1173 = vmatprep.subr.bf16.mxu0 0
      %1174 = vmatpush1.bf16.msra.mxu0 0
      %1175 = vmatprep.subr.bf16.mxu0 0
      %1176 = vmatpush1.bf16.msra.mxu0 0
      %1177 = vmatprep.subr.bf16.mxu0 0
      %1178 = vmatpush1.bf16.msra.mxu0 0
      %1179 = vmatprep.mubr.bf16.mxu0 0
      %1180 = vmatmul.mubr.bf16.gmra.mrb[0].mxu0 %v1142
      %v1181 = vpop.f32.mrb[0].mxu0
      %v1182 = vadd.f32 0.0, %v1181
      %v1183 = vpop.f32.mrb[0].mxu0
      %v1184 = vpop.f32.mrb[0].mxu0
      %v1185 = vpop.f32.mrb[0].mxu0
      %1186 = vdwg.mxu0
      %1187 = vrot.lane.b32.xlu0 %v796, 64
      %v1188 = vpop.permute.xlu0 %1187
      %v1190 = vsel %vm800, %v1041, 0
      %v1193 = vsel %vm1047, %v1188, 0
      %1195 = vmatprep.subr.bf16.mxu0 0
      %1196 = vmatpush1.bf16.msra.mxu0 %v1193
      %1197 = vmatprep.subr.bf16.mxu0 0
      %1198 = vmatpush1.bf16.msra.mxu0 0
      %1199 = vmatprep.subr.bf16.mxu0 0
      %1200 = vmatpush1.bf16.msra.mxu0 0
      %1201 = vmatprep.subr.bf16.mxu0 0
      %1202 = vmatpush1.bf16.msra.mxu0 0
      %1203 = vmatprep.subr.bf16.mxu0 0
      %1204 = vmatpush1.bf16.msra.mxu0 0
      %1205 = vmatprep.subr.bf16.mxu0 0
      %1206 = vmatpush1.bf16.msra.mxu0 0
      %1207 = vmatprep.subr.bf16.mxu0 0
      %1208 = vmatpush1.bf16.msra.mxu0 0
      %1209 = vmatprep.subr.bf16.mxu0 0
      %1210 = vmatpush1.bf16.msra.mxu0 0
      %1211 = vmatprep.subr.bf16.mxu0 0
      %1212 = vmatpush1.bf16.msra.mxu0 0
      %1213 = vmatprep.subr.bf16.mxu0 0
      %1214 = vmatpush1.bf16.msra.mxu0 0
      %1215 = vmatprep.subr.bf16.mxu0 0
      %1216 = vmatpush1.bf16.msra.mxu0 0
      %1217 = vmatprep.subr.bf16.mxu0 0
      %1218 = vmatpush1.bf16.msra.mxu0 0
      %1219 = vmatprep.subr.bf16.mxu0 0
      %1220 = vmatpush1.bf16.msra.mxu0 0
      %1221 = vmatprep.subr.bf16.mxu0 0
      %1222 = vmatpush1.bf16.msra.mxu0 0
      %1223 = vmatprep.subr.bf16.mxu0 0
      %1224 = vmatpush1.bf16.msra.mxu0 0
      %1225 = vmatprep.subr.bf16.mxu0 0
      %1226 = vmatpush1.bf16.msra.mxu0 0
      %1227 = vmatprep.mubr.bf16.mxu0 0
      %1228 = vmatmul.mubr.bf16.gmra.mrb[0].mxu0 %v1190
      %v1229 = vpop.f32.mrb[0].mxu0
      %v1230 = vadd.f32 0.0, %v1229
      %v1231 = vpop.f32.mrb[0].mxu0
      %v1232 = vpop.f32.mrb[0].mxu0
      %v1233 = vpop.f32.mrb[0].mxu0
      %1234 = vdwg.mxu0
      %1236 = vrot.lane.b32.xlu0 %v1134, 8
      %v1237 = vpop.permute.xlu0 %1236
      %1240 = vrot.lane.b32.xlu0 %v1182, 16
      %v1241 = vpop.permute.xlu0 %1240
      %1244 = vrot.lane.b32.xlu0 %v1230, 24
      %v1245 = vpop.permute.xlu0 %1244
      %v1247 = vsel %vm800, %v1086, %v1237
      %vm1248 = vcmask 130048
      %v1249 = vsel %vm1248, %v1247, %v1241
      %vm1250 = vcmask 195584
      %v1251 = vsel %vm1250, %v1249, %v1245
      %v1252 = vpack.c.bf16 %v1251, %v1251
      %v1253 = vlaneseq
      %v1254 = vshrl.u32 %v1253, 7
      %v1255 = vsub.s32 1, %v1254
      %v1256 = vrot.slane %v674, %v1255
      %1257 = vrot.lane.b32.xlu0 %v735, 32
      %v1258 = vpop.permute.xlu0 %1257
      %1259 = vrot.lane.b32.xlu0 %v736, 32
      %v1260 = vpop.permute.xlu0 %1259
      %v1264 = vsel %vm697, %v1252, 0
      %1266 = vmatprep.subr.bf16.mxu0 0
      %1267 = vmatpush1.bf16.msra.mxu0 %v1258
      %1268 = vmatprep.subr.bf16.mxu0 0
      %1269 = vmatpush1.bf16.msra.mxu0 %v1260
      %1270 = vmatprep.subr.bf16.mxu0 0
      %1271 = vmatpush1.bf16.msra.mxu0 0
      %1272 = vmatprep.subr.bf16.mxu0 0
      %1273 = vmatpush1.bf16.msra.mxu0 0
      %1274 = vmatprep.subr.bf16.mxu0 0
      %1275 = vmatpush1.bf16.msra.mxu0 0
      %1276 = vmatprep.subr.bf16.mxu0 0
      %1277 = vmatpush1.bf16.msra.mxu0 0
      %1278 = vmatprep.subr.bf16.mxu0 0
      %1279 = vmatpush1.bf16.msra.mxu0 0
      %1280 = vmatprep.subr.bf16.mxu0 0
      %1281 = vmatpush1.bf16.msra.mxu0 0
      %1282 = vmatprep.subr.bf16.mxu0 0
      %1283 = vmatpush1.bf16.msra.mxu0 0
      %1284 = vmatprep.subr.bf16.mxu0 0
      %1285 = vmatpush1.bf16.msra.mxu0 0
      %1286 = vmatprep.subr.bf16.mxu0 0
      %1287 = vmatpush1.bf16.msra.mxu0 0
      %1288 = vmatprep.subr.bf16.mxu0 0
      %1289 = vmatpush1.bf16.msra.mxu0 0
      %1290 = vmatprep.subr.bf16.mxu0 0
      %1291 = vmatpush1.bf16.msra.mxu0 0
      %1292 = vmatprep.subr.bf16.mxu0 0
      %1293 = vmatpush1.bf16.msra.mxu0 0
      %1294 = vmatprep.subr.bf16.mxu0 0
      %1295 = vmatpush1.bf16.msra.mxu0 0
      %1296 = vmatprep.subr.bf16.mxu0 0
      %1297 = vmatpush1.bf16.msra.mxu0 0
      %1298 = vmatprep.mubr.bf16.mxu0 0
      %1299 = vmatmul.mubr.bf16.gmra.mrb[0].mxu0 %v1264
      %v1300 = vpop.f32.mrb[0].mxu0
      %v1301 = vadd.f32 %v1256, %v1300
      %v1302 = vpop.f32.mrb[0].mxu0
      %v1303 = vpop.f32.mrb[0].mxu0
      %v1304 = vpop.f32.mrb[0].mxu0
      %1305 = vdwg.mxu0
      %v1306 = vadd.f32 %v695, %v1301
      %v1307 = vsel %vm697, %v1306, 0.0
      %1308 = vadd.xlane.f32.xlu0 %v1307
      %v1309 = vpop.xlane.xlu0 %1308
      %v1310 = vmul.f32 %v1309, %v701
      %v1311 = vsub.f32 %v1306, %v1310
      %v1312 = vmul.f32 %v1311, %v1311
      %v1313 = vsel %vm697, %v1312, 0.0
      %1314 = vadd.xlane.f32.xlu0 %v1313
      %v1315 = vpop.xlane.xlu0 %1314
      %v1316 = vmul.f32 %v1315, %v701
      %v1317 = vadd.f32 %v1316, 1e-06
      %v1318 = vrsqrt.pop %v1317
      %v1319 = vmul.f32 %v1311, %v1318
      %v1320 = vlaneseq
      %v1321 = vshrl.u32 %v1320, 7
      %v1322 = vsub.s32 2, %v1321
      %v1323 = vrot.slane %v673, %v1322
      %v1324 = vmul.f32 %v1319, %v1323
      %v1325 = vlaneseq
      %v1326 = vshrl.u32 %v1325, 7
      %v1327 = vsub.s32 3, %v1326
      %v1328 = vrot.slane %v673, %v1327
      %v1329 = vadd.f32 %v1324, %v1328
      %v1330 = vpack.c.bf16 %v1329, %v1329
      %v1331 = vlaneseq
      %v1332 = vshrl.u32 %v1331, 7
      %v1333 = vsub.s32 2, %v1332
      %v1334 = vrot.slane %v674, %v1333
      %v1339 = vunpack.c.l.b16 %v679
      %v1340 = vunpack.c.l.b16 %v680
      %v1341 = vunpack.c.l.b16 %v681
      %v1342 = vunpack.c.l.b16 %v682
      %v1343 = vpack.c.b16 %v1340, %v1339
      %v1344 = vpack.c.b16 %v1342, %v1341
      %v1348 = vsel %vm697, %v1330, 0
      %1350 = vmatprep.subr.bf16.mxu0 0
      %1351 = vmatpush1.bf16.msra.mxu0 %v1343
      %1352 = vmatprep.subr.bf16.mxu0 0
      %1353 = vmatpush1.bf16.msra.mxu0 %v1344
      %1354 = vmatprep.subr.bf16.mxu0 0
      %1355 = vmatpush1.bf16.msra.mxu0 0
      %1356 = vmatprep.subr.bf16.mxu0 0
      %1357 = vmatpush1.bf16.msra.mxu0 0
      %1358 = vmatprep.subr.bf16.mxu0 0
      %1359 = vmatpush1.bf16.msra.mxu0 0
      %1360 = vmatprep.subr.bf16.mxu0 0
      %1361 = vmatpush1.bf16.msra.mxu0 0
      %1362 = vmatprep.subr.bf16.mxu0 0
      %1363 = vmatpush1.bf16.msra.mxu0 0
      %1364 = vmatprep.subr.bf16.mxu0 0
      %1365 = vmatpush1.bf16.msra.mxu0 0
      %1366 = vmatprep.subr.bf16.mxu0 0
      %1367 = vmatpush1.bf16.msra.mxu0 0
      %1368 = vmatprep.subr.bf16.mxu0 0
      %1369 = vmatpush1.bf16.msra.mxu0 0
      %1370 = vmatprep.subr.bf16.mxu0 0
      %1371 = vmatpush1.bf16.msra.mxu0 0
      %1372 = vmatprep.subr.bf16.mxu0 0
      %1373 = vmatpush1.bf16.msra.mxu0 0
      %1374 = vmatprep.subr.bf16.mxu0 0
      %1375 = vmatpush1.bf16.msra.mxu0 0
      %1376 = vmatprep.subr.bf16.mxu0 0
      %1377 = vmatpush1.bf16.msra.mxu0 0
      %1378 = vmatprep.subr.bf16.mxu0 0
      %1379 = vmatpush1.bf16.msra.mxu0 0
      %1380 = vmatprep.subr.bf16.mxu0 0
      %1381 = vmatpush1.bf16.msra.mxu0 0
      %1382 = vmatprep.mubr.bf16.mxu0 0
      %1383 = vmatmul.mubr.bf16.gmra.mrb[0].mxu0 %v1348
      %v1384 = vpop.f32.mrb[0].mxu0
      %v1385 = vadd.f32 %v1334, %v1384
      %v1386 = vpop.f32.mrb[0].mxu0
      %v1387 = vpop.f32.mrb[0].mxu0
      %v1388 = vpop.f32.mrb[0].mxu0
      %1389 = vdwg.mxu0
      %v1390 = vpack.c.bf16 %v696, %v696
      %v1391 = vlaneseq
      %v1392 = vshrl.u32 %v1391, 7
      %v1393 = vsub.s32 3, %v1392
      %v1394 = vrot.slane %v674, %v1393
      %1395 = vrot.lane.b32.xlu0 %v1343, 96
      %v1396 = vpop.permute.xlu0 %1395
      %1397 = vrot.lane.b32.xlu0 %v1344, 96
      %v1398 = vpop.permute.xlu0 %1397
      %v1402 = vsel %vm697, %v1390, 0
      %1404 = vmatprep.subr.bf16.mxu0 0
      %1405 = vmatpush1.bf16.msra.mxu0 %v1396
      %1406 = vmatprep.subr.bf16.mxu0 0
      %1407 = vmatpush1.bf16.msra.mxu0 %v1398
      %1408 = vmatprep.subr.bf16.mxu0 0
      %1409 = vmatpush1.bf16.msra.mxu0 0
      %1410 = vmatprep.subr.bf16.mxu0 0
      %1411 = vmatpush1.bf16.msra.mxu0 0
      %1412 = vmatprep.subr.bf16.mxu0 0
      %1413 = vmatpush1.bf16.msra.mxu0 0
      %1414 = vmatprep.subr.bf16.mxu0 0
      %1415 = vmatpush1.bf16.msra.mxu0 0
      %1416 = vmatprep.subr.bf16.mxu0 0
      %1417 = vmatpush1.bf16.msra.mxu0 0
      %1418 = vmatprep.subr.bf16.mxu0 0
      %1419 = vmatpush1.bf16.msra.mxu0 0
      %1420 = vmatprep.subr.bf16.mxu0 0
      %1421 = vmatpush1.bf16.msra.mxu0 0
      %1422 = vmatprep.subr.bf16.mxu0 0
      %1423 = vmatpush1.bf16.msra.mxu0 0
      %1424 = vmatprep.subr.bf16.mxu0 0
      %1425 = vmatpush1.bf16.msra.mxu0 0
      %1426 = vmatprep.subr.bf16.mxu0 0
      %1427 = vmatpush1.bf16.msra.mxu0 0
      %1428 = vmatprep.subr.bf16.mxu0 0
      %1429 = vmatpush1.bf16.msra.mxu0 0
      %1430 = vmatprep.subr.bf16.mxu0 0
      %1431 = vmatpush1.bf16.msra.mxu0 0
      %1432 = vmatprep.subr.bf16.mxu0 0
      %1433 = vmatpush1.bf16.msra.mxu0 0
      %1434 = vmatprep.subr.bf16.mxu0 0
      %1435 = vmatpush1.bf16.msra.mxu0 0
      %1436 = vmatprep.mubr.bf16.mxu0 0
      %1437 = vmatmul.mubr.bf16.gmra.mrb[0].mxu0 %v1402
      %v1438 = vpop.f32.mrb[0].mxu0
      %v1439 = vadd.f32 %v1394, %v1438
      %v1440 = vpop.f32.mrb[0].mxu0
      %v1441 = vpop.f32.mrb[0].mxu0
      %v1442 = vpop.f32.mrb[0].mxu0
      %1443 = vdwg.mxu0
      %v1444 = vld [vmem:[#allocation4] sm:$0xff]
      %1446 = vrot.lane.b32.xlu0 %v1385, 120
      %v1447 = vpop.permute.xlu0 %1446
      %1449 = vrot.lane.b32.xlu0 %v1385, 112
      %v1450 = vpop.permute.xlu0 %1449
      %1452 = vrot.lane.b32.xlu0 %v1385, 104
      %v1453 = vpop.permute.xlu0 %1452
      %v1455 = vpack.c.bf16 %v1385, %v1385
      %v1456 = vpack.c.bf16 %v1447, %v1447
      %v1457 = vpack.c.bf16 %v1450, %v1450
      %v1458 = vpack.c.bf16 %v1453, %v1453
      %1460 = vrot.lane.b32.xlu0 %v1439, 120
      %v1461 = vpop.permute.xlu0 %1460
      %1463 = vrot.lane.b32.xlu0 %v1439, 112
      %v1464 = vpop.permute.xlu0 %1463
      %1466 = vrot.lane.b32.xlu0 %v1439, 104
      %v1467 = vpop.permute.xlu0 %1466
      %v1469 = vpack.c.bf16 %v1439, %v1439
      %v1470 = vpack.c.bf16 %v1461, %v1461
      %v1471 = vpack.c.bf16 %v1464, %v1464
      %v1472 = vpack.c.bf16 %v1467, %v1467
      %v1474 = vsel %vm800, %v1455, 0
      %v1477 = vsel %vm800, %v1469, 0
      %1479 = vmatprep.subr.bf16.mxu0 0
      %1480 = vmatpush1.bf16.xpose.msra.mxu0 %v1477
      %1481 = vmatprep.subr.bf16.mxu0 0
      %1482 = vmatpush1.bf16.xpose.msra.mxu0 0
      %1483 = vmatprep.subr.bf16.mxu0 0
      %1484 = vmatpush1.bf16.xpose.msra.mxu0 0
      %1485 = vmatprep.subr.bf16.mxu0 0
      %1486 = vmatpush1.bf16.xpose.msra.mxu0 0
      %1487 = vmatprep.subr.bf16.mxu0 0
      %1488 = vmatpush1.bf16.xpose.msra.mxu0 0
      %1489 = vmatprep.subr.bf16.mxu0 0
      %1490 = vmatpush1.bf16.xpose.msra.mxu0 0
      %1491 = vmatprep.subr.bf16.mxu0 0
      %1492 = vmatpush1.bf16.xpose.msra.mxu0 0
      %1493 = vmatprep.subr.bf16.mxu0 0
      %1494 = vmatpush1.bf16.xpose.msra.mxu0 0
      %1495 = vmatprep.subr.bf16.mxu0 0
      %1496 = vmatpush1.bf16.xpose.msra.mxu0 0
      %1497 = vmatprep.subr.bf16.mxu0 0
      %1498 = vmatpush1.bf16.xpose.msra.mxu0 0
      %1499 = vmatprep.subr.bf16.mxu0 0
      %1500 = vmatpush1.bf16.xpose.msra.mxu0 0
      %1501 = vmatprep.subr.bf16.mxu0 0
      %1502 = vmatpush1.bf16.xpose.msra.mxu0 0
      %1503 = vmatprep.subr.bf16.mxu0 0
      %1504 = vmatpush1.bf16.xpose.msra.mxu0 0
      %1505 = vmatprep.subr.bf16.mxu0 0
      %1506 = vmatpush1.bf16.xpose.msra.mxu0 0
      %1507 = vmatprep.subr.bf16.mxu0 0
      %1508 = vmatpush1.bf16.xpose.msra.mxu0 0
      %1509 = vmatprep.subr.bf16.mxu0 0
      %1510 = vmatpush1.bf16.xpose.msra.mxu0 0
      %1511 = vmatprep.mubr.bf16.mxu0 0
      %1512 = vmatmul.mubr.bf16.gmra.mrb[0].mxu0 %v1474
      %v1513 = vpop.f32.mrb[0].mxu0
      %v1514 = vadd.f32 %v1444, %v1513
      %v1515 = vpop.f32.mrb[0].mxu0
      %v1516 = vpop.f32.mrb[0].mxu0
      %v1517 = vpop.f32.mrb[0].mxu0
      %1518 = vdwg.mxu0
      %v1520 = vsel %vm800, %v1456, 0
      %v1523 = vsel %vm800, %v1470, 0
      %1525 = vmatprep.subr.bf16.mxu0 0
      %1526 = vmatpush1.bf16.xpose.msra.mxu0 %v1523
      %1527 = vmatprep.subr.bf16.mxu0 0
      %1528 = vmatpush1.bf16.xpose.msra.mxu0 0
      %1529 = vmatprep.subr.bf16.mxu0 0
      %1530 = vmatpush1.bf16.xpose.msra.mxu0 0
      %1531 = vmatprep.subr.bf16.mxu0 0
      %1532 = vmatpush1.bf16.xpose.msra.mxu0 0
      %1533 = vmatprep.subr.bf16.mxu0 0
      %1534 = vmatpush1.bf16.xpose.msra.mxu0 0
      %1535 = vmatprep.subr.bf16.mxu0 0
      %1536 = vmatpush1.bf16.xpose.msra.mxu0 0
      %1537 = vmatprep.subr.bf16.mxu0 0
      %1538 = vmatpush1.bf16.xpose.msra.mxu0 0
      %1539 = vmatprep.subr.bf16.mxu0 0
      %1540 = vmatpush1.bf16.xpose.msra.mxu0 0
      %1541 = vmatprep.subr.bf16.mxu0 0
      %1542 = vmatpush1.bf16.xpose.msra.mxu0 0
      %1543 = vmatprep.subr.bf16.mxu0 0
      %1544 = vmatpush1.bf16.xpose.msra.mxu0 0
      %1545 = vmatprep.subr.bf16.mxu0 0
      %1546 = vmatpush1.bf16.xpose.msra.mxu0 0
      %1547 = vmatprep.subr.bf16.mxu0 0
      %1548 = vmatpush1.bf16.xpose.msra.mxu0 0
      %1549 = vmatprep.subr.bf16.mxu0 0
      %1550 = vmatpush1.bf16.xpose.msra.mxu0 0
      %1551 = vmatprep.subr.bf16.mxu0 0
      %1552 = vmatpush1.bf16.xpose.msra.mxu0 0
      %1553 = vmatprep.subr.bf16.mxu0 0
      %1554 = vmatpush1.bf16.xpose.msra.mxu0 0
      %1555 = vmatprep.subr.bf16.mxu0 0
      %1556 = vmatpush1.bf16.xpose.msra.mxu0 0
      %1557 = vmatprep.mubr.bf16.mxu0 0
      %1558 = vmatmul.mubr.bf16.gmra.mrb[0].mxu0 %v1520
      %v1559 = vpop.f32.mrb[0].mxu0
      %v1560 = vadd.f32 %v1444, %v1559
      %v1561 = vpop.f32.mrb[0].mxu0
      %v1562 = vpop.f32.mrb[0].mxu0
      %v1563 = vpop.f32.mrb[0].mxu0
      %1564 = vdwg.mxu0
      %v1566 = vsel %vm800, %v1457, 0
      %v1569 = vsel %vm800, %v1471, 0
      %1571 = vmatprep.subr.bf16.mxu0 0
      %1572 = vmatpush1.bf16.xpose.msra.mxu0 %v1569
      %1573 = vmatprep.subr.bf16.mxu0 0
      %1574 = vmatpush1.bf16.xpose.msra.mxu0 0
      %1575 = vmatprep.subr.bf16.mxu0 0
      %1576 = vmatpush1.bf16.xpose.msra.mxu0 0
      %1577 = vmatprep.subr.bf16.mxu0 0
      %1578 = vmatpush1.bf16.xpose.msra.mxu0 0
      %1579 = vmatprep.subr.bf16.mxu0 0
      %1580 = vmatpush1.bf16.xpose.msra.mxu0 0
      %1581 = vmatprep.subr.bf16.mxu0 0
      %1582 = vmatpush1.bf16.xpose.msra.mxu0 0
      %1583 = vmatprep.subr.bf16.mxu0 0
      %1584 = vmatpush1.bf16.xpose.msra.mxu0 0
      %1585 = vmatprep.subr.bf16.mxu0 0
      %1586 = vmatpush1.bf16.xpose.msra.mxu0 0
      %1587 = vmatprep.subr.bf16.mxu0 0
      %1588 = vmatpush1.bf16.xpose.msra.mxu0 0
      %1589 = vmatprep.subr.bf16.mxu0 0
      %1590 = vmatpush1.bf16.xpose.msra.mxu0 0
      %1591 = vmatprep.subr.bf16.mxu0 0
      %1592 = vmatpush1.bf16.xpose.msra.mxu0 0
      %1593 = vmatprep.subr.bf16.mxu0 0
      %1594 = vmatpush1.bf16.xpose.msra.mxu0 0
      %1595 = vmatprep.subr.bf16.mxu0 0
      %1596 = vmatpush1.bf16.xpose.msra.mxu0 0
      %1597 = vmatprep.subr.bf16.mxu0 0
      %1598 = vmatpush1.bf16.xpose.msra.mxu0 0
      %1599 = vmatprep.subr.bf16.mxu0 0
      %1600 = vmatpush1.bf16.xpose.msra.mxu0 0
      %1601 = vmatprep.subr.bf16.mxu0 0
      %1602 = vmatpush1.bf16.xpose.msra.mxu0 0
      %1603 = vmatprep.mubr.bf16.mxu0 0
      %1604 = vmatmul.mubr.bf16.gmra.mrb[0].mxu0 %v1566
      %v1605 = vpop.f32.mrb[0].mxu0
      %v1606 = vadd.f32 %v1444, %v1605
      %v1607 = vpop.f32.mrb[0].mxu0
      %v1608 = vpop.f32.mrb[0].mxu0
      %v1609 = vpop.f32.mrb[0].mxu0
      %1610 = vdwg.mxu0
      %v1612 = vsel %vm800, %v1458, 0
      %v1615 = vsel %vm800, %v1472, 0
      %1617 = vmatprep.subr.bf16.mxu0 0
      %1618 = vmatpush1.bf16.xpose.msra.mxu0 %v1615
      %1619 = vmatprep.subr.bf16.mxu0 0
      %1620 = vmatpush1.bf16.xpose.msra.mxu0 0
      %1621 = vmatprep.subr.bf16.mxu0 0
      %1622 = vmatpush1.bf16.xpose.msra.mxu0 0
      %1623 = vmatprep.subr.bf16.mxu0 0
      %1624 = vmatpush1.bf16.xpose.msra.mxu0 0
      %1625 = vmatprep.subr.bf16.mxu0 0
      %1626 = vmatpush1.bf16.xpose.msra.mxu0 0
      %1627 = vmatprep.subr.bf16.mxu0 0
      %1628 = vmatpush1.bf16.xpose.msra.mxu0 0
      %1629 = vmatprep.subr.bf16.mxu0 0
      %1630 = vmatpush1.bf16.xpose.msra.mxu0 0
      %1631 = vmatprep.subr.bf16.mxu0 0
      %1632 = vmatpush1.bf16.xpose.msra.mxu0 0
      %1633 = vmatprep.subr.bf16.mxu0 0
      %1634 = vmatpush1.bf16.xpose.msra.mxu0 0
      %1635 = vmatprep.subr.bf16.mxu0 0
      %1636 = vmatpush1.bf16.xpose.msra.mxu0 0
      %1637 = vmatprep.subr.bf16.mxu0 0
      %1638 = vmatpush1.bf16.xpose.msra.mxu0 0
      %1639 = vmatprep.subr.bf16.mxu0 0
      %1640 = vmatpush1.bf16.xpose.msra.mxu0 0
      %1641 = vmatprep.subr.bf16.mxu0 0
      %1642 = vmatpush1.bf16.xpose.msra.mxu0 0
      %1643 = vmatprep.subr.bf16.mxu0 0
      %1644 = vmatpush1.bf16.xpose.msra.mxu0 0
      %1645 = vmatprep.subr.bf16.mxu0 0
      %1646 = vmatpush1.bf16.xpose.msra.mxu0 0
      %1647 = vmatprep.subr.bf16.mxu0 0
      %1648 = vmatpush1.bf16.xpose.msra.mxu0 0
      %1649 = vmatprep.mubr.bf16.mxu0 0
      %1650 = vmatmul.mubr.bf16.gmra.mrb[0].mxu0 %v1612
      %v1651 = vpop.f32.mrb[0].mxu0
      %v1652 = vadd.f32 %v1444, %v1651
      %v1653 = vpop.f32.mrb[0].mxu0
      %v1654 = vpop.f32.mrb[0].mxu0
      %v1655 = vpop.f32.mrb[0].mxu0
      %1656 = vdwg.mxu0
      %vm1657 = vcmask 48128
      %v1658 = vsel %vm1657, %v1514, -inf
      %1659 = vmax.xlane.f32.xlu0 %v1658
      %v1660 = vpop.xlane.xlu0 %1659
      %v1661 = vsel %vm1657, %v1560, -inf
      %1662 = vmax.xlane.f32.xlu0 %v1661
      %v1663 = vpop.xlane.xlu0 %1662
      %v1664 = vsel %vm1657, %v1606, -inf
      %1665 = vmax.xlane.f32.xlu0 %v1664
      %v1666 = vpop.xlane.xlu0 %1665
      %v1667 = vsel %vm1657, %v1652, -inf
      %1668 = vmax.xlane.f32.xlu0 %v1667
      %v1669 = vpop.xlane.xlu0 %1668
      %v1670 = vsub.f32 %v1514, %v1660
      %v1671 = vsub.f32 %v1560, %v1663
      %v1672 = vsub.f32 %v1606, %v1666
      %v1673 = vsub.f32 %v1652, %v1669
      %v1674 = vmul.f32 %v1670, 1.442695
      %v1675 = vpow.pop %v1674
      %v1676 = vmul.f32 %v1671, 1.442695
      %v1677 = vpow.pop %v1676
      %v1678 = vmul.f32 %v1672, 1.442695
      %v1679 = vpow.pop %v1678
      %v1680 = vmul.f32 %v1673, 1.442695
      %v1681 = vpow.pop %v1680
      %v1682 = vsel %vm1657, %v1675, 0.0
      %1683 = vadd.xlane.f32.xlu0 %v1682
      %v1684 = vpop.xlane.xlu0 %1683
      %v1685 = vsel %vm1657, %v1677, 0.0
      %1686 = vadd.xlane.f32.xlu0 %v1685
      %v1687 = vpop.xlane.xlu0 %1686
      %v1688 = vsel %vm1657, %v1679, 0.0
      %1689 = vadd.xlane.f32.xlu0 %v1688
      %v1690 = vpop.xlane.xlu0 %1689
      %v1691 = vsel %vm1657, %v1681, 0.0
      %1692 = vadd.xlane.f32.xlu0 %v1691
      %v1693 = vpop.xlane.xlu0 %1692
      %v1694 = vrcp.pop %v1684
      %v1695 = vrcp.pop %v1687
      %v1696 = vrcp.pop %v1690
      %v1697 = vrcp.pop %v1693
      %v1698 = vmul.f32 %v1675, %v1694
      %v1699 = vmul.f32 %v1677, %v1695
      %v1700 = vmul.f32 %v1679, %v1696
      %v1701 = vmul.f32 %v1681, %v1697
      %v1702 = vpack.c.bf16 %v1698, %v1698
      %v1703 = vpack.c.bf16 %v1699, %v1699
      %v1704 = vpack.c.bf16 %v1700, %v1700
      %v1705 = vpack.c.bf16 %v1701, %v1701
      %1707 = vrot.lane.b32.xlu0 %v1469, 96
      %v1708 = vpop.permute.xlu0 %1707
      %v1710 = vsel %vm1657, %v1702, 0
      %vm1712 = vcmask 1042432
      %v1714 = vsel %vm1712, %v1708, 0
      %1716 = vmatprep.subr.bf16.mxu0 0
      %1717 = vmatpush1.bf16.msra.mxu0 %v1714
      %1718 = vmatprep.subr.bf16.mxu0 0
      %1719 = vmatpush1.bf16.msra.mxu0 0
      %1720 = vmatprep.subr.bf16.mxu0 0
      %1721 = vmatpush1.bf16.msra.mxu0 0
      %1722 = vmatprep.subr.bf16.mxu0 0
      %1723 = vmatpush1.bf16.msra.mxu0 0
      %1724 = vmatprep.subr.bf16.mxu0 0
      %1725 = vmatpush1.bf16.msra.mxu0 0
      %1726 = vmatprep.subr.bf16.mxu0 0
      %1727 = vmatpush1.bf16.msra.mxu0 0
      %1728 = vmatprep.subr.bf16.mxu0 0
      %1729 = vmatpush1.bf16.msra.mxu0 0
      %1730 = vmatprep.subr.bf16.mxu0 0
      %1731 = vmatpush1.bf16.msra.mxu0 0
      %1732 = vmatprep.subr.bf16.mxu0 0
      %1733 = vmatpush1.bf16.msra.mxu0 0
      %1734 = vmatprep.subr.bf16.mxu0 0
      %1735 = vmatpush1.bf16.msra.mxu0 0
      %1736 = vmatprep.subr.bf16.mxu0 0
      %1737 = vmatpush1.bf16.msra.mxu0 0
      %1738 = vmatprep.subr.bf16.mxu0 0
      %1739 = vmatpush1.bf16.msra.mxu0 0
      %1740 = vmatprep.subr.bf16.mxu0 0
      %1741 = vmatpush1.bf16.msra.mxu0 0
      %1742 = vmatprep.subr.bf16.mxu0 0
      %1743 = vmatpush1.bf16.msra.mxu0 0
      %1744 = vmatprep.subr.bf16.mxu0 0
      %1745 = vmatpush1.bf16.msra.mxu0 0
      %1746 = vmatprep.subr.bf16.mxu0 0
      %1747 = vmatpush1.bf16.msra.mxu0 0
      %1748 = vmatprep.mubr.bf16.mxu0 0
      %1749 = vmatmul.mubr.bf16.gmra.mrb[0].mxu0 %v1710
      %v1750 = vpop.f32.mrb[0].mxu0
      %v1751 = vadd.f32 0.0, %v1750
      %v1752 = vpop.f32.mrb[0].mxu0
      %v1753 = vpop.f32.mrb[0].mxu0
      %v1754 = vpop.f32.mrb[0].mxu0
      %1755 = vdwg.mxu0
      %1757 = vrot.lane.b32.xlu0 %v1470, 96
      %v1758 = vpop.permute.xlu0 %1757
      %v1760 = vsel %vm1657, %v1703, 0
      %v1763 = vsel %vm1712, %v1758, 0
      %1765 = vmatprep.subr.bf16.mxu0 0
      %1766 = vmatpush1.bf16.msra.mxu0 %v1763
      %1767 = vmatprep.subr.bf16.mxu0 0
      %1768 = vmatpush1.bf16.msra.mxu0 0
      %1769 = vmatprep.subr.bf16.mxu0 0
      %1770 = vmatpush1.bf16.msra.mxu0 0
      %1771 = vmatprep.subr.bf16.mxu0 0
      %1772 = vmatpush1.bf16.msra.mxu0 0
      %1773 = vmatprep.subr.bf16.mxu0 0
      %1774 = vmatpush1.bf16.msra.mxu0 0
      %1775 = vmatprep.subr.bf16.mxu0 0
      %1776 = vmatpush1.bf16.msra.mxu0 0
      %1777 = vmatprep.subr.bf16.mxu0 0
      %1778 = vmatpush1.bf16.msra.mxu0 0
      %1779 = vmatprep.subr.bf16.mxu0 0
      %1780 = vmatpush1.bf16.msra.mxu0 0
      %1781 = vmatprep.subr.bf16.mxu0 0
      %1782 = vmatpush1.bf16.msra.mxu0 0
      %1783 = vmatprep.subr.bf16.mxu0 0
      %1784 = vmatpush1.bf16.msra.mxu0 0
      %1785 = vmatprep.subr.bf16.mxu0 0
      %1786 = vmatpush1.bf16.msra.mxu0 0
      %1787 = vmatprep.subr.bf16.mxu0 0
      %1788 = vmatpush1.bf16.msra.mxu0 0
      %1789 = vmatprep.subr.bf16.mxu0 0
      %1790 = vmatpush1.bf16.msra.mxu0 0
      %1791 = vmatprep.subr.bf16.mxu0 0
      %1792 = vmatpush1.bf16.msra.mxu0 0
      %1793 = vmatprep.subr.bf16.mxu0 0
      %1794 = vmatpush1.bf16.msra.mxu0 0
      %1795 = vmatprep.subr.bf16.mxu0 0
      %1796 = vmatpush1.bf16.msra.mxu0 0
      %1797 = vmatprep.mubr.bf16.mxu0 0
      %1798 = vmatmul.mubr.bf16.gmra.mrb[0].mxu0 %v1760
      %v1799 = vpop.f32.mrb[0].mxu0
      %v1800 = vadd.f32 0.0, %v1799
      %v1801 = vpop.f32.mrb[0].mxu0
      %v1802 = vpop.f32.mrb[0].mxu0
      %v1803 = vpop.f32.mrb[0].mxu0
      %1804 = vdwg.mxu0
      %1806 = vrot.lane.b32.xlu0 %v1471, 96
      %v1807 = vpop.permute.xlu0 %1806
      %v1809 = vsel %vm1657, %v1704, 0
      %v1812 = vsel %vm1712, %v1807, 0
      %1814 = vmatprep.subr.bf16.mxu0 0
      %1815 = vmatpush1.bf16.msra.mxu0 %v1812
      %1816 = vmatprep.subr.bf16.mxu0 0
      %1817 = vmatpush1.bf16.msra.mxu0 0
      %1818 = vmatprep.subr.bf16.mxu0 0
      %1819 = vmatpush1.bf16.msra.mxu0 0
      %1820 = vmatprep.subr.bf16.mxu0 0
      %1821 = vmatpush1.bf16.msra.mxu0 0
      %1822 = vmatprep.subr.bf16.mxu0 0
      %1823 = vmatpush1.bf16.msra.mxu0 0
      %1824 = vmatprep.subr.bf16.mxu0 0
      %1825 = vmatpush1.bf16.msra.mxu0 0
      %1826 = vmatprep.subr.bf16.mxu0 0
      %1827 = vmatpush1.bf16.msra.mxu0 0
      %1828 = vmatprep.subr.bf16.mxu0 0
      %1829 = vmatpush1.bf16.msra.mxu0 0
      %1830 = vmatprep.subr.bf16.mxu0 0
      %1831 = vmatpush1.bf16.msra.mxu0 0
      %1832 = vmatprep.subr.bf16.mxu0 0
      %1833 = vmatpush1.bf16.msra.mxu0 0
      %1834 = vmatprep.subr.bf16.mxu0 0
      %1835 = vmatpush1.bf16.msra.mxu0 0
      %1836 = vmatprep.subr.bf16.mxu0 0
      %1837 = vmatpush1.bf16.msra.mxu0 0
      %1838 = vmatprep.subr.bf16.mxu0 0
      %1839 = vmatpush1.bf16.msra.mxu0 0
      %1840 = vmatprep.subr.bf16.mxu0 0
      %1841 = vmatpush1.bf16.msra.mxu0 0
      %1842 = vmatprep.subr.bf16.mxu0 0
      %1843 = vmatpush1.bf16.msra.mxu0 0
      %1844 = vmatprep.subr.bf16.mxu0 0
      %1845 = vmatpush1.bf16.msra.mxu0 0
      %1846 = vmatprep.mubr.bf16.mxu0 0
      %1847 = vmatmul.mubr.bf16.gmra.mrb[0].mxu0 %v1809
      %v1848 = vpop.f32.mrb[0].mxu0
      %v1849 = vadd.f32 0.0, %v1848
      %v1850 = vpop.f32.mrb[0].mxu0
      %v1851 = vpop.f32.mrb[0].mxu0
      %v1852 = vpop.f32.mrb[0].mxu0
      %1853 = vdwg.mxu0
      %1855 = vrot.lane.b32.xlu0 %v1472, 96
      %v1856 = vpop.permute.xlu0 %1855
      %v1858 = vsel %vm1657, %v1705, 0
      %v1861 = vsel %vm1712, %v1856, 0
      %1863 = vmatprep.subr.bf16.mxu0 0
      %1864 = vmatpush1.bf16.msra.mxu0 %v1861
      %1865 = vmatprep.subr.bf16.mxu0 0
      %1866 = vmatpush1.bf16.msra.mxu0 0
      %1867 = vmatprep.subr.bf16.mxu0 0
      %1868 = vmatpush1.bf16.msra.mxu0 0
      %1869 = vmatprep.subr.bf16.mxu0 0
      %1870 = vmatpush1.bf16.msra.mxu0 0
      %1871 = vmatprep.subr.bf16.mxu0 0
      %1872 = vmatpush1.bf16.msra.mxu0 0
      %1873 = vmatprep.subr.bf16.mxu0 0
      %1874 = vmatpush1.bf16.msra.mxu0 0
      %1875 = vmatprep.subr.bf16.mxu0 0
      %1876 = vmatpush1.bf16.msra.mxu0 0
      %1877 = vmatprep.subr.bf16.mxu0 0
      %1878 = vmatpush1.bf16.msra.mxu0 0
      %1879 = vmatprep.subr.bf16.mxu0 0
      %1880 = vmatpush1.bf16.msra.mxu0 0
      %1881 = vmatprep.subr.bf16.mxu0 0
      %1882 = vmatpush1.bf16.msra.mxu0 0
      %1883 = vmatprep.subr.bf16.mxu0 0
      %1884 = vmatpush1.bf16.msra.mxu0 0
      %1885 = vmatprep.subr.bf16.mxu0 0
      %1886 = vmatpush1.bf16.msra.mxu0 0
      %1887 = vmatprep.subr.bf16.mxu0 0
      %1888 = vmatpush1.bf16.msra.mxu0 0
      %1889 = vmatprep.subr.bf16.mxu0 0
      %1890 = vmatpush1.bf16.msra.mxu0 0
      %1891 = vmatprep.subr.bf16.mxu0 0
      %1892 = vmatpush1.bf16.msra.mxu0 0
      %1893 = vmatprep.subr.bf16.mxu0 0
      %1894 = vmatpush1.bf16.msra.mxu0 0
      %1895 = vmatprep.mubr.bf16.mxu0 0
      %1896 = vmatmul.mubr.bf16.gmra.mrb[0].mxu0 %v1858
      %v1897 = vpop.f32.mrb[0].mxu0
      %v1898 = vadd.f32 0.0, %v1897
      %v1899 = vpop.f32.mrb[0].mxu0
      %v1900 = vpop.f32.mrb[0].mxu0
      %v1901 = vpop.f32.mrb[0].mxu0
      %1902 = vdwg.mxu0
      %1904 = vrot.lane.b32.xlu0 %v1800, 8
      %v1905 = vpop.permute.xlu0 %1904
      %1908 = vrot.lane.b32.xlu0 %v1849, 16
      %v1909 = vpop.permute.xlu0 %1908
      %1912 = vrot.lane.b32.xlu0 %v1898, 24
      %v1913 = vpop.permute.xlu0 %1912
      %v1915 = vsel %vm800, %v1751, %v1905
      %v1916 = vsel %vm1248, %v1915, %v1909
      %v1917 = vsel %vm1250, %v1916, %v1913
      %v1918 = vpack.c.bf16 %v1917, %v1917
      %v1919 = vlaneseq
      %v1920 = vshrl.u32 %v1919, 7
      %v1921 = vsub.s32 4, %v1920
      %v1922 = vrot.slane %v674, %v1921
      %1923 = vrot.lane.b32.xlu0 %v1343, 32
      %v1924 = vpop.permute.xlu0 %1923
      %1925 = vrot.lane.b32.xlu0 %v1344, 32
      %v1926 = vpop.permute.xlu0 %1925
      %v1930 = vsel %vm697, %v1918, 0
      %1932 = vmatprep.subr.bf16.mxu0 0
      %1933 = vmatpush1.bf16.msra.mxu0 %v1924
      %1934 = vmatprep.subr.bf16.mxu0 0
      %1935 = vmatpush1.bf16.msra.mxu0 %v1926
      %1936 = vmatprep.subr.bf16.mxu0 0
      %1937 = vmatpush1.bf16.msra.mxu0 0
      %1938 = vmatprep.subr.bf16.mxu0 0
      %1939 = vmatpush1.bf16.msra.mxu0 0
      %1940 = vmatprep.subr.bf16.mxu0 0
      %1941 = vmatpush1.bf16.msra.mxu0 0
      %1942 = vmatprep.subr.bf16.mxu0 0
      %1943 = vmatpush1.bf16.msra.mxu0 0
      %1944 = vmatprep.subr.bf16.mxu0 0
      %1945 = vmatpush1.bf16.msra.mxu0 0
      %1946 = vmatprep.subr.bf16.mxu0 0
      %1947 = vmatpush1.bf16.msra.mxu0 0
      %1948 = vmatprep.subr.bf16.mxu0 0
      %1949 = vmatpush1.bf16.msra.mxu0 0
      %1950 = vmatprep.subr.bf16.mxu0 0
      %1951 = vmatpush1.bf16.msra.mxu0 0
      %1952 = vmatprep.subr.bf16.mxu0 0
      %1953 = vmatpush1.bf16.msra.mxu0 0
      %1954 = vmatprep.subr.bf16.mxu0 0
      %1955 = vmatpush1.bf16.msra.mxu0 0
      %1956 = vmatprep.subr.bf16.mxu0 0
      %1957 = vmatpush1.bf16.msra.mxu0 0
      %1958 = vmatprep.subr.bf16.mxu0 0
      %1959 = vmatpush1.bf16.msra.mxu0 0
      %1960 = vmatprep.subr.bf16.mxu0 0
      %1961 = vmatpush1.bf16.msra.mxu0 0
      %1962 = vmatprep.subr.bf16.mxu0 0
      %1963 = vmatpush1.bf16.msra.mxu0 0
      %1964 = vmatprep.mubr.bf16.mxu0 0
      %1965 = vmatmul.mubr.bf16.gmra.mrb[0].mxu0 %v1930
      %v1966 = vpop.f32.mrb[0].mxu0
      %v1967 = vadd.f32 %v1922, %v1966
      %v1968 = vpop.f32.mrb[0].mxu0
      %v1969 = vpop.f32.mrb[0].mxu0
      %v1970 = vpop.f32.mrb[0].mxu0
      %1971 = vdwg.mxu0
      %v1972 = vadd.f32 %v1306, %v1967
      %v1973 = vsel %vm697, %v1972, 0.0
      %1974 = vadd.xlane.f32.xlu0 %v1973
      %v1975 = vpop.xlane.xlu0 %1974
      %v1976 = vmul.f32 %v1975, %v701
      %v1977 = vsub.f32 %v1972, %v1976
      %v1978 = vmul.f32 %v1977, %v1977
      %v1979 = vsel %vm697, %v1978, 0.0
      %1980 = vadd.xlane.f32.xlu0 %v1979
      %v1981 = vpop.xlane.xlu0 %1980
      %v1982 = vmul.f32 %v1981, %v701
      %v1983 = vadd.f32 %v1982, 1e-06
      %v1984 = vrsqrt.pop %v1983
      %v1985 = vmul.f32 %v1977, %v1984
      %v1986 = vlaneseq
      %v1987 = vshrl.u32 %v1986, 7
      %v1988 = vsub.s32 4, %v1987
      %v1989 = vrot.slane %v673, %v1988
      %v1990 = vmul.f32 %v1985, %v1989
      %v1991 = vlaneseq
      %v1992 = vshrl.u32 %v1991, 7
      %v1993 = vsub.s32 5, %v1992
      %v1994 = vrot.slane %v673, %v1993
      %v1995 = vadd.f32 %v1990, %v1994
      %v1996 = vpack.c.bf16 %v1995, %v1995
      %v1997 = vlaneseq
      %v1998 = vshrl.u32 %v1997, 7
      %v1999 = vsub.s32 5, %v1998
      %v2000 = vrot.slane %v674, %v1999
      %v2005 = vunpack.c.l.b16 %v683
      %v2006 = vunpack.c.l.b16 %v684
      %v2007 = vunpack.c.l.b16 %v685
      %v2008 = vunpack.c.l.b16 %v686
      %v2009 = vpack.c.b16 %v2006, %v2005
      %v2010 = vpack.c.b16 %v2008, %v2007
      %v2014 = vsel %vm697, %v1996, 0
      %2016 = vmatprep.subr.bf16.mxu0 0
      %2017 = vmatpush1.bf16.msra.mxu0 %v2009
      %2018 = vmatprep.subr.bf16.mxu0 0
      %2019 = vmatpush1.bf16.msra.mxu0 %v2010
      %2020 = vmatprep.subr.bf16.mxu0 0
      %2021 = vmatpush1.bf16.msra.mxu0 0
      %2022 = vmatprep.subr.bf16.mxu0 0
      %2023 = vmatpush1.bf16.msra.mxu0 0
      %2024 = vmatprep.subr.bf16.mxu0 0
      %2025 = vmatpush1.bf16.msra.mxu0 0
      %2026 = vmatprep.subr.bf16.mxu0 0
      %2027 = vmatpush1.bf16.msra.mxu0 0
      %2028 = vmatprep.subr.bf16.mxu0 0
      %2029 = vmatpush1.bf16.msra.mxu0 0
      %2030 = vmatprep.subr.bf16.mxu0 0
      %2031 = vmatpush1.bf16.msra.mxu0 0
      %2032 = vmatprep.subr.bf16.mxu0 0
      %2033 = vmatpush1.bf16.msra.mxu0 0
      %2034 = vmatprep.subr.bf16.mxu0 0
      %2035 = vmatpush1.bf16.msra.mxu0 0
      %2036 = vmatprep.subr.bf16.mxu0 0
      %2037 = vmatpush1.bf16.msra.mxu0 0
      %2038 = vmatprep.subr.bf16.mxu0 0
      %2039 = vmatpush1.bf16.msra.mxu0 0
      %2040 = vmatprep.subr.bf16.mxu0 0
      %2041 = vmatpush1.bf16.msra.mxu0 0
      %2042 = vmatprep.subr.bf16.mxu0 0
      %2043 = vmatpush1.bf16.msra.mxu0 0
      %2044 = vmatprep.subr.bf16.mxu0 0
      %2045 = vmatpush1.bf16.msra.mxu0 0
      %2046 = vmatprep.subr.bf16.mxu0 0
      %2047 = vmatpush1.bf16.msra.mxu0 0
      %2048 = vmatprep.mubr.bf16.mxu0 0
      %2049 = vmatmul.mubr.bf16.gmra.mrb[0].mxu0 %v2014
      %v2050 = vpop.f32.mrb[0].mxu0
      %v2051 = vadd.f32 %v2000, %v2050
      %v2052 = vpop.f32.mrb[0].mxu0
      %v2053 = vpop.f32.mrb[0].mxu0
      %v2054 = vpop.f32.mrb[0].mxu0
      %2055 = vdwg.mxu0
      %v2056 = vmax.f32 %v2051, 0.0
      %v2057 = vpack.c.bf16 %v2056, %v2056
      %v2058 = vlaneseq
      %v2059 = vshrl.u32 %v2058, 7
      %v2060 = vsub.s32 6, %v2059
      %v2061 = vrot.slane %v674, %v2060
      %v2070 = vunpack.c.l.b16 %v687
      %v2071 = vunpack.c.l.b16 %v688
      %v2072 = vunpack.c.l.b16 %v689
      %v2073 = vunpack.c.l.b16 %v690
      %v2074 = vunpack.c.l.b16 %v691
      %v2075 = vunpack.c.l.b16 %v692
      %v2076 = vunpack.c.l.b16 %v693
      %v2077 = vunpack.c.l.b16 %v694
      %v2078 = vpack.c.b16 %v2071, %v2070
      %v2079 = vpack.c.b16 %v2073, %v2072
      %v2080 = vpack.c.b16 %v2075, %v2074
      %v2081 = vpack.c.b16 %v2077, %v2076
      %vm2086 = vcmask 523264
      %v2088 = vsel %vm2086, %v2057, 0
      %2090 = vmatprep.subr.bf16.mxu0 0
      %2091 = vmatpush1.bf16.msra.mxu0 %v2078
      %2092 = vmatprep.subr.bf16.mxu0 0
      %2093 = vmatpush1.bf16.msra.mxu0 %v2079
      %2094 = vmatprep.subr.bf16.mxu0 0
      %2095 = vmatpush1.bf16.msra.mxu0 %v2080
      %2096 = vmatprep.subr.bf16.mxu0 0
      %2097 = vmatpush1.bf16.msra.mxu0 %v2081
      %2098 = vmatprep.subr.bf16.mxu0 0
      %2099 = vmatpush1.bf16.msra.mxu0 0
      %2100 = vmatprep.subr.bf16.mxu0 0
      %2101 = vmatpush1.bf16.msra.mxu0 0
      %2102 = vmatprep.subr.bf16.mxu0 0
      %2103 = vmatpush1.bf16.msra.mxu0 0
      %2104 = vmatprep.subr.bf16.mxu0 0
      %2105 = vmatpush1.bf16.msra.mxu0 0
      %2106 = vmatprep.subr.bf16.mxu0 0
      %2107 = vmatpush1.bf16.msra.mxu0 0
      %2108 = vmatprep.subr.bf16.mxu0 0
      %2109 = vmatpush1.bf16.msra.mxu0 0
      %2110 = vmatprep.subr.bf16.mxu0 0
      %2111 = vmatpush1.bf16.msra.mxu0 0
      %2112 = vmatprep.subr.bf16.mxu0 0
      %2113 = vmatpush1.bf16.msra.mxu0 0
      %2114 = vmatprep.subr.bf16.mxu0 0
      %2115 = vmatpush1.bf16.msra.mxu0 0
      %2116 = vmatprep.subr.bf16.mxu0 0
      %2117 = vmatpush1.bf16.msra.mxu0 0
      %2118 = vmatprep.subr.bf16.mxu0 0
      %2119 = vmatpush1.bf16.msra.mxu0 0
      %2120 = vmatprep.subr.bf16.mxu0 0
      %2121 = vmatpush1.bf16.msra.mxu0 0
      %2122 = vmatprep.mubr.bf16.mxu0 0
      %2123 = vmatmul.mubr.bf16.gmra.mrb[0].mxu0 %v2088
      %v2124 = vpop.f32.mrb[0].mxu0
      %v2125 = vadd.f32 %v2061, %v2124
      %v2126 = vpop.f32.mrb[0].mxu0
      %v2127 = vpop.f32.mrb[0].mxu0
      %v2128 = vpop.f32.mrb[0].mxu0
      %2129 = vdwg.mxu0
      %v2130 = vadd.f32 %v2125, %v1972
      %2131 = vst.msk [vmem:[#allocation2] sm:$0xff] %vm697, %v2130
      %p2132 = scmp.eq.s32.totalorder %s41, 1
      // Predicated region
      $region77: #{_lambda_.1} parent=71 // pred_check
        %p2133 = pneg %p2132
      $region78: #{_lambda_.1} parent=71 // pred_check_branch
        %2135 = sbr.rel (%p2133) target = $region80
      $region79: #{_lambda_.1} parent=71 // pred_region
        %v2136 = vld [vmem:[%s12] sm:$0x1]
        %v2137 = vld [vmem:[%s12 + $0x1] sm:$0x1]
        %v2138 = vsel %vm697, %v2130, 0.0
        %2139 = vadd.xlane.f32.xlu0 %v2138
        %v2140 = vpop.xlane.xlu0 %2139
        %v2141 = vmul.f32 %v2140, %v701
        %v2142 = vsub.f32 %v2130, %v2141
        %v2143 = vmul.f32 %v2142, %v2142
        %v2144 = vsel %vm697, %v2143, 0.0
        %2145 = vadd.xlane.f32.xlu0 %v2144
        %v2146 = vpop.xlane.xlu0 %2145
        %v2147 = vmul.f32 %v2146, %v701
        %v2148 = vadd.f32 %v2147, 1e-06
        %v2149 = vrsqrt.pop %v2148
        %v2150 = vmul.f32 %v2142, %v2149
        %v2151 = vlaneseq
        %v2152 = vshrl.u32 %v2151, 7
        %v2153 = vsub.s32 0, %v2152
        %v2154 = vrot.slane %v2136, %v2153
        %v2155 = vmul.f32 %v2150, %v2154
        %v2156 = vlaneseq
        %v2157 = vshrl.u32 %v2156, 7
        %v2158 = vsub.s32 0, %v2157
        %v2159 = vrot.slane %v2137, %v2158
        %v2160 = vadd.f32 %v2155, %v2159
        %v2161 = vpack.c.bf16 %v2160, %v2160
        %v2162 = vld [vmem:[%s13] sm:$0xf]
        %v2163 = vld [vmem:[%s13 + $0x4] sm:$0xf]
        %v2164 = vld [vmem:[%s13 + $0x8] sm:$0xf]
        %v2165 = vld [vmem:[%s13 + $0xc] sm:$0xf]
        %v2166 = vld [vmem:[%s14] sm:$0x1]
        %v2168 = vlaneseq
        %v2169 = vshrl.u32 %v2168, 7
        %v2170 = vsub.s32 0, %v2169
        %v2171 = vrot.slane %v2166, %v2170
        %v2177 = vunpack.c.l.b16 %v2162
        %v2178 = vunpack.c.l.b16 %v2163
        %v2179 = vunpack.c.l.b16 %v2164
        %v2180 = vunpack.c.l.b16 %v2165
        %v2181 = vpack.c.b16 %v2178, %v2177
        %v2182 = vpack.c.b16 %v2180, %v2179
        %v2186 = vsel %vm697, %v2161, 0
        %2188 = vmatprep.subr.bf16.mxu0 0
        %2189 = vmatpush1.bf16.msra.mxu0 %v2181
        %2190 = vmatprep.subr.bf16.mxu0 0
        %2191 = vmatpush1.bf16.msra.mxu0 %v2182
        %2192 = vmatprep.subr.bf16.mxu0 0
        %2193 = vmatpush1.bf16.msra.mxu0 0
        %2194 = vmatprep.subr.bf16.mxu0 0
        %2195 = vmatpush1.bf16.msra.mxu0 0
        %2196 = vmatprep.subr.bf16.mxu0 0
        %2197 = vmatpush1.bf16.msra.mxu0 0
        %2198 = vmatprep.subr.bf16.mxu0 0
        %2199 = vmatpush1.bf16.msra.mxu0 0
        %2200 = vmatprep.subr.bf16.mxu0 0
        %2201 = vmatpush1.bf16.msra.mxu0 0
        %2202 = vmatprep.subr.bf16.mxu0 0
        %2203 = vmatpush1.bf16.msra.mxu0 0
        %2204 = vmatprep.subr.bf16.mxu0 0
        %2205 = vmatpush1.bf16.msra.mxu0 0
        %2206 = vmatprep.subr.bf16.mxu0 0
        %2207 = vmatpush1.bf16.msra.mxu0 0
        %2208 = vmatprep.subr.bf16.mxu0 0
        %2209 = vmatpush1.bf16.msra.mxu0 0
        %2210 = vmatprep.subr.bf16.mxu0 0
        %2211 = vmatpush1.bf16.msra.mxu0 0
        %2212 = vmatprep.subr.bf16.mxu0 0
        %2213 = vmatpush1.bf16.msra.mxu0 0
        %2214 = vmatprep.subr.bf16.mxu0 0
        %2215 = vmatpush1.bf16.msra.mxu0 0
        %2216 = vmatprep.subr.bf16.mxu0 0
        %2217 = vmatpush1.bf16.msra.mxu0 0
        %2218 = vmatprep.subr.bf16.mxu0 0
        %2219 = vmatpush1.bf16.msra.mxu0 0
        %2220 = vmatprep.mubr.bf16.mxu0 0
        %2221 = vmatmul.mubr.bf16.gmra.mrb[0].mxu0 %v2186
        %v2222 = vpop.f32.mrb[0].mxu0
        %v2223 = vadd.f32 %v2171, %v2222
        %v2224 = vpop.f32.mrb[0].mxu0
        %v2225 = vpop.f32.mrb[0].mxu0
        %v2226 = vpop.f32.mrb[0].mxu0
        %2227 = vdwg.mxu0
        %2228 = vst [vmem:[%s590] sm:$0xff] %v2223
      $region80: #{_lambda_.1} parent=71 // pred_fallthru
        _
      %p2229 = scmp.lt.s32.totalorder %s40, 1
      %s2230 = scalar_select %p2229, %s40, 1
      %s2231 = smul.addr %s2230, 8
      %s2232 = scalar_lea.vmem %s15, %s2231
      // Predicated region
      $region81: #{_lambda_.1} parent=71 // pred_check
        %p2233 = pneg %p379
      $region82: #{_lambda_.1} parent=71 // pred_check_branch
        %2235 = sbr.rel (%p2233) target = $region84
      $region83: #{_lambda_.1} parent=71 // pred_region
        _
      $region84: #{_lambda_.1} parent=71 // pred_fallthru
        _
    $region72: #{_lambda_.1} parent=5 // pred_fallthru
      _
    %p2236 = scmp.le.s32.totalorder 2, %s31
    // Predicated region
    $region85: #{_lambda_.1} parent=5 // pred_check
      %p2237 = pneg %p2236
    $region86: #{_lambda_.1} parent=5 // pred_check_branch
      %2239 = sbr.rel (%p2237) target = $region88
    $region87: #{_lambda_.1} parent=5 // pred_region
      %s2240 = ssub.s32 %s31, 2
      // Predicated region
      $region89: #{_lambda_.1} parent=87 // pred_check
        %p2241 = pneg %p385
      $region90: #{_lambda_.1} parent=87 // pred_check_branch
        %2243 = sbr.rel (%p2241) target = $region92
      $region91: #{_lambda_.1} parent=87 // pred_region
        %p2244 = scmp.lt.s32.totalorder %s42, 1
        %s2245 = scalar_select %p2244, %s42, 1
        %s2246 = smul.addr %s2245, 8
        %s2247 = scalar_lea.vmem %s15, %s2246
      $region92: #{_lambda_.1} parent=87 // pred_fallthru
        _
    $region88: #{_lambda_.1} parent=5 // pred_fallthru
      _
  $region6: #{_lambda_.1} parent=0 // loop_footer
    %s35 = sadd.s32 1, %s31
  $region7: #{_lambda_.1} parent=0 // loop_footer_branch
    %30 = sbr.rel target = $region3
  $region8: #{_lambda_.1} parent=0 // loop_exit
    _

</llo_original>
